<compile_context>
chip_gen: v6e
topology: v6e:2x2x1
jax: 0.10.0
libtpu: 0.0.40
codegen_flags: <defaults>
</compile_context>

<pallas_src>
import jax
import jax.numpy as jnp
from jax.experimental import pallas as pl
from jax.experimental.pallas import tpu as pltpu


def _round_up(x, m):
    return ((x + m - 1) // m) * m


def _sigmoid(x):
    # 0.5*tanh(0.5*x)+0.5 == sigmoid(x); keeps the gate nonlinearity entirely on the EUP.
    return 0.5 * jnp.tanh(0.5 * x) + 0.5


def comments_classifier(input_ids, emb_table, w_ih, w_hh, b_ih, b_hh, w_cls, b_cls):
    """input_ids: (B, T) int32 (batch_first, like the PyTorch module). Returns (B, L) f32."""
    B, T = input_ids.shape
    V, E = emb_table.shape
    H = w_hh.shape[1]
    L = w_cls.shape[0]

    BT = min(_round_up(B, 8), 128)     # batch tile: sublane multiple, fills MXU rows
    Bp = _round_up(B, BT)              # padded batch
    n_tiles = Bp // BT
    Hp = _round_up(H, 128)             # lane-multiple hidden -> lane-dense gate slices
    Lp = _round_up(L, 128)             # lane-dense output store

    # ---- token ids: clip (no in-kernel bounds check), pad batch with id 0, flatten ----
    ids = jnp.clip(input_ids.astype(jnp.int32), 0, V - 1)
    ids = jnp.pad(ids, ((0, Bp - B), (0, 0)))                      # (Bp, T)
    ids_flat = ids.reshape(Bp * T)                                 # index = b * T + t

    # ---- LSTM weights in x @ W layout, each gate block padded to Hp ----
    bias = (b_ih + b_hh).astype(jnp.float32)
    wih_p = jnp.zeros((E, 4 * Hp), jnp.float32)
    whh_p = jnp.zeros((Hp, 4 * Hp), jnp.float32)
    bias_p = jnp.zeros((1, 4 * Hp), jnp.float32)
    for g in range(4):
        wih_p = wih_p.at[:, g * Hp:g * Hp + H].set(w_ih[g * H:(g + 1) * H, :].T)
        whh_p = whh_p.at[:H, g * Hp:g * Hp + H].set(w_hh[g * H:(g + 1) * H, :].T)
        bias_p = bias_p.at[:, g * Hp:g * Hp + H].set(bias[g * H:(g + 1) * H][None, :])

    # ---- projected embedding table: row v = emb[v] @ W_ih + (b_ih + b_hh) ----
    # One (V,E)@(E,4*Hp) matmul in the wrapper; the kernel's embedding + input
    # projection stage becomes a lane-dense row gather of this table.
    proj = (jnp.dot(emb_table.astype(jnp.float32), wih_p,
                    precision=jax.lax.Precision.HIGHEST) + bias_p)   # (V, 4*Hp) f32

    # ---- classifier weights (padded, lane-dense output) ----
    wcls_p = jnp.zeros((Hp, Lp), jnp.float32).at[:H, :L].set(w_cls.astype(jnp.float32).T)
    bcls_p = jnp.zeros((1, Lp), jnp.float32).at[:, :L].set(b_cls.astype(jnp.float32)[None, :])

    def kernel(ids_ref, proj_ref, whh_ref, wcls_ref, bcls_ref, out_ref, gx_ref):
        tile = pl.program_id(0)

        # 1) Embedding + input projection = lane-dense row gather of the projected
        #    table straight into the per-timestep gate buffer (rows are 4*Hp lanes).
        for t in range(T):
            for b in range(BT):
                tok = ids_ref[(tile * BT + b) * T + t]
                row = t * BT + b
                gx_ref[row:row + 1, :] = proj_ref[pl.ds(tok, 1), :]

        # 2) LSTM recurrence, fully unrolled (T small & static).  Only h @ W_hh is on
        #    the serial critical path; W_hh stays f32 (latency-bound -> f32 is free).
        h = jnp.zeros((BT, Hp), jnp.float32)
        c = jnp.zeros((BT, Hp), jnp.float32)
        for t in range(T):
            gates = gx_ref[t * BT:(t + 1) * BT, :] + jnp.dot(
                h, whh_ref[...], preferred_element_type=jnp.float32)   # (BT, 4*Hp)
            i_g = _sigmoid(gates[:, 0 * Hp:1 * Hp])
            f_g = _sigmoid(gates[:, 1 * Hp:2 * Hp])
            g_g = jnp.tanh(gates[:, 2 * Hp:3 * Hp])
            o_g = _sigmoid(gates[:, 3 * Hp:4 * Hp])
            c = f_g * c + i_g * g_g
            h = o_g * jnp.tanh(c)

        # 3) Classifier on the last hidden state; (BT, Lp) store is lane-dense.
        out_ref[...] = jnp.dot(h, wcls_ref[...],
                               preferred_element_type=jnp.float32) + bcls_ref[...]

    grid_spec = pltpu.PrefetchScalarGridSpec(
        num_scalar_prefetch=1,                   # ids -> SMEM, visible to index_maps
        grid=(n_tiles,),                         # batch tiles, parallel across TCs
        in_specs=[
            pl.BlockSpec((V, 4 * Hp), lambda i, ids: (0, 0)),      # projected emb table
            pl.BlockSpec((Hp, 4 * Hp), lambda i, ids: (0, 0)),     # W_hh (f32)
            pl.BlockSpec((Hp, Lp), lambda i, ids: (0, 0)),         # W_cls (f32)
            pl.BlockSpec((1, Lp), lambda i, ids: (0, 0)),          # b_cls
        ],
        out_specs=pl.BlockSpec((BT, Lp), lambda i, ids: (i, 0)),
        scratch_shapes=[
            pltpu.VMEM((T * BT, 4 * Hp), jnp.float32),             # gathered gate inputs
        ],
    )

    out_padded = pl.pallas_call(
        kernel,
        out_shape=jax.ShapeDtypeStruct((Bp, Lp), jnp.float32),
        grid_spec=grid_spec,
        compiler_params=pltpu.CompilerParams(
            dimension_semantics=("parallel",),
            vmem_limit_bytes=32 * 1024 * 1024,
        ),
    )(ids_flat, proj, whh_p, wcls_p, bcls_p)

    return out_padded[:B, :L]


def _reference(input_ids, emb_table, w_ih, w_hh, b_ih, b_hh, w_cls, b_cls):
    """Pure-JAX f32 reference mirroring PyTorch semantics."""
    B, T = input_ids.shape
    H = w_hh.shape[1]
    emb = emb_table[input_ids]                                    # (B, T, E)
    h = jnp.zeros((B, H), jnp.float32)
    c = jnp.zeros((B, H), jnp.float32)
    for t in range(T):
        gates = emb[:, t, :] @ w_ih.T + h @ w_hh.T + b_ih + b_hh
        i_g = jax.nn.sigmoid(gates[:, 0 * H:1 * H])
        f_g = jax.nn.sigmoid(gates[:, 1 * H:2 * H])
        g_g = jnp.tanh(gates[:, 2 * H:3 * H])
        o_g = jax.nn.sigmoid(gates[:, 3 * H:4 * H])
        c = f_g * c + i_g * g_g
        h = o_g * jnp.tanh(c)
    return h @ w_cls.T + b_cls


if __name__ == "__main__":
    # Small shapes consistent with the module's forward.
    B, T = 2, 8                    # batch, sequence length
    VOCAB, EMB, HID, LABELS = 32, 16, 32, 4

    key = jax.random.PRNGKey(0)
    k_ids, k_emb, k_wih, k_whh, k_bih, k_bhh, k_wc, k_bc = jax.random.split(key, 8)

    input_ids = jax.random.randint(k_ids, (B, T), 0, VOCAB, dtype=jnp.int32)

    emb_table = 0.1 * jax.random.normal(k_emb, (VOCAB, EMB), jnp.float32)
    emb_table = emb_table.at[0].set(0.0)                          # padding_idx=0

    w_ih = 0.1 * jax.random.normal(k_wih, (4 * HID, EMB), jnp.float32)
    w_hh = 0.1 * jax.random.normal(k_whh, (4 * HID, HID), jnp.float32)
    b_ih = 0.1 * jax.random.normal(k_bih, (4 * HID,), jnp.float32)
    b_hh = 0.1 * jax.random.normal(k_bhh, (4 * HID,), jnp.float32)
    w_cls = 0.1 * jax.random.normal(k_wc, (LABELS, HID), jnp.float32)
    b_cls = 0.1 * jax.random.normal(k_bc, (LABELS,), jnp.float32)

    out = comments_classifier(input_ids, emb_table, w_ih, w_hh, b_ih, b_hh,
                              w_cls, b_cls)
    out = jax.block_until_ready(out)

    ref = _reference(input_ids, emb_table, w_ih, w_hh, b_ih, b_hh, w_cls, b_cls)
    assert out.shape == (B, LABELS)
    # All-f32 data path again (weights kept f32 per review), so a fairly tight check.
    assert jnp.allclose(out, ref, rtol=1e-2, atol=1e-2), (out, ref)

    print("KERNEL_OK")
</pallas_src>

<mosaic_0001>
module attributes {stable_mosaic.version = 11 : i64} {
  func.func @kernel(%arg0: i32, %arg1: memref<64xi32, #tpu.memory_space<smem>>, %arg2: memref<32x512xf32, #tpu.memory_space<vmem>>, %arg3: memref<128x512xf32, #tpu.memory_space<vmem>>, %arg4: memref<128x128xf32, #tpu.memory_space<vmem>>, %arg5: memref<1x128xf32, #tpu.memory_space<vmem>>, %arg6: memref<8x128xf32, #tpu.memory_space<vmem>>, %arg7: memref<64x512xf32, #tpu.memory_space<vmem>>) attributes {dimension_semantics = [#tpu.dimension_semantics<parallel>], iteration_bounds = array<i64: 1>, scalar_prefetch = 1 : i64, scratch_operands = 1 : i64, tpu.core_type = #tpu.core_type<tc>, window_params = [{pipeline_mode = #tpu.pipeline_mode<synchronous>, transform_indices = @transform_0, window_bounds = array<i64: 32, 512>}, {pipeline_mode = #tpu.pipeline_mode<synchronous>, transform_indices = @transform_1, window_bounds = array<i64: 128, 512>}, {pipeline_mode = #tpu.pipeline_mode<synchronous>, transform_indices = @transform_2, window_bounds = array<i64: 128, 128>}, {pipeline_mode = #tpu.pipeline_mode<synchronous>, transform_indices = @transform_3, window_bounds = array<i64: 1, 128>}, {transform_indices = @transform_4, window_bounds = array<i64: 8, 128>}]} {
    %c8_i32 = arith.constant 8 : i32
    %0 = arith.muli %arg0, %c8_i32 : i32
    %c0_i32 = arith.constant 0 : i32
    %1 = arith.addi %0, %c0_i32 : i32
    %c8_i32_0 = arith.constant 8 : i32
    %2 = arith.muli %1, %c8_i32_0 : i32
    %c0_i32_1 = arith.constant 0 : i32
    %3 = arith.addi %2, %c0_i32_1 : i32
    %4 = arith.index_cast %3 : i32 to index
    %5 = memref.load %arg1[%4] : memref<64xi32, #tpu.memory_space<smem>>
    %6 = arith.index_cast %5 : i32 to index
    %c0 = arith.constant 0 : index
    %7 = vector.load %arg2[%6, %c0] : memref<32x512xf32, #tpu.memory_space<vmem>>, vector<1x512xf32>
    %c0_2 = arith.constant 0 : index
    %c0_3 = arith.constant 0 : index
    %8 = vector.load %arg7[%c0_2, %c0_3] : memref<64x512xf32, #tpu.memory_space<vmem>>, vector<1x512xf32>
    tpu.vector_store %arg7[%c0_2, %c0_3], %7 {strides = array<i32>} : memref<64x512xf32, #tpu.memory_space<vmem>>, vector<1x512xf32>,
    %c8_i32_4 = arith.constant 8 : i32
    %9 = arith.muli %arg0, %c8_i32_4 : i32
    %c1_i32 = arith.constant 1 : i32
    %10 = arith.addi %9, %c1_i32 : i32
    %c8_i32_5 = arith.constant 8 : i32
    %11 = arith.muli %10, %c8_i32_5 : i32
    %c0_i32_6 = arith.constant 0 : i32
    %12 = arith.addi %11, %c0_i32_6 : i32
    %13 = arith.index_cast %12 : i32 to index
    %14 = memref.load %arg1[%13] : memref<64xi32, #tpu.memory_space<smem>>
    %15 = arith.index_cast %14 : i32 to index
    %c0_7 = arith.constant 0 : index
    %16 = vector.load %arg2[%15, %c0_7] : memref<32x512xf32, #tpu.memory_space<vmem>>, vector<1x512xf32>
    %c1 = arith.constant 1 : index
    %c0_8 = arith.constant 0 : index
    %17 = vector.load %arg7[%c1, %c0_8] : memref<64x512xf32, #tpu.memory_space<vmem>>, vector<1x512xf32>
    tpu.vector_store %arg7[%c1, %c0_8], %16 {strides = array<i32>} : memref<64x512xf32, #tpu.memory_space<vmem>>, vector<1x512xf32>,
    %c8_i32_9 = arith.constant 8 : i32
    %18 = arith.muli %arg0, %c8_i32_9 : i32
    %c2_i32 = arith.constant 2 : i32
    %19 = arith.addi %18, %c2_i32 : i32
    %c8_i32_10 = arith.constant 8 : i32
    %20 = arith.muli %19, %c8_i32_10 : i32
    %c0_i32_11 = arith.constant 0 : i32
    %21 = arith.addi %20, %c0_i32_11 : i32
    %22 = arith.index_cast %21 : i32 to index
    %23 = memref.load %arg1[%22] : memref<64xi32, #tpu.memory_space<smem>>
    %24 = arith.index_cast %23 : i32 to index
    %c0_12 = arith.constant 0 : index
    %25 = vector.load %arg2[%24, %c0_12] : memref<32x512xf32, #tpu.memory_space<vmem>>, vector<1x512xf32>
    %c2 = arith.constant 2 : index
    %c0_13 = arith.constant 0 : index
    %26 = vector.load %arg7[%c2, %c0_13] : memref<64x512xf32, #tpu.memory_space<vmem>>, vector<1x512xf32>
    tpu.vector_store %arg7[%c2, %c0_13], %25 {strides = array<i32>} : memref<64x512xf32, #tpu.memory_space<vmem>>, vector<1x512xf32>,
    %c8_i32_14 = arith.constant 8 : i32
    %27 = arith.muli %arg0, %c8_i32_14 : i32
    %c3_i32 = arith.constant 3 : i32
    %28 = arith.addi %27, %c3_i32 : i32
    %c8_i32_15 = arith.constant 8 : i32
    %29 = arith.muli %28, %c8_i32_15 : i32
    %c0_i32_16 = arith.constant 0 : i32
    %30 = arith.addi %29, %c0_i32_16 : i32
    %31 = arith.index_cast %30 : i32 to index
    %32 = memref.load %arg1[%31] : memref<64xi32, #tpu.memory_space<smem>>
    %33 = arith.index_cast %32 : i32 to index
    %c0_17 = arith.constant 0 : index
    %34 = vector.load %arg2[%33, %c0_17] : memref<32x512xf32, #tpu.memory_space<vmem>>, vector<1x512xf32>
    %c3 = arith.constant 3 : index
    %c0_18 = arith.constant 0 : index
    %35 = vector.load %arg7[%c3, %c0_18] : memref<64x512xf32, #tpu.memory_space<vmem>>, vector<1x512xf32>
    tpu.vector_store %arg7[%c3, %c0_18], %34 {strides = array<i32>} : memref<64x512xf32, #tpu.memory_space<vmem>>, vector<1x512xf32>,
    %c8_i32_19 = arith.constant 8 : i32
    %36 = arith.muli %arg0, %c8_i32_19 : i32
    %c4_i32 = arith.constant 4 : i32
    %37 = arith.addi %36, %c4_i32 : i32
    %c8_i32_20 = arith.constant 8 : i32
    %38 = arith.muli %37, %c8_i32_20 : i32
    %c0_i32_21 = arith.constant 0 : i32
    %39 = arith.addi %38, %c0_i32_21 : i32
    %40 = arith.index_cast %39 : i32 to index
    %41 = memref.load %arg1[%40] : memref<64xi32, #tpu.memory_space<smem>>
    %42 = arith.index_cast %41 : i32 to index
    %c0_22 = arith.constant 0 : index
    %43 = vector.load %arg2[%42, %c0_22] : memref<32x512xf32, #tpu.memory_space<vmem>>, vector<1x512xf32>
    %c4 = arith.constant 4 : index
    %c0_23 = arith.constant 0 : index
    %44 = vector.load %arg7[%c4, %c0_23] : memref<64x512xf32, #tpu.memory_space<vmem>>, vector<1x512xf32>
    tpu.vector_store %arg7[%c4, %c0_23], %43 {strides = array<i32>} : memref<64x512xf32, #tpu.memory_space<vmem>>, vector<1x512xf32>,
    %c8_i32_24 = arith.constant 8 : i32
    %45 = arith.muli %arg0, %c8_i32_24 : i32
    %c5_i32 = arith.constant 5 : i32
    %46 = arith.addi %45, %c5_i32 : i32
    %c8_i32_25 = arith.constant 8 : i32
    %47 = arith.muli %46, %c8_i32_25 : i32
    %c0_i32_26 = arith.constant 0 : i32
    %48 = arith.addi %47, %c0_i32_26 : i32
    %49 = arith.index_cast %48 : i32 to index
    %50 = memref.load %arg1[%49] : memref<64xi32, #tpu.memory_space<smem>>
    %51 = arith.index_cast %50 : i32 to index
    %c0_27 = arith.constant 0 : index
    %52 = vector.load %arg2[%51, %c0_27] : memref<32x512xf32, #tpu.memory_space<vmem>>, vector<1x512xf32>
    %c5 = arith.constant 5 : index
    %c0_28 = arith.constant 0 : index
    %53 = vector.load %arg7[%c5, %c0_28] : memref<64x512xf32, #tpu.memory_space<vmem>>, vector<1x512xf32>
    tpu.vector_store %arg7[%c5, %c0_28], %52 {strides = array<i32>} : memref<64x512xf32, #tpu.memory_space<vmem>>, vector<1x512xf32>,
    %c8_i32_29 = arith.constant 8 : i32
    %54 = arith.muli %arg0, %c8_i32_29 : i32
    %c6_i32 = arith.constant 6 : i32
    %55 = arith.addi %54, %c6_i32 : i32
    %c8_i32_30 = arith.constant 8 : i32
    %56 = arith.muli %55, %c8_i32_30 : i32
    %c0_i32_31 = arith.constant 0 : i32
    %57 = arith.addi %56, %c0_i32_31 : i32
    %58 = arith.index_cast %57 : i32 to index
    %59 = memref.load %arg1[%58] : memref<64xi32, #tpu.memory_space<smem>>
    %60 = arith.index_cast %59 : i32 to index
    %c0_32 = arith.constant 0 : index
    %61 = vector.load %arg2[%60, %c0_32] : memref<32x512xf32, #tpu.memory_space<vmem>>, vector<1x512xf32>
    %c6 = arith.constant 6 : index
    %c0_33 = arith.constant 0 : index
    %62 = vector.load %arg7[%c6, %c0_33] : memref<64x512xf32, #tpu.memory_space<vmem>>, vector<1x512xf32>
    tpu.vector_store %arg7[%c6, %c0_33], %61 {strides = array<i32>} : memref<64x512xf32, #tpu.memory_space<vmem>>, vector<1x512xf32>,
    %c8_i32_34 = arith.constant 8 : i32
    %63 = arith.muli %arg0, %c8_i32_34 : i32
    %c7_i32 = arith.constant 7 : i32
    %64 = arith.addi %63, %c7_i32 : i32
    %c8_i32_35 = arith.constant 8 : i32
    %65 = arith.muli %64, %c8_i32_35 : i32
    %c0_i32_36 = arith.constant 0 : i32
    %66 = arith.addi %65, %c0_i32_36 : i32
    %67 = arith.index_cast %66 : i32 to index
    %68 = memref.load %arg1[%67] : memref<64xi32, #tpu.memory_space<smem>>
    %69 = arith.index_cast %68 : i32 to index
    %c0_37 = arith.constant 0 : index
    %70 = vector.load %arg2[%69, %c0_37] : memref<32x512xf32, #tpu.memory_space<vmem>>, vector<1x512xf32>
    %c7 = arith.constant 7 : index
    %c0_38 = arith.constant 0 : index
    %71 = vector.load %arg7[%c7, %c0_38] : memref<64x512xf32, #tpu.memory_space<vmem>>, vector<1x512xf32>
    tpu.vector_store %arg7[%c7, %c0_38], %70 {strides = array<i32>} : memref<64x512xf32, #tpu.memory_space<vmem>>, vector<1x512xf32>,
    %c8_i32_39 = arith.constant 8 : i32
    %72 = arith.muli %arg0, %c8_i32_39 : i32
    %c0_i32_40 = arith.constant 0 : i32
    %73 = arith.addi %72, %c0_i32_40 : i32
    %c8_i32_41 = arith.constant 8 : i32
    %74 = arith.muli %73, %c8_i32_41 : i32
    %c1_i32_42 = arith.constant 1 : i32
    %75 = arith.addi %74, %c1_i32_42 : i32
    %76 = arith.index_cast %75 : i32 to index
    %77 = memref.load %arg1[%76] : memref<64xi32, #tpu.memory_space<smem>>
    %78 = arith.index_cast %77 : i32 to index
    %c0_43 = arith.constant 0 : index
    %79 = vector.load %arg2[%78, %c0_43] : memref<32x512xf32, #tpu.memory_space<vmem>>, vector<1x512xf32>
    %c8 = arith.constant 8 : index
    %c0_44 = arith.constant 0 : index
    %80 = vector.load %arg7[%c8, %c0_44] : memref<64x512xf32, #tpu.memory_space<vmem>>, vector<1x512xf32>
    tpu.vector_store %arg7[%c8, %c0_44], %79 {strides = array<i32>} : memref<64x512xf32, #tpu.memory_space<vmem>>, vector<1x512xf32>,
    %c8_i32_45 = arith.constant 8 : i32
    %81 = arith.muli %arg0, %c8_i32_45 : i32
    %c1_i32_46 = arith.constant 1 : i32
    %82 = arith.addi %81, %c1_i32_46 : i32
    %c8_i32_47 = arith.constant 8 : i32
    %83 = arith.muli %82, %c8_i32_47 : i32
    %c1_i32_48 = arith.constant 1 : i32
    %84 = arith.addi %83, %c1_i32_48 : i32
    %85 = arith.index_cast %84 : i32 to index
    %86 = memref.load %arg1[%85] : memref<64xi32, #tpu.memory_space<smem>>
    %87 = arith.index_cast %86 : i32 to index
    %c0_49 = arith.constant 0 : index
    %88 = vector.load %arg2[%87, %c0_49] : memref<32x512xf32, #tpu.memory_space<vmem>>, vector<1x512xf32>
    %c9 = arith.constant 9 : index
    %c0_50 = arith.constant 0 : index
    %89 = vector.load %arg7[%c9, %c0_50] : memref<64x512xf32, #tpu.memory_space<vmem>>, vector<1x512xf32>
    tpu.vector_store %arg7[%c9, %c0_50], %88 {strides = array<i32>} : memref<64x512xf32, #tpu.memory_space<vmem>>, vector<1x512xf32>,
    %c8_i32_51 = arith.constant 8 : i32
    %90 = arith.muli %arg0, %c8_i32_51 : i32
    %c2_i32_52 = arith.constant 2 : i32
    %91 = arith.addi %90, %c2_i32_52 : i32
    %c8_i32_53 = arith.constant 8 : i32
    %92 = arith.muli %91, %c8_i32_53 : i32
    %c1_i32_54 = arith.constant 1 : i32
    %93 = arith.addi %92, %c1_i32_54 : i32
    %94 = arith.index_cast %93 : i32 to index
    %95 = memref.load %arg1[%94] : memref<64xi32, #tpu.memory_space<smem>>
    %96 = arith.index_cast %95 : i32 to index
    %c0_55 = arith.constant 0 : index
    %97 = vector.load %arg2[%96, %c0_55] : memref<32x512xf32, #tpu.memory_space<vmem>>, vector<1x512xf32>
    %c10 = arith.constant 10 : index
    %c0_56 = arith.constant 0 : index
    %98 = vector.load %arg7[%c10, %c0_56] : memref<64x512xf32, #tpu.memory_space<vmem>>, vector<1x512xf32>
    tpu.vector_store %arg7[%c10, %c0_56], %97 {strides = array<i32>} : memref<64x512xf32, #tpu.memory_space<vmem>>, vector<1x512xf32>,
    %c8_i32_57 = arith.constant 8 : i32
    %99 = arith.muli %arg0, %c8_i32_57 : i32
    %c3_i32_58 = arith.constant 3 : i32
    %100 = arith.addi %99, %c3_i32_58 : i32
    %c8_i32_59 = arith.constant 8 : i32
    %101 = arith.muli %100, %c8_i32_59 : i32
    %c1_i32_60 = arith.constant 1 : i32
    %102 = arith.addi %101, %c1_i32_60 : i32
    %103 = arith.index_cast %102 : i32 to index
    %104 = memref.load %arg1[%103] : memref<64xi32, #tpu.memory_space<smem>>
    %105 = arith.index_cast %104 : i32 to index
    %c0_61 = arith.constant 0 : index
    %106 = vector.load %arg2[%105, %c0_61] : memref<32x512xf32, #tpu.memory_space<vmem>>, vector<1x512xf32>
    %c11 = arith.constant 11 : index
    %c0_62 = arith.constant 0 : index
    %107 = vector.load %arg7[%c11, %c0_62] : memref<64x512xf32, #tpu.memory_space<vmem>>, vector<1x512xf32>
    tpu.vector_store %arg7[%c11, %c0_62], %106 {strides = array<i32>} : memref<64x512xf32, #tpu.memory_space<vmem>>, vector<1x512xf32>,
    %c8_i32_63 = arith.constant 8 : i32
    %108 = arith.muli %arg0, %c8_i32_63 : i32
    %c4_i32_64 = arith.constant 4 : i32
    %109 = arith.addi %108, %c4_i32_64 : i32
    %c8_i32_65 = arith.constant 8 : i32
    %110 = arith.muli %109, %c8_i32_65 : i32
    %c1_i32_66 = arith.constant 1 : i32
    %111 = arith.addi %110, %c1_i32_66 : i32
    %112 = arith.index_cast %111 : i32 to index
    %113 = memref.load %arg1[%112] : memref<64xi32, #tpu.memory_space<smem>>
    %114 = arith.index_cast %113 : i32 to index
    %c0_67 = arith.constant 0 : index
    %115 = vector.load %arg2[%114, %c0_67] : memref<32x512xf32, #tpu.memory_space<vmem>>, vector<1x512xf32>
    %c12 = arith.constant 12 : index
    %c0_68 = arith.constant 0 : index
    %116 = vector.load %arg7[%c12, %c0_68] : memref<64x512xf32, #tpu.memory_space<vmem>>, vector<1x512xf32>
    tpu.vector_store %arg7[%c12, %c0_68], %115 {strides = array<i32>} : memref<64x512xf32, #tpu.memory_space<vmem>>, vector<1x512xf32>,
    %c8_i32_69 = arith.constant 8 : i32
    %117 = arith.muli %arg0, %c8_i32_69 : i32
    %c5_i32_70 = arith.constant 5 : i32
    %118 = arith.addi %117, %c5_i32_70 : i32
    %c8_i32_71 = arith.constant 8 : i32
    %119 = arith.muli %118, %c8_i32_71 : i32
    %c1_i32_72 = arith.constant 1 : i32
    %120 = arith.addi %119, %c1_i32_72 : i32
    %121 = arith.index_cast %120 : i32 to index
    %122 = memref.load %arg1[%121] : memref<64xi32, #tpu.memory_space<smem>>
    %123 = arith.index_cast %122 : i32 to index
    %c0_73 = arith.constant 0 : index
    %124 = vector.load %arg2[%123, %c0_73] : memref<32x512xf32, #tpu.memory_space<vmem>>, vector<1x512xf32>
    %c13 = arith.constant 13 : index
    %c0_74 = arith.constant 0 : index
    %125 = vector.load %arg7[%c13, %c0_74] : memref<64x512xf32, #tpu.memory_space<vmem>>, vector<1x512xf32>
    tpu.vector_store %arg7[%c13, %c0_74], %124 {strides = array<i32>} : memref<64x512xf32, #tpu.memory_space<vmem>>, vector<1x512xf32>,
    %c8_i32_75 = arith.constant 8 : i32
    %126 = arith.muli %arg0, %c8_i32_75 : i32
    %c6_i32_76 = arith.constant 6 : i32
    %127 = arith.addi %126, %c6_i32_76 : i32
    %c8_i32_77 = arith.constant 8 : i32
    %128 = arith.muli %127, %c8_i32_77 : i32
    %c1_i32_78 = arith.constant 1 : i32
    %129 = arith.addi %128, %c1_i32_78 : i32
    %130 = arith.index_cast %129 : i32 to index
    %131 = memref.load %arg1[%130] : memref<64xi32, #tpu.memory_space<smem>>
    %132 = arith.index_cast %131 : i32 to index
    %c0_79 = arith.constant 0 : index
    %133 = vector.load %arg2[%132, %c0_79] : memref<32x512xf32, #tpu.memory_space<vmem>>, vector<1x512xf32>
    %c14 = arith.constant 14 : index
    %c0_80 = arith.constant 0 : index
    %134 = vector.load %arg7[%c14, %c0_80] : memref<64x512xf32, #tpu.memory_space<vmem>>, vector<1x512xf32>
    tpu.vector_store %arg7[%c14, %c0_80], %133 {strides = array<i32>} : memref<64x512xf32, #tpu.memory_space<vmem>>, vector<1x512xf32>,
    %c8_i32_81 = arith.constant 8 : i32
    %135 = arith.muli %arg0, %c8_i32_81 : i32
    %c7_i32_82 = arith.constant 7 : i32
    %136 = arith.addi %135, %c7_i32_82 : i32
    %c8_i32_83 = arith.constant 8 : i32
    %137 = arith.muli %136, %c8_i32_83 : i32
    %c1_i32_84 = arith.constant 1 : i32
    %138 = arith.addi %137, %c1_i32_84 : i32
    %139 = arith.index_cast %138 : i32 to index
    %140 = memref.load %arg1[%139] : memref<64xi32, #tpu.memory_space<smem>>
    %141 = arith.index_cast %140 : i32 to index
    %c0_85 = arith.constant 0 : index
    %142 = vector.load %arg2[%141, %c0_85] : memref<32x512xf32, #tpu.memory_space<vmem>>, vector<1x512xf32>
    %c15 = arith.constant 15 : index
    %c0_86 = arith.constant 0 : index
    %143 = vector.load %arg7[%c15, %c0_86] : memref<64x512xf32, #tpu.memory_space<vmem>>, vector<1x512xf32>
    tpu.vector_store %arg7[%c15, %c0_86], %142 {strides = array<i32>} : memref<64x512xf32, #tpu.memory_space<vmem>>, vector<1x512xf32>,
    %c8_i32_87 = arith.constant 8 : i32
    %144 = arith.muli %arg0, %c8_i32_87 : i32
    %c0_i32_88 = arith.constant 0 : i32
    %145 = arith.addi %144, %c0_i32_88 : i32
    %c8_i32_89 = arith.constant 8 : i32
    %146 = arith.muli %145, %c8_i32_89 : i32
    %c2_i32_90 = arith.constant 2 : i32
    %147 = arith.addi %146, %c2_i32_90 : i32
    %148 = arith.index_cast %147 : i32 to index
    %149 = memref.load %arg1[%148] : memref<64xi32, #tpu.memory_space<smem>>
    %150 = arith.index_cast %149 : i32 to index
    %c0_91 = arith.constant 0 : index
    %151 = vector.load %arg2[%150, %c0_91] : memref<32x512xf32, #tpu.memory_space<vmem>>, vector<1x512xf32>
    %c16 = arith.constant 16 : index
    %c0_92 = arith.constant 0 : index
    %152 = vector.load %arg7[%c16, %c0_92] : memref<64x512xf32, #tpu.memory_space<vmem>>, vector<1x512xf32>
    tpu.vector_store %arg7[%c16, %c0_92], %151 {strides = array<i32>} : memref<64x512xf32, #tpu.memory_space<vmem>>, vector<1x512xf32>,
    %c8_i32_93 = arith.constant 8 : i32
    %153 = arith.muli %arg0, %c8_i32_93 : i32
    %c1_i32_94 = arith.constant 1 : i32
    %154 = arith.addi %153, %c1_i32_94 : i32
    %c8_i32_95 = arith.constant 8 : i32
    %155 = arith.muli %154, %c8_i32_95 : i32
    %c2_i32_96 = arith.constant 2 : i32
    %156 = arith.addi %155, %c2_i32_96 : i32
    %157 = arith.index_cast %156 : i32 to index
    %158 = memref.load %arg1[%157] : memref<64xi32, #tpu.memory_space<smem>>
    %159 = arith.index_cast %158 : i32 to index
    %c0_97 = arith.constant 0 : index
    %160 = vector.load %arg2[%159, %c0_97] : memref<32x512xf32, #tpu.memory_space<vmem>>, vector<1x512xf32>
    %c17 = arith.constant 17 : index
    %c0_98 = arith.constant 0 : index
    %161 = vector.load %arg7[%c17, %c0_98] : memref<64x512xf32, #tpu.memory_space<vmem>>, vector<1x512xf32>
    tpu.vector_store %arg7[%c17, %c0_98], %160 {strides = array<i32>} : memref<64x512xf32, #tpu.memory_space<vmem>>, vector<1x512xf32>,
    %c8_i32_99 = arith.constant 8 : i32
    %162 = arith.muli %arg0, %c8_i32_99 : i32
    %c2_i32_100 = arith.constant 2 : i32
    %163 = arith.addi %162, %c2_i32_100 : i32
    %c8_i32_101 = arith.constant 8 : i32
    %164 = arith.muli %163, %c8_i32_101 : i32
    %c2_i32_102 = arith.constant 2 : i32
    %165 = arith.addi %164, %c2_i32_102 : i32
    %166 = arith.index_cast %165 : i32 to index
    %167 = memref.load %arg1[%166] : memref<64xi32, #tpu.memory_space<smem>>
    %168 = arith.index_cast %167 : i32 to index
    %c0_103 = arith.constant 0 : index
    %169 = vector.load %arg2[%168, %c0_103] : memref<32x512xf32, #tpu.memory_space<vmem>>, vector<1x512xf32>
    %c18 = arith.constant 18 : index
    %c0_104 = arith.constant 0 : index
    %170 = vector.load %arg7[%c18, %c0_104] : memref<64x512xf32, #tpu.memory_space<vmem>>, vector<1x512xf32>
    tpu.vector_store %arg7[%c18, %c0_104], %169 {strides = array<i32>} : memref<64x512xf32, #tpu.memory_space<vmem>>, vector<1x512xf32>,
    %c8_i32_105 = arith.constant 8 : i32
    %171 = arith.muli %arg0, %c8_i32_105 : i32
    %c3_i32_106 = arith.constant 3 : i32
    %172 = arith.addi %171, %c3_i32_106 : i32
    %c8_i32_107 = arith.constant 8 : i32
    %173 = arith.muli %172, %c8_i32_107 : i32
    %c2_i32_108 = arith.constant 2 : i32
    %174 = arith.addi %173, %c2_i32_108 : i32
    %175 = arith.index_cast %174 : i32 to index
    %176 = memref.load %arg1[%175] : memref<64xi32, #tpu.memory_space<smem>>
    %177 = arith.index_cast %176 : i32 to index
    %c0_109 = arith.constant 0 : index
    %178 = vector.load %arg2[%177, %c0_109] : memref<32x512xf32, #tpu.memory_space<vmem>>, vector<1x512xf32>
    %c19 = arith.constant 19 : index
    %c0_110 = arith.constant 0 : index
    %179 = vector.load %arg7[%c19, %c0_110] : memref<64x512xf32, #tpu.memory_space<vmem>>, vector<1x512xf32>
    tpu.vector_store %arg7[%c19, %c0_110], %178 {strides = array<i32>} : memref<64x512xf32, #tpu.memory_space<vmem>>, vector<1x512xf32>,
    %c8_i32_111 = arith.constant 8 : i32
    %180 = arith.muli %arg0, %c8_i32_111 : i32
    %c4_i32_112 = arith.constant 4 : i32
    %181 = arith.addi %180, %c4_i32_112 : i32
    %c8_i32_113 = arith.constant 8 : i32
    %182 = arith.muli %181, %c8_i32_113 : i32
    %c2_i32_114 = arith.constant 2 : i32
    %183 = arith.addi %182, %c2_i32_114 : i32
    %184 = arith.index_cast %183 : i32 to index
    %185 = memref.load %arg1[%184] : memref<64xi32, #tpu.memory_space<smem>>
    %186 = arith.index_cast %185 : i32 to index
    %c0_115 = arith.constant 0 : index
    %187 = vector.load %arg2[%186, %c0_115] : memref<32x512xf32, #tpu.memory_space<vmem>>, vector<1x512xf32>
    %c20 = arith.constant 20 : index
    %c0_116 = arith.constant 0 : index
    %188 = vector.load %arg7[%c20, %c0_116] : memref<64x512xf32, #tpu.memory_space<vmem>>, vector<1x512xf32>
    tpu.vector_store %arg7[%c20, %c0_116], %187 {strides = array<i32>} : memref<64x512xf32, #tpu.memory_space<vmem>>, vector<1x512xf32>,
    %c8_i32_117 = arith.constant 8 : i32
    %189 = arith.muli %arg0, %c8_i32_117 : i32
    %c5_i32_118 = arith.constant 5 : i32
    %190 = arith.addi %189, %c5_i32_118 : i32
    %c8_i32_119 = arith.constant 8 : i32
    %191 = arith.muli %190, %c8_i32_119 : i32
    %c2_i32_120 = arith.constant 2 : i32
    %192 = arith.addi %191, %c2_i32_120 : i32
    %193 = arith.index_cast %192 : i32 to index
    %194 = memref.load %arg1[%193] : memref<64xi32, #tpu.memory_space<smem>>
    %195 = arith.index_cast %194 : i32 to index
    %c0_121 = arith.constant 0 : index
    %196 = vector.load %arg2[%195, %c0_121] : memref<32x512xf32, #tpu.memory_space<vmem>>, vector<1x512xf32>
    %c21 = arith.constant 21 : index
    %c0_122 = arith.constant 0 : index
    %197 = vector.load %arg7[%c21, %c0_122] : memref<64x512xf32, #tpu.memory_space<vmem>>, vector<1x512xf32>
    tpu.vector_store %arg7[%c21, %c0_122], %196 {strides = array<i32>} : memref<64x512xf32, #tpu.memory_space<vmem>>, vector<1x512xf32>,
    %c8_i32_123 = arith.constant 8 : i32
    %198 = arith.muli %arg0, %c8_i32_123 : i32
    %c6_i32_124 = arith.constant 6 : i32
    %199 = arith.addi %198, %c6_i32_124 : i32
    %c8_i32_125 = arith.constant 8 : i32
    %200 = arith.muli %199, %c8_i32_125 : i32
    %c2_i32_126 = arith.constant 2 : i32
    %201 = arith.addi %200, %c2_i32_126 : i32
    %202 = arith.index_cast %201 : i32 to index
    %203 = memref.load %arg1[%202] : memref<64xi32, #tpu.memory_space<smem>>
    %204 = arith.index_cast %203 : i32 to index
    %c0_127 = arith.constant 0 : index
    %205 = vector.load %arg2[%204, %c0_127] : memref<32x512xf32, #tpu.memory_space<vmem>>, vector<1x512xf32>
    %c22 = arith.constant 22 : index
    %c0_128 = arith.constant 0 : index
    %206 = vector.load %arg7[%c22, %c0_128] : memref<64x512xf32, #tpu.memory_space<vmem>>, vector<1x512xf32>
    tpu.vector_store %arg7[%c22, %c0_128], %205 {strides = array<i32>} : memref<64x512xf32, #tpu.memory_space<vmem>>, vector<1x512xf32>,
    %c8_i32_129 = arith.constant 8 : i32
    %207 = arith.muli %arg0, %c8_i32_129 : i32
    %c7_i32_130 = arith.constant 7 : i32
    %208 = arith.addi %207, %c7_i32_130 : i32
    %c8_i32_131 = arith.constant 8 : i32
    %209 = arith.muli %208, %c8_i32_131 : i32
    %c2_i32_132 = arith.constant 2 : i32
    %210 = arith.addi %209, %c2_i32_132 : i32
    %211 = arith.index_cast %210 : i32 to index
    %212 = memref.load %arg1[%211] : memref<64xi32, #tpu.memory_space<smem>>
    %213 = arith.index_cast %212 : i32 to index
    %c0_133 = arith.constant 0 : index
    %214 = vector.load %arg2[%213, %c0_133] : memref<32x512xf32, #tpu.memory_space<vmem>>, vector<1x512xf32>
    %c23 = arith.constant 23 : index
    %c0_134 = arith.constant 0 : index
    %215 = vector.load %arg7[%c23, %c0_134] : memref<64x512xf32, #tpu.memory_space<vmem>>, vector<1x512xf32>
    tpu.vector_store %arg7[%c23, %c0_134], %214 {strides = array<i32>} : memref<64x512xf32, #tpu.memory_space<vmem>>, vector<1x512xf32>,
    %c8_i32_135 = arith.constant 8 : i32
    %216 = arith.muli %arg0, %c8_i32_135 : i32
    %c0_i32_136 = arith.constant 0 : i32
    %217 = arith.addi %216, %c0_i32_136 : i32
    %c8_i32_137 = arith.constant 8 : i32
    %218 = arith.muli %217, %c8_i32_137 : i32
    %c3_i32_138 = arith.constant 3 : i32
    %219 = arith.addi %218, %c3_i32_138 : i32
    %220 = arith.index_cast %219 : i32 to index
    %221 = memref.load %arg1[%220] : memref<64xi32, #tpu.memory_space<smem>>
    %222 = arith.index_cast %221 : i32 to index
    %c0_139 = arith.constant 0 : index
    %223 = vector.load %arg2[%222, %c0_139] : memref<32x512xf32, #tpu.memory_space<vmem>>, vector<1x512xf32>
    %c24 = arith.constant 24 : index
    %c0_140 = arith.constant 0 : index
    %224 = vector.load %arg7[%c24, %c0_140] : memref<64x512xf32, #tpu.memory_space<vmem>>, vector<1x512xf32>
    tpu.vector_store %arg7[%c24, %c0_140], %223 {strides = array<i32>} : memref<64x512xf32, #tpu.memory_space<vmem>>, vector<1x512xf32>,
    %c8_i32_141 = arith.constant 8 : i32
    %225 = arith.muli %arg0, %c8_i32_141 : i32
    %c1_i32_142 = arith.constant 1 : i32
    %226 = arith.addi %225, %c1_i32_142 : i32
    %c8_i32_143 = arith.constant 8 : i32
    %227 = arith.muli %226, %c8_i32_143 : i32
    %c3_i32_144 = arith.constant 3 : i32
    %228 = arith.addi %227, %c3_i32_144 : i32
    %229 = arith.index_cast %228 : i32 to index
    %230 = memref.load %arg1[%229] : memref<64xi32, #tpu.memory_space<smem>>
    %231 = arith.index_cast %230 : i32 to index
    %c0_145 = arith.constant 0 : index
    %232 = vector.load %arg2[%231, %c0_145] : memref<32x512xf32, #tpu.memory_space<vmem>>, vector<1x512xf32>
    %c25 = arith.constant 25 : index
    %c0_146 = arith.constant 0 : index
    %233 = vector.load %arg7[%c25, %c0_146] : memref<64x512xf32, #tpu.memory_space<vmem>>, vector<1x512xf32>
    tpu.vector_store %arg7[%c25, %c0_146], %232 {strides = array<i32>} : memref<64x512xf32, #tpu.memory_space<vmem>>, vector<1x512xf32>,
    %c8_i32_147 = arith.constant 8 : i32
    %234 = arith.muli %arg0, %c8_i32_147 : i32
    %c2_i32_148 = arith.constant 2 : i32
    %235 = arith.addi %234, %c2_i32_148 : i32
    %c8_i32_149 = arith.constant 8 : i32
    %236 = arith.muli %235, %c8_i32_149 : i32
    %c3_i32_150 = arith.constant 3 : i32
    %237 = arith.addi %236, %c3_i32_150 : i32
    %238 = arith.index_cast %237 : i32 to index
    %239 = memref.load %arg1[%238] : memref<64xi32, #tpu.memory_space<smem>>
    %240 = arith.index_cast %239 : i32 to index
    %c0_151 = arith.constant 0 : index
    %241 = vector.load %arg2[%240, %c0_151] : memref<32x512xf32, #tpu.memory_space<vmem>>, vector<1x512xf32>
    %c26 = arith.constant 26 : index
    %c0_152 = arith.constant 0 : index
    %242 = vector.load %arg7[%c26, %c0_152] : memref<64x512xf32, #tpu.memory_space<vmem>>, vector<1x512xf32>
    tpu.vector_store %arg7[%c26, %c0_152], %241 {strides = array<i32>} : memref<64x512xf32, #tpu.memory_space<vmem>>, vector<1x512xf32>,
    %c8_i32_153 = arith.constant 8 : i32
    %243 = arith.muli %arg0, %c8_i32_153 : i32
    %c3_i32_154 = arith.constant 3 : i32
    %244 = arith.addi %243, %c3_i32_154 : i32
    %c8_i32_155 = arith.constant 8 : i32
    %245 = arith.muli %244, %c8_i32_155 : i32
    %c3_i32_156 = arith.constant 3 : i32
    %246 = arith.addi %245, %c3_i32_156 : i32
    %247 = arith.index_cast %246 : i32 to index
    %248 = memref.load %arg1[%247] : memref<64xi32, #tpu.memory_space<smem>>
    %249 = arith.index_cast %248 : i32 to index
    %c0_157 = arith.constant 0 : index
    %250 = vector.load %arg2[%249, %c0_157] : memref<32x512xf32, #tpu.memory_space<vmem>>, vector<1x512xf32>
    %c27 = arith.constant 27 : index
    %c0_158 = arith.constant 0 : index
    %251 = vector.load %arg7[%c27, %c0_158] : memref<64x512xf32, #tpu.memory_space<vmem>>, vector<1x512xf32>
    tpu.vector_store %arg7[%c27, %c0_158], %250 {strides = array<i32>} : memref<64x512xf32, #tpu.memory_space<vmem>>, vector<1x512xf32>,
    %c8_i32_159 = arith.constant 8 : i32
    %252 = arith.muli %arg0, %c8_i32_159 : i32
    %c4_i32_160 = arith.constant 4 : i32
    %253 = arith.addi %252, %c4_i32_160 : i32
    %c8_i32_161 = arith.constant 8 : i32
    %254 = arith.muli %253, %c8_i32_161 : i32
    %c3_i32_162 = arith.constant 3 : i32
    %255 = arith.addi %254, %c3_i32_162 : i32
    %256 = arith.index_cast %255 : i32 to index
    %257 = memref.load %arg1[%256] : memref<64xi32, #tpu.memory_space<smem>>
    %258 = arith.index_cast %257 : i32 to index
    %c0_163 = arith.constant 0 : index
    %259 = vector.load %arg2[%258, %c0_163] : memref<32x512xf32, #tpu.memory_space<vmem>>, vector<1x512xf32>
    %c28 = arith.constant 28 : index
    %c0_164 = arith.constant 0 : index
    %260 = vector.load %arg7[%c28, %c0_164] : memref<64x512xf32, #tpu.memory_space<vmem>>, vector<1x512xf32>
    tpu.vector_store %arg7[%c28, %c0_164], %259 {strides = array<i32>} : memref<64x512xf32, #tpu.memory_space<vmem>>, vector<1x512xf32>,
    %c8_i32_165 = arith.constant 8 : i32
    %261 = arith.muli %arg0, %c8_i32_165 : i32
    %c5_i32_166 = arith.constant 5 : i32
    %262 = arith.addi %261, %c5_i32_166 : i32
    %c8_i32_167 = arith.constant 8 : i32
    %263 = arith.muli %262, %c8_i32_167 : i32
    %c3_i32_168 = arith.constant 3 : i32
    %264 = arith.addi %263, %c3_i32_168 : i32
    %265 = arith.index_cast %264 : i32 to index
    %266 = memref.load %arg1[%265] : memref<64xi32, #tpu.memory_space<smem>>
    %267 = arith.index_cast %266 : i32 to index
    %c0_169 = arith.constant 0 : index
    %268 = vector.load %arg2[%267, %c0_169] : memref<32x512xf32, #tpu.memory_space<vmem>>, vector<1x512xf32>
    %c29 = arith.constant 29 : index
    %c0_170 = arith.constant 0 : index
    %269 = vector.load %arg7[%c29, %c0_170] : memref<64x512xf32, #tpu.memory_space<vmem>>, vector<1x512xf32>
    tpu.vector_store %arg7[%c29, %c0_170], %268 {strides = array<i32>} : memref<64x512xf32, #tpu.memory_space<vmem>>, vector<1x512xf32>,
    %c8_i32_171 = arith.constant 8 : i32
    %270 = arith.muli %arg0, %c8_i32_171 : i32
    %c6_i32_172 = arith.constant 6 : i32
    %271 = arith.addi %270, %c6_i32_172 : i32
    %c8_i32_173 = arith.constant 8 : i32
    %272 = arith.muli %271, %c8_i32_173 : i32
    %c3_i32_174 = arith.constant 3 : i32
    %273 = arith.addi %272, %c3_i32_174 : i32
    %274 = arith.index_cast %273 : i32 to index
    %275 = memref.load %arg1[%274] : memref<64xi32, #tpu.memory_space<smem>>
    %276 = arith.index_cast %275 : i32 to index
    %c0_175 = arith.constant 0 : index
    %277 = vector.load %arg2[%276, %c0_175] : memref<32x512xf32, #tpu.memory_space<vmem>>, vector<1x512xf32>
    %c30 = arith.constant 30 : index
    %c0_176 = arith.constant 0 : index
    %278 = vector.load %arg7[%c30, %c0_176] : memref<64x512xf32, #tpu.memory_space<vmem>>, vector<1x512xf32>
    tpu.vector_store %arg7[%c30, %c0_176], %277 {strides = array<i32>} : memref<64x512xf32, #tpu.memory_space<vmem>>, vector<1x512xf32>,
    %c8_i32_177 = arith.constant 8 : i32
    %279 = arith.muli %arg0, %c8_i32_177 : i32
    %c7_i32_178 = arith.constant 7 : i32
    %280 = arith.addi %279, %c7_i32_178 : i32
    %c8_i32_179 = arith.constant 8 : i32
    %281 = arith.muli %280, %c8_i32_179 : i32
    %c3_i32_180 = arith.constant 3 : i32
    %282 = arith.addi %281, %c3_i32_180 : i32
    %283 = arith.index_cast %282 : i32 to index
    %284 = memref.load %arg1[%283] : memref<64xi32, #tpu.memory_space<smem>>
    %285 = arith.index_cast %284 : i32 to index
    %c0_181 = arith.constant 0 : index
    %286 = vector.load %arg2[%285, %c0_181] : memref<32x512xf32, #tpu.memory_space<vmem>>, vector<1x512xf32>
    %c31 = arith.constant 31 : index
    %c0_182 = arith.constant 0 : index
    %287 = vector.load %arg7[%c31, %c0_182] : memref<64x512xf32, #tpu.memory_space<vmem>>, vector<1x512xf32>
    tpu.vector_store %arg7[%c31, %c0_182], %286 {strides = array<i32>} : memref<64x512xf32, #tpu.memory_space<vmem>>, vector<1x512xf32>,
    %c8_i32_183 = arith.constant 8 : i32
    %288 = arith.muli %arg0, %c8_i32_183 : i32
    %c0_i32_184 = arith.constant 0 : i32
    %289 = arith.addi %288, %c0_i32_184 : i32
    %c8_i32_185 = arith.constant 8 : i32
    %290 = arith.muli %289, %c8_i32_185 : i32
    %c4_i32_186 = arith.constant 4 : i32
    %291 = arith.addi %290, %c4_i32_186 : i32
    %292 = arith.index_cast %291 : i32 to index
    %293 = memref.load %arg1[%292] : memref<64xi32, #tpu.memory_space<smem>>
    %294 = arith.index_cast %293 : i32 to index
    %c0_187 = arith.constant 0 : index
    %295 = vector.load %arg2[%294, %c0_187] : memref<32x512xf32, #tpu.memory_space<vmem>>, vector<1x512xf32>
    %c32 = arith.constant 32 : index
    %c0_188 = arith.constant 0 : index
    %296 = vector.load %arg7[%c32, %c0_188] : memref<64x512xf32, #tpu.memory_space<vmem>>, vector<1x512xf32>
    tpu.vector_store %arg7[%c32, %c0_188], %295 {strides = array<i32>} : memref<64x512xf32, #tpu.memory_space<vmem>>, vector<1x512xf32>,
    %c8_i32_189 = arith.constant 8 : i32
    %297 = arith.muli %arg0, %c8_i32_189 : i32
    %c1_i32_190 = arith.constant 1 : i32
    %298 = arith.addi %297, %c1_i32_190 : i32
    %c8_i32_191 = arith.constant 8 : i32
    %299 = arith.muli %298, %c8_i32_191 : i32
    %c4_i32_192 = arith.constant 4 : i32
    %300 = arith.addi %299, %c4_i32_192 : i32
    %301 = arith.index_cast %300 : i32 to index
    %302 = memref.load %arg1[%301] : memref<64xi32, #tpu.memory_space<smem>>
    %303 = arith.index_cast %302 : i32 to index
    %c0_193 = arith.constant 0 : index
    %304 = vector.load %arg2[%303, %c0_193] : memref<32x512xf32, #tpu.memory_space<vmem>>, vector<1x512xf32>
    %c33 = arith.constant 33 : index
    %c0_194 = arith.constant 0 : index
    %305 = vector.load %arg7[%c33, %c0_194] : memref<64x512xf32, #tpu.memory_space<vmem>>, vector<1x512xf32>
    tpu.vector_store %arg7[%c33, %c0_194], %304 {strides = array<i32>} : memref<64x512xf32, #tpu.memory_space<vmem>>, vector<1x512xf32>,
    %c8_i32_195 = arith.constant 8 : i32
    %306 = arith.muli %arg0, %c8_i32_195 : i32
    %c2_i32_196 = arith.constant 2 : i32
    %307 = arith.addi %306, %c2_i32_196 : i32
    %c8_i32_197 = arith.constant 8 : i32
    %308 = arith.muli %307, %c8_i32_197 : i32
    %c4_i32_198 = arith.constant 4 : i32
    %309 = arith.addi %308, %c4_i32_198 : i32
    %310 = arith.index_cast %309 : i32 to index
    %311 = memref.load %arg1[%310] : memref<64xi32, #tpu.memory_space<smem>>
    %312 = arith.index_cast %311 : i32 to index
    %c0_199 = arith.constant 0 : index
    %313 = vector.load %arg2[%312, %c0_199] : memref<32x512xf32, #tpu.memory_space<vmem>>, vector<1x512xf32>
    %c34 = arith.constant 34 : index
    %c0_200 = arith.constant 0 : index
    %314 = vector.load %arg7[%c34, %c0_200] : memref<64x512xf32, #tpu.memory_space<vmem>>, vector<1x512xf32>
    tpu.vector_store %arg7[%c34, %c0_200], %313 {strides = array<i32>} : memref<64x512xf32, #tpu.memory_space<vmem>>, vector<1x512xf32>,
    %c8_i32_201 = arith.constant 8 : i32
    %315 = arith.muli %arg0, %c8_i32_201 : i32
    %c3_i32_202 = arith.constant 3 : i32
    %316 = arith.addi %315, %c3_i32_202 : i32
    %c8_i32_203 = arith.constant 8 : i32
    %317 = arith.muli %316, %c8_i32_203 : i32
    %c4_i32_204 = arith.constant 4 : i32
    %318 = arith.addi %317, %c4_i32_204 : i32
    %319 = arith.index_cast %318 : i32 to index
    %320 = memref.load %arg1[%319] : memref<64xi32, #tpu.memory_space<smem>>
    %321 = arith.index_cast %320 : i32 to index
    %c0_205 = arith.constant 0 : index
    %322 = vector.load %arg2[%321, %c0_205] : memref<32x512xf32, #tpu.memory_space<vmem>>, vector<1x512xf32>
    %c35 = arith.constant 35 : index
    %c0_206 = arith.constant 0 : index
    %323 = vector.load %arg7[%c35, %c0_206] : memref<64x512xf32, #tpu.memory_space<vmem>>, vector<1x512xf32>
    tpu.vector_store %arg7[%c35, %c0_206], %322 {strides = array<i32>} : memref<64x512xf32, #tpu.memory_space<vmem>>, vector<1x512xf32>,
    %c8_i32_207 = arith.constant 8 : i32
    %324 = arith.muli %arg0, %c8_i32_207 : i32
    %c4_i32_208 = arith.constant 4 : i32
    %325 = arith.addi %324, %c4_i32_208 : i32
    %c8_i32_209 = arith.constant 8 : i32
    %326 = arith.muli %325, %c8_i32_209 : i32
    %c4_i32_210 = arith.constant 4 : i32
    %327 = arith.addi %326, %c4_i32_210 : i32
    %328 = arith.index_cast %327 : i32 to index
    %329 = memref.load %arg1[%328] : memref<64xi32, #tpu.memory_space<smem>>
    %330 = arith.index_cast %329 : i32 to index
    %c0_211 = arith.constant 0 : index
    %331 = vector.load %arg2[%330, %c0_211] : memref<32x512xf32, #tpu.memory_space<vmem>>, vector<1x512xf32>
    %c36 = arith.constant 36 : index
    %c0_212 = arith.constant 0 : index
    %332 = vector.load %arg7[%c36, %c0_212] : memref<64x512xf32, #tpu.memory_space<vmem>>, vector<1x512xf32>
    tpu.vector_store %arg7[%c36, %c0_212], %331 {strides = array<i32>} : memref<64x512xf32, #tpu.memory_space<vmem>>, vector<1x512xf32>,
    %c8_i32_213 = arith.constant 8 : i32
    %333 = arith.muli %arg0, %c8_i32_213 : i32
    %c5_i32_214 = arith.constant 5 : i32
    %334 = arith.addi %333, %c5_i32_214 : i32
    %c8_i32_215 = arith.constant 8 : i32
    %335 = arith.muli %334, %c8_i32_215 : i32
    %c4_i32_216 = arith.constant 4 : i32
    %336 = arith.addi %335, %c4_i32_216 : i32
    %337 = arith.index_cast %336 : i32 to index
    %338 = memref.load %arg1[%337] : memref<64xi32, #tpu.memory_space<smem>>
    %339 = arith.index_cast %338 : i32 to index
    %c0_217 = arith.constant 0 : index
    %340 = vector.load %arg2[%339, %c0_217] : memref<32x512xf32, #tpu.memory_space<vmem>>, vector<1x512xf32>
    %c37 = arith.constant 37 : index
    %c0_218 = arith.constant 0 : index
    %341 = vector.load %arg7[%c37, %c0_218] : memref<64x512xf32, #tpu.memory_space<vmem>>, vector<1x512xf32>
    tpu.vector_store %arg7[%c37, %c0_218], %340 {strides = array<i32>} : memref<64x512xf32, #tpu.memory_space<vmem>>, vector<1x512xf32>,
    %c8_i32_219 = arith.constant 8 : i32
    %342 = arith.muli %arg0, %c8_i32_219 : i32
    %c6_i32_220 = arith.constant 6 : i32
    %343 = arith.addi %342, %c6_i32_220 : i32
    %c8_i32_221 = arith.constant 8 : i32
    %344 = arith.muli %343, %c8_i32_221 : i32
    %c4_i32_222 = arith.constant 4 : i32
    %345 = arith.addi %344, %c4_i32_222 : i32
    %346 = arith.index_cast %345 : i32 to index
    %347 = memref.load %arg1[%346] : memref<64xi32, #tpu.memory_space<smem>>
    %348 = arith.index_cast %347 : i32 to index
    %c0_223 = arith.constant 0 : index
    %349 = vector.load %arg2[%348, %c0_223] : memref<32x512xf32, #tpu.memory_space<vmem>>, vector<1x512xf32>
    %c38 = arith.constant 38 : index
    %c0_224 = arith.constant 0 : index
    %350 = vector.load %arg7[%c38, %c0_224] : memref<64x512xf32, #tpu.memory_space<vmem>>, vector<1x512xf32>
    tpu.vector_store %arg7[%c38, %c0_224], %349 {strides = array<i32>} : memref<64x512xf32, #tpu.memory_space<vmem>>, vector<1x512xf32>,
    %c8_i32_225 = arith.constant 8 : i32
    %351 = arith.muli %arg0, %c8_i32_225 : i32
    %c7_i32_226 = arith.constant 7 : i32
    %352 = arith.addi %351, %c7_i32_226 : i32
    %c8_i32_227 = arith.constant 8 : i32
    %353 = arith.muli %352, %c8_i32_227 : i32
    %c4_i32_228 = arith.constant 4 : i32
    %354 = arith.addi %353, %c4_i32_228 : i32
    %355 = arith.index_cast %354 : i32 to index
    %356 = memref.load %arg1[%355] : memref<64xi32, #tpu.memory_space<smem>>
    %357 = arith.index_cast %356 : i32 to index
    %c0_229 = arith.constant 0 : index
    %358 = vector.load %arg2[%357, %c0_229] : memref<32x512xf32, #tpu.memory_space<vmem>>, vector<1x512xf32>
    %c39 = arith.constant 39 : index
    %c0_230 = arith.constant 0 : index
    %359 = vector.load %arg7[%c39, %c0_230] : memref<64x512xf32, #tpu.memory_space<vmem>>, vector<1x512xf32>
    tpu.vector_store %arg7[%c39, %c0_230], %358 {strides = array<i32>} : memref<64x512xf32, #tpu.memory_space<vmem>>, vector<1x512xf32>,
    %c8_i32_231 = arith.constant 8 : i32
    %360 = arith.muli %arg0, %c8_i32_231 : i32
    %c0_i32_232 = arith.constant 0 : i32
    %361 = arith.addi %360, %c0_i32_232 : i32
    %c8_i32_233 = arith.constant 8 : i32
    %362 = arith.muli %361, %c8_i32_233 : i32
    %c5_i32_234 = arith.constant 5 : i32
    %363 = arith.addi %362, %c5_i32_234 : i32
    %364 = arith.index_cast %363 : i32 to index
    %365 = memref.load %arg1[%364] : memref<64xi32, #tpu.memory_space<smem>>
    %366 = arith.index_cast %365 : i32 to index
    %c0_235 = arith.constant 0 : index
    %367 = vector.load %arg2[%366, %c0_235] : memref<32x512xf32, #tpu.memory_space<vmem>>, vector<1x512xf32>
    %c40 = arith.constant 40 : index
    %c0_236 = arith.constant 0 : index
    %368 = vector.load %arg7[%c40, %c0_236] : memref<64x512xf32, #tpu.memory_space<vmem>>, vector<1x512xf32>
    tpu.vector_store %arg7[%c40, %c0_236], %367 {strides = array<i32>} : memref<64x512xf32, #tpu.memory_space<vmem>>, vector<1x512xf32>,
    %c8_i32_237 = arith.constant 8 : i32
    %369 = arith.muli %arg0, %c8_i32_237 : i32
    %c1_i32_238 = arith.constant 1 : i32
    %370 = arith.addi %369, %c1_i32_238 : i32
    %c8_i32_239 = arith.constant 8 : i32
    %371 = arith.muli %370, %c8_i32_239 : i32
    %c5_i32_240 = arith.constant 5 : i32
    %372 = arith.addi %371, %c5_i32_240 : i32
    %373 = arith.index_cast %372 : i32 to index
    %374 = memref.load %arg1[%373] : memref<64xi32, #tpu.memory_space<smem>>
    %375 = arith.index_cast %374 : i32 to index
    %c0_241 = arith.constant 0 : index
    %376 = vector.load %arg2[%375, %c0_241] : memref<32x512xf32, #tpu.memory_space<vmem>>, vector<1x512xf32>
    %c41 = arith.constant 41 : index
    %c0_242 = arith.constant 0 : index
    %377 = vector.load %arg7[%c41, %c0_242] : memref<64x512xf32, #tpu.memory_space<vmem>>, vector<1x512xf32>
    tpu.vector_store %arg7[%c41, %c0_242], %376 {strides = array<i32>} : memref<64x512xf32, #tpu.memory_space<vmem>>, vector<1x512xf32>,
    %c8_i32_243 = arith.constant 8 : i32
    %378 = arith.muli %arg0, %c8_i32_243 : i32
    %c2_i32_244 = arith.constant 2 : i32
    %379 = arith.addi %378, %c2_i32_244 : i32
    %c8_i32_245 = arith.constant 8 : i32
    %380 = arith.muli %379, %c8_i32_245 : i32
    %c5_i32_246 = arith.constant 5 : i32
    %381 = arith.addi %380, %c5_i32_246 : i32
    %382 = arith.index_cast %381 : i32 to index
    %383 = memref.load %arg1[%382] : memref<64xi32, #tpu.memory_space<smem>>
    %384 = arith.index_cast %383 : i32 to index
    %c0_247 = arith.constant 0 : index
    %385 = vector.load %arg2[%384, %c0_247] : memref<32x512xf32, #tpu.memory_space<vmem>>, vector<1x512xf32>
    %c42 = arith.constant 42 : index
    %c0_248 = arith.constant 0 : index
    %386 = vector.load %arg7[%c42, %c0_248] : memref<64x512xf32, #tpu.memory_space<vmem>>, vector<1x512xf32>
    tpu.vector_store %arg7[%c42, %c0_248], %385 {strides = array<i32>} : memref<64x512xf32, #tpu.memory_space<vmem>>, vector<1x512xf32>,
    %c8_i32_249 = arith.constant 8 : i32
    %387 = arith.muli %arg0, %c8_i32_249 : i32
    %c3_i32_250 = arith.constant 3 : i32
    %388 = arith.addi %387, %c3_i32_250 : i32
    %c8_i32_251 = arith.constant 8 : i32
    %389 = arith.muli %388, %c8_i32_251 : i32
    %c5_i32_252 = arith.constant 5 : i32
    %390 = arith.addi %389, %c5_i32_252 : i32
    %391 = arith.index_cast %390 : i32 to index
    %392 = memref.load %arg1[%391] : memref<64xi32, #tpu.memory_space<smem>>
    %393 = arith.index_cast %392 : i32 to index
    %c0_253 = arith.constant 0 : index
    %394 = vector.load %arg2[%393, %c0_253] : memref<32x512xf32, #tpu.memory_space<vmem>>, vector<1x512xf32>
    %c43 = arith.constant 43 : index
    %c0_254 = arith.constant 0 : index
    %395 = vector.load %arg7[%c43, %c0_254] : memref<64x512xf32, #tpu.memory_space<vmem>>, vector<1x512xf32>
    tpu.vector_store %arg7[%c43, %c0_254], %394 {strides = array<i32>} : memref<64x512xf32, #tpu.memory_space<vmem>>, vector<1x512xf32>,
    %c8_i32_255 = arith.constant 8 : i32
    %396 = arith.muli %arg0, %c8_i32_255 : i32
    %c4_i32_256 = arith.constant 4 : i32
    %397 = arith.addi %396, %c4_i32_256 : i32
    %c8_i32_257 = arith.constant 8 : i32
    %398 = arith.muli %397, %c8_i32_257 : i32
    %c5_i32_258 = arith.constant 5 : i32
    %399 = arith.addi %398, %c5_i32_258 : i32
    %400 = arith.index_cast %399 : i32 to index
    %401 = memref.load %arg1[%400] : memref<64xi32, #tpu.memory_space<smem>>
    %402 = arith.index_cast %401 : i32 to index
    %c0_259 = arith.constant 0 : index
    %403 = vector.load %arg2[%402, %c0_259] : memref<32x512xf32, #tpu.memory_space<vmem>>, vector<1x512xf32>
    %c44 = arith.constant 44 : index
    %c0_260 = arith.constant 0 : index
    %404 = vector.load %arg7[%c44, %c0_260] : memref<64x512xf32, #tpu.memory_space<vmem>>, vector<1x512xf32>
    tpu.vector_store %arg7[%c44, %c0_260], %403 {strides = array<i32>} : memref<64x512xf32, #tpu.memory_space<vmem>>, vector<1x512xf32>,
    %c8_i32_261 = arith.constant 8 : i32
    %405 = arith.muli %arg0, %c8_i32_261 : i32
    %c5_i32_262 = arith.constant 5 : i32
    %406 = arith.addi %405, %c5_i32_262 : i32
    %c8_i32_263 = arith.constant 8 : i32
    %407 = arith.muli %406, %c8_i32_263 : i32
    %c5_i32_264 = arith.constant 5 : i32
    %408 = arith.addi %407, %c5_i32_264 : i32
    %409 = arith.index_cast %408 : i32 to index
    %410 = memref.load %arg1[%409] : memref<64xi32, #tpu.memory_space<smem>>
    %411 = arith.index_cast %410 : i32 to index
    %c0_265 = arith.constant 0 : index
    %412 = vector.load %arg2[%411, %c0_265] : memref<32x512xf32, #tpu.memory_space<vmem>>, vector<1x512xf32>
    %c45 = arith.constant 45 : index
    %c0_266 = arith.constant 0 : index
    %413 = vector.load %arg7[%c45, %c0_266] : memref<64x512xf32, #tpu.memory_space<vmem>>, vector<1x512xf32>
    tpu.vector_store %arg7[%c45, %c0_266], %412 {strides = array<i32>} : memref<64x512xf32, #tpu.memory_space<vmem>>, vector<1x512xf32>,
    %c8_i32_267 = arith.constant 8 : i32
    %414 = arith.muli %arg0, %c8_i32_267 : i32
    %c6_i32_268 = arith.constant 6 : i32
    %415 = arith.addi %414, %c6_i32_268 : i32
    %c8_i32_269 = arith.constant 8 : i32
    %416 = arith.muli %415, %c8_i32_269 : i32
    %c5_i32_270 = arith.constant 5 : i32
    %417 = arith.addi %416, %c5_i32_270 : i32
    %418 = arith.index_cast %417 : i32 to index
    %419 = memref.load %arg1[%418] : memref<64xi32, #tpu.memory_space<smem>>
    %420 = arith.index_cast %419 : i32 to index
    %c0_271 = arith.constant 0 : index
    %421 = vector.load %arg2[%420, %c0_271] : memref<32x512xf32, #tpu.memory_space<vmem>>, vector<1x512xf32>
    %c46 = arith.constant 46 : index
    %c0_272 = arith.constant 0 : index
    %422 = vector.load %arg7[%c46, %c0_272] : memref<64x512xf32, #tpu.memory_space<vmem>>, vector<1x512xf32>
    tpu.vector_store %arg7[%c46, %c0_272], %421 {strides = array<i32>} : memref<64x512xf32, #tpu.memory_space<vmem>>, vector<1x512xf32>,
    %c8_i32_273 = arith.constant 8 : i32
    %423 = arith.muli %arg0, %c8_i32_273 : i32
    %c7_i32_274 = arith.constant 7 : i32
    %424 = arith.addi %423, %c7_i32_274 : i32
    %c8_i32_275 = arith.constant 8 : i32
    %425 = arith.muli %424, %c8_i32_275 : i32
    %c5_i32_276 = arith.constant 5 : i32
    %426 = arith.addi %425, %c5_i32_276 : i32
    %427 = arith.index_cast %426 : i32 to index
    %428 = memref.load %arg1[%427] : memref<64xi32, #tpu.memory_space<smem>>
    %429 = arith.index_cast %428 : i32 to index
    %c0_277 = arith.constant 0 : index
    %430 = vector.load %arg2[%429, %c0_277] : memref<32x512xf32, #tpu.memory_space<vmem>>, vector<1x512xf32>
    %c47 = arith.constant 47 : index
    %c0_278 = arith.constant 0 : index
    %431 = vector.load %arg7[%c47, %c0_278] : memref<64x512xf32, #tpu.memory_space<vmem>>, vector<1x512xf32>
    tpu.vector_store %arg7[%c47, %c0_278], %430 {strides = array<i32>} : memref<64x512xf32, #tpu.memory_space<vmem>>, vector<1x512xf32>,
    %c8_i32_279 = arith.constant 8 : i32
    %432 = arith.muli %arg0, %c8_i32_279 : i32
    %c0_i32_280 = arith.constant 0 : i32
    %433 = arith.addi %432, %c0_i32_280 : i32
    %c8_i32_281 = arith.constant 8 : i32
    %434 = arith.muli %433, %c8_i32_281 : i32
    %c6_i32_282 = arith.constant 6 : i32
    %435 = arith.addi %434, %c6_i32_282 : i32
    %436 = arith.index_cast %435 : i32 to index
    %437 = memref.load %arg1[%436] : memref<64xi32, #tpu.memory_space<smem>>
    %438 = arith.index_cast %437 : i32 to index
    %c0_283 = arith.constant 0 : index
    %439 = vector.load %arg2[%438, %c0_283] : memref<32x512xf32, #tpu.memory_space<vmem>>, vector<1x512xf32>
    %c48 = arith.constant 48 : index
    %c0_284 = arith.constant 0 : index
    %440 = vector.load %arg7[%c48, %c0_284] : memref<64x512xf32, #tpu.memory_space<vmem>>, vector<1x512xf32>
    tpu.vector_store %arg7[%c48, %c0_284], %439 {strides = array<i32>} : memref<64x512xf32, #tpu.memory_space<vmem>>, vector<1x512xf32>,
    %c8_i32_285 = arith.constant 8 : i32
    %441 = arith.muli %arg0, %c8_i32_285 : i32
    %c1_i32_286 = arith.constant 1 : i32
    %442 = arith.addi %441, %c1_i32_286 : i32
    %c8_i32_287 = arith.constant 8 : i32
    %443 = arith.muli %442, %c8_i32_287 : i32
    %c6_i32_288 = arith.constant 6 : i32
    %444 = arith.addi %443, %c6_i32_288 : i32
    %445 = arith.index_cast %444 : i32 to index
    %446 = memref.load %arg1[%445] : memref<64xi32, #tpu.memory_space<smem>>
    %447 = arith.index_cast %446 : i32 to index
    %c0_289 = arith.constant 0 : index
    %448 = vector.load %arg2[%447, %c0_289] : memref<32x512xf32, #tpu.memory_space<vmem>>, vector<1x512xf32>
    %c49 = arith.constant 49 : index
    %c0_290 = arith.constant 0 : index
    %449 = vector.load %arg7[%c49, %c0_290] : memref<64x512xf32, #tpu.memory_space<vmem>>, vector<1x512xf32>
    tpu.vector_store %arg7[%c49, %c0_290], %448 {strides = array<i32>} : memref<64x512xf32, #tpu.memory_space<vmem>>, vector<1x512xf32>,
    %c8_i32_291 = arith.constant 8 : i32
    %450 = arith.muli %arg0, %c8_i32_291 : i32
    %c2_i32_292 = arith.constant 2 : i32
    %451 = arith.addi %450, %c2_i32_292 : i32
    %c8_i32_293 = arith.constant 8 : i32
    %452 = arith.muli %451, %c8_i32_293 : i32
    %c6_i32_294 = arith.constant 6 : i32
    %453 = arith.addi %452, %c6_i32_294 : i32
    %454 = arith.index_cast %453 : i32 to index
    %455 = memref.load %arg1[%454] : memref<64xi32, #tpu.memory_space<smem>>
    %456 = arith.index_cast %455 : i32 to index
    %c0_295 = arith.constant 0 : index
    %457 = vector.load %arg2[%456, %c0_295] : memref<32x512xf32, #tpu.memory_space<vmem>>, vector<1x512xf32>
    %c50 = arith.constant 50 : index
    %c0_296 = arith.constant 0 : index
    %458 = vector.load %arg7[%c50, %c0_296] : memref<64x512xf32, #tpu.memory_space<vmem>>, vector<1x512xf32>
    tpu.vector_store %arg7[%c50, %c0_296], %457 {strides = array<i32>} : memref<64x512xf32, #tpu.memory_space<vmem>>, vector<1x512xf32>,
    %c8_i32_297 = arith.constant 8 : i32
    %459 = arith.muli %arg0, %c8_i32_297 : i32
    %c3_i32_298 = arith.constant 3 : i32
    %460 = arith.addi %459, %c3_i32_298 : i32
    %c8_i32_299 = arith.constant 8 : i32
    %461 = arith.muli %460, %c8_i32_299 : i32
    %c6_i32_300 = arith.constant 6 : i32
    %462 = arith.addi %461, %c6_i32_300 : i32
    %463 = arith.index_cast %462 : i32 to index
    %464 = memref.load %arg1[%463] : memref<64xi32, #tpu.memory_space<smem>>
    %465 = arith.index_cast %464 : i32 to index
    %c0_301 = arith.constant 0 : index
    %466 = vector.load %arg2[%465, %c0_301] : memref<32x512xf32, #tpu.memory_space<vmem>>, vector<1x512xf32>
    %c51 = arith.constant 51 : index
    %c0_302 = arith.constant 0 : index
    %467 = vector.load %arg7[%c51, %c0_302] : memref<64x512xf32, #tpu.memory_space<vmem>>, vector<1x512xf32>
    tpu.vector_store %arg7[%c51, %c0_302], %466 {strides = array<i32>} : memref<64x512xf32, #tpu.memory_space<vmem>>, vector<1x512xf32>,
    %c8_i32_303 = arith.constant 8 : i32
    %468 = arith.muli %arg0, %c8_i32_303 : i32
    %c4_i32_304 = arith.constant 4 : i32
    %469 = arith.addi %468, %c4_i32_304 : i32
    %c8_i32_305 = arith.constant 8 : i32
    %470 = arith.muli %469, %c8_i32_305 : i32
    %c6_i32_306 = arith.constant 6 : i32
    %471 = arith.addi %470, %c6_i32_306 : i32
    %472 = arith.index_cast %471 : i32 to index
    %473 = memref.load %arg1[%472] : memref<64xi32, #tpu.memory_space<smem>>
    %474 = arith.index_cast %473 : i32 to index
    %c0_307 = arith.constant 0 : index
    %475 = vector.load %arg2[%474, %c0_307] : memref<32x512xf32, #tpu.memory_space<vmem>>, vector<1x512xf32>
    %c52 = arith.constant 52 : index
    %c0_308 = arith.constant 0 : index
    %476 = vector.load %arg7[%c52, %c0_308] : memref<64x512xf32, #tpu.memory_space<vmem>>, vector<1x512xf32>
    tpu.vector_store %arg7[%c52, %c0_308], %475 {strides = array<i32>} : memref<64x512xf32, #tpu.memory_space<vmem>>, vector<1x512xf32>,
    %c8_i32_309 = arith.constant 8 : i32
    %477 = arith.muli %arg0, %c8_i32_309 : i32
    %c5_i32_310 = arith.constant 5 : i32
    %478 = arith.addi %477, %c5_i32_310 : i32
    %c8_i32_311 = arith.constant 8 : i32
    %479 = arith.muli %478, %c8_i32_311 : i32
    %c6_i32_312 = arith.constant 6 : i32
    %480 = arith.addi %479, %c6_i32_312 : i32
    %481 = arith.index_cast %480 : i32 to index
    %482 = memref.load %arg1[%481] : memref<64xi32, #tpu.memory_space<smem>>
    %483 = arith.index_cast %482 : i32 to index
    %c0_313 = arith.constant 0 : index
    %484 = vector.load %arg2[%483, %c0_313] : memref<32x512xf32, #tpu.memory_space<vmem>>, vector<1x512xf32>
    %c53 = arith.constant 53 : index
    %c0_314 = arith.constant 0 : index
    %485 = vector.load %arg7[%c53, %c0_314] : memref<64x512xf32, #tpu.memory_space<vmem>>, vector<1x512xf32>
    tpu.vector_store %arg7[%c53, %c0_314], %484 {strides = array<i32>} : memref<64x512xf32, #tpu.memory_space<vmem>>, vector<1x512xf32>,
    %c8_i32_315 = arith.constant 8 : i32
    %486 = arith.muli %arg0, %c8_i32_315 : i32
    %c6_i32_316 = arith.constant 6 : i32
    %487 = arith.addi %486, %c6_i32_316 : i32
    %c8_i32_317 = arith.constant 8 : i32
    %488 = arith.muli %487, %c8_i32_317 : i32
    %c6_i32_318 = arith.constant 6 : i32
    %489 = arith.addi %488, %c6_i32_318 : i32
    %490 = arith.index_cast %489 : i32 to index
    %491 = memref.load %arg1[%490] : memref<64xi32, #tpu.memory_space<smem>>
    %492 = arith.index_cast %491 : i32 to index
    %c0_319 = arith.constant 0 : index
    %493 = vector.load %arg2[%492, %c0_319] : memref<32x512xf32, #tpu.memory_space<vmem>>, vector<1x512xf32>
    %c54 = arith.constant 54 : index
    %c0_320 = arith.constant 0 : index
    %494 = vector.load %arg7[%c54, %c0_320] : memref<64x512xf32, #tpu.memory_space<vmem>>, vector<1x512xf32>
    tpu.vector_store %arg7[%c54, %c0_320], %493 {strides = array<i32>} : memref<64x512xf32, #tpu.memory_space<vmem>>, vector<1x512xf32>,
    %c8_i32_321 = arith.constant 8 : i32
    %495 = arith.muli %arg0, %c8_i32_321 : i32
    %c7_i32_322 = arith.constant 7 : i32
    %496 = arith.addi %495, %c7_i32_322 : i32
    %c8_i32_323 = arith.constant 8 : i32
    %497 = arith.muli %496, %c8_i32_323 : i32
    %c6_i32_324 = arith.constant 6 : i32
    %498 = arith.addi %497, %c6_i32_324 : i32
    %499 = arith.index_cast %498 : i32 to index
    %500 = memref.load %arg1[%499] : memref<64xi32, #tpu.memory_space<smem>>
    %501 = arith.index_cast %500 : i32 to index
    %c0_325 = arith.constant 0 : index
    %502 = vector.load %arg2[%501, %c0_325] : memref<32x512xf32, #tpu.memory_space<vmem>>, vector<1x512xf32>
    %c55 = arith.constant 55 : index
    %c0_326 = arith.constant 0 : index
    %503 = vector.load %arg7[%c55, %c0_326] : memref<64x512xf32, #tpu.memory_space<vmem>>, vector<1x512xf32>
    tpu.vector_store %arg7[%c55, %c0_326], %502 {strides = array<i32>} : memref<64x512xf32, #tpu.memory_space<vmem>>, vector<1x512xf32>,
    %c8_i32_327 = arith.constant 8 : i32
    %504 = arith.muli %arg0, %c8_i32_327 : i32
    %c0_i32_328 = arith.constant 0 : i32
    %505 = arith.addi %504, %c0_i32_328 : i32
    %c8_i32_329 = arith.constant 8 : i32
    %506 = arith.muli %505, %c8_i32_329 : i32
    %c7_i32_330 = arith.constant 7 : i32
    %507 = arith.addi %506, %c7_i32_330 : i32
    %508 = arith.index_cast %507 : i32 to index
    %509 = memref.load %arg1[%508] : memref<64xi32, #tpu.memory_space<smem>>
    %510 = arith.index_cast %509 : i32 to index
    %c0_331 = arith.constant 0 : index
    %511 = vector.load %arg2[%510, %c0_331] : memref<32x512xf32, #tpu.memory_space<vmem>>, vector<1x512xf32>
    %c56 = arith.constant 56 : index
    %c0_332 = arith.constant 0 : index
    %512 = vector.load %arg7[%c56, %c0_332] : memref<64x512xf32, #tpu.memory_space<vmem>>, vector<1x512xf32>
    tpu.vector_store %arg7[%c56, %c0_332], %511 {strides = array<i32>} : memref<64x512xf32, #tpu.memory_space<vmem>>, vector<1x512xf32>,
    %c8_i32_333 = arith.constant 8 : i32
    %513 = arith.muli %arg0, %c8_i32_333 : i32
    %c1_i32_334 = arith.constant 1 : i32
    %514 = arith.addi %513, %c1_i32_334 : i32
    %c8_i32_335 = arith.constant 8 : i32
    %515 = arith.muli %514, %c8_i32_335 : i32
    %c7_i32_336 = arith.constant 7 : i32
    %516 = arith.addi %515, %c7_i32_336 : i32
    %517 = arith.index_cast %516 : i32 to index
    %518 = memref.load %arg1[%517] : memref<64xi32, #tpu.memory_space<smem>>
    %519 = arith.index_cast %518 : i32 to index
    %c0_337 = arith.constant 0 : index
    %520 = vector.load %arg2[%519, %c0_337] : memref<32x512xf32, #tpu.memory_space<vmem>>, vector<1x512xf32>
    %c57 = arith.constant 57 : index
    %c0_338 = arith.constant 0 : index
    %521 = vector.load %arg7[%c57, %c0_338] : memref<64x512xf32, #tpu.memory_space<vmem>>, vector<1x512xf32>
    tpu.vector_store %arg7[%c57, %c0_338], %520 {strides = array<i32>} : memref<64x512xf32, #tpu.memory_space<vmem>>, vector<1x512xf32>,
    %c8_i32_339 = arith.constant 8 : i32
    %522 = arith.muli %arg0, %c8_i32_339 : i32
    %c2_i32_340 = arith.constant 2 : i32
    %523 = arith.addi %522, %c2_i32_340 : i32
    %c8_i32_341 = arith.constant 8 : i32
    %524 = arith.muli %523, %c8_i32_341 : i32
    %c7_i32_342 = arith.constant 7 : i32
    %525 = arith.addi %524, %c7_i32_342 : i32
    %526 = arith.index_cast %525 : i32 to index
    %527 = memref.load %arg1[%526] : memref<64xi32, #tpu.memory_space<smem>>
    %528 = arith.index_cast %527 : i32 to index
    %c0_343 = arith.constant 0 : index
    %529 = vector.load %arg2[%528, %c0_343] : memref<32x512xf32, #tpu.memory_space<vmem>>, vector<1x512xf32>
    %c58 = arith.constant 58 : index
    %c0_344 = arith.constant 0 : index
    %530 = vector.load %arg7[%c58, %c0_344] : memref<64x512xf32, #tpu.memory_space<vmem>>, vector<1x512xf32>
    tpu.vector_store %arg7[%c58, %c0_344], %529 {strides = array<i32>} : memref<64x512xf32, #tpu.memory_space<vmem>>, vector<1x512xf32>,
    %c8_i32_345 = arith.constant 8 : i32
    %531 = arith.muli %arg0, %c8_i32_345 : i32
    %c3_i32_346 = arith.constant 3 : i32
    %532 = arith.addi %531, %c3_i32_346 : i32
    %c8_i32_347 = arith.constant 8 : i32
    %533 = arith.muli %532, %c8_i32_347 : i32
    %c7_i32_348 = arith.constant 7 : i32
    %534 = arith.addi %533, %c7_i32_348 : i32
    %535 = arith.index_cast %534 : i32 to index
    %536 = memref.load %arg1[%535] : memref<64xi32, #tpu.memory_space<smem>>
    %537 = arith.index_cast %536 : i32 to index
    %c0_349 = arith.constant 0 : index
    %538 = vector.load %arg2[%537, %c0_349] : memref<32x512xf32, #tpu.memory_space<vmem>>, vector<1x512xf32>
    %c59 = arith.constant 59 : index
    %c0_350 = arith.constant 0 : index
    %539 = vector.load %arg7[%c59, %c0_350] : memref<64x512xf32, #tpu.memory_space<vmem>>, vector<1x512xf32>
    tpu.vector_store %arg7[%c59, %c0_350], %538 {strides = array<i32>} : memref<64x512xf32, #tpu.memory_space<vmem>>, vector<1x512xf32>,
    %c8_i32_351 = arith.constant 8 : i32
    %540 = arith.muli %arg0, %c8_i32_351 : i32
    %c4_i32_352 = arith.constant 4 : i32
    %541 = arith.addi %540, %c4_i32_352 : i32
    %c8_i32_353 = arith.constant 8 : i32
    %542 = arith.muli %541, %c8_i32_353 : i32
    %c7_i32_354 = arith.constant 7 : i32
    %543 = arith.addi %542, %c7_i32_354 : i32
    %544 = arith.index_cast %543 : i32 to index
    %545 = memref.load %arg1[%544] : memref<64xi32, #tpu.memory_space<smem>>
    %546 = arith.index_cast %545 : i32 to index
    %c0_355 = arith.constant 0 : index
    %547 = vector.load %arg2[%546, %c0_355] : memref<32x512xf32, #tpu.memory_space<vmem>>, vector<1x512xf32>
    %c60 = arith.constant 60 : index
    %c0_356 = arith.constant 0 : index
    %548 = vector.load %arg7[%c60, %c0_356] : memref<64x512xf32, #tpu.memory_space<vmem>>, vector<1x512xf32>
    tpu.vector_store %arg7[%c60, %c0_356], %547 {strides = array<i32>} : memref<64x512xf32, #tpu.memory_space<vmem>>, vector<1x512xf32>,
    %c8_i32_357 = arith.constant 8 : i32
    %549 = arith.muli %arg0, %c8_i32_357 : i32
    %c5_i32_358 = arith.constant 5 : i32
    %550 = arith.addi %549, %c5_i32_358 : i32
    %c8_i32_359 = arith.constant 8 : i32
    %551 = arith.muli %550, %c8_i32_359 : i32
    %c7_i32_360 = arith.constant 7 : i32
    %552 = arith.addi %551, %c7_i32_360 : i32
    %553 = arith.index_cast %552 : i32 to index
    %554 = memref.load %arg1[%553] : memref<64xi32, #tpu.memory_space<smem>>
    %555 = arith.index_cast %554 : i32 to index
    %c0_361 = arith.constant 0 : index
    %556 = vector.load %arg2[%555, %c0_361] : memref<32x512xf32, #tpu.memory_space<vmem>>, vector<1x512xf32>
    %c61 = arith.constant 61 : index
    %c0_362 = arith.constant 0 : index
    %557 = vector.load %arg7[%c61, %c0_362] : memref<64x512xf32, #tpu.memory_space<vmem>>, vector<1x512xf32>
    tpu.vector_store %arg7[%c61, %c0_362], %556 {strides = array<i32>} : memref<64x512xf32, #tpu.memory_space<vmem>>, vector<1x512xf32>,
    %c8_i32_363 = arith.constant 8 : i32
    %558 = arith.muli %arg0, %c8_i32_363 : i32
    %c6_i32_364 = arith.constant 6 : i32
    %559 = arith.addi %558, %c6_i32_364 : i32
    %c8_i32_365 = arith.constant 8 : i32
    %560 = arith.muli %559, %c8_i32_365 : i32
    %c7_i32_366 = arith.constant 7 : i32
    %561 = arith.addi %560, %c7_i32_366 : i32
    %562 = arith.index_cast %561 : i32 to index
    %563 = memref.load %arg1[%562] : memref<64xi32, #tpu.memory_space<smem>>
    %564 = arith.index_cast %563 : i32 to index
    %c0_367 = arith.constant 0 : index
    %565 = vector.load %arg2[%564, %c0_367] : memref<32x512xf32, #tpu.memory_space<vmem>>, vector<1x512xf32>
    %c62 = arith.constant 62 : index
    %c0_368 = arith.constant 0 : index
    %566 = vector.load %arg7[%c62, %c0_368] : memref<64x512xf32, #tpu.memory_space<vmem>>, vector<1x512xf32>
    tpu.vector_store %arg7[%c62, %c0_368], %565 {strides = array<i32>} : memref<64x512xf32, #tpu.memory_space<vmem>>, vector<1x512xf32>,
    %c8_i32_369 = arith.constant 8 : i32
    %567 = arith.muli %arg0, %c8_i32_369 : i32
    %c7_i32_370 = arith.constant 7 : i32
    %568 = arith.addi %567, %c7_i32_370 : i32
    %c8_i32_371 = arith.constant 8 : i32
    %569 = arith.muli %568, %c8_i32_371 : i32
    %c7_i32_372 = arith.constant 7 : i32
    %570 = arith.addi %569, %c7_i32_372 : i32
    %571 = arith.index_cast %570 : i32 to index
    %572 = memref.load %arg1[%571] : memref<64xi32, #tpu.memory_space<smem>>
    %573 = arith.index_cast %572 : i32 to index
    %c0_373 = arith.constant 0 : index
    %574 = vector.load %arg2[%573, %c0_373] : memref<32x512xf32, #tpu.memory_space<vmem>>, vector<1x512xf32>
    %c63 = arith.constant 63 : index
    %c0_374 = arith.constant 0 : index
    %575 = vector.load %arg7[%c63, %c0_374] : memref<64x512xf32, #tpu.memory_space<vmem>>, vector<1x512xf32>
    tpu.vector_store %arg7[%c63, %c0_374], %574 {strides = array<i32>} : memref<64x512xf32, #tpu.memory_space<vmem>>, vector<1x512xf32>,
    %cst = arith.constant 0.000000e+00 : f32
    %576 = vector.broadcast %cst : f32 to vector<8x128xf32>
    %cst_375 = arith.constant 0.000000e+00 : f32
    %577 = vector.broadcast %cst_375 : f32 to vector<8x128xf32>
    %c0_376 = arith.constant 0 : index
    %c0_377 = arith.constant 0 : index
    %578 = vector.load %arg7[%c0_376, %c0_377] : memref<64x512xf32, #tpu.memory_space<vmem>>, vector<8x512xf32>
    %c0_378 = arith.constant 0 : index
    %c0_379 = arith.constant 0 : index
    %579 = vector.load %arg3[%c0_378, %c0_379] : memref<128x512xf32, #tpu.memory_space<vmem>>, vector<128x512xf32>
    %cst_380 = arith.constant dense<0.000000e+00> : vector<8x512xf32>
    %580 = tpu.matmul %576, %579, %cst_380 {dimension_numbers = #tpu.dot_dimension_numbers<[1], [0], [0], [1], [0, 0, 1, 1], [], []>} : vector<8x128xf32>, vector<128x512xf32>, vector<8x512xf32> -> vector<8x512xf32>
    %581 = arith.addf %578, %580 : vector<8x512xf32>
    %582 = vector.extract_strided_slice %581 {offsets = [0, 0], sizes = [8, 128], strides = [1, 1]} : vector<8x512xf32> to vector<8x128xf32>
    %cst_381 = arith.constant 5.000000e-01 : f32
    %583 = vector.broadcast %cst_381 : f32 to vector<8x128xf32>
    %584 = arith.mulf %583, %582 : vector<8x128xf32>
    %585 = math.tanh %584 : vector<8x128xf32>
    %cst_382 = arith.constant 5.000000e-01 : f32
    %586 = vector.broadcast %cst_382 : f32 to vector<8x128xf32>
    %587 = arith.mulf %586, %585 : vector<8x128xf32>
    %cst_383 = arith.constant 5.000000e-01 : f32
    %588 = vector.broadcast %cst_383 : f32 to vector<8x128xf32>
    %589 = arith.addf %587, %588 : vector<8x128xf32>
    %590 = vector.extract_strided_slice %581 {offsets = [0, 128], sizes = [8, 128], strides = [1, 1]} : vector<8x512xf32> to vector<8x128xf32>
    %cst_384 = arith.constant 5.000000e-01 : f32
    %591 = vector.broadcast %cst_384 : f32 to vector<8x128xf32>
    %592 = arith.mulf %591, %590 : vector<8x128xf32>
    %593 = math.tanh %592 : vector<8x128xf32>
    %cst_385 = arith.constant 5.000000e-01 : f32
    %594 = vector.broadcast %cst_385 : f32 to vector<8x128xf32>
    %595 = arith.mulf %594, %593 : vector<8x128xf32>
    %cst_386 = arith.constant 5.000000e-01 : f32
    %596 = vector.broadcast %cst_386 : f32 to vector<8x128xf32>
    %597 = arith.addf %595, %596 : vector<8x128xf32>
    %598 = vector.extract_strided_slice %581 {offsets = [0, 256], sizes = [8, 128], strides = [1, 1]} : vector<8x512xf32> to vector<8x128xf32>
    %599 = math.tanh %598 : vector<8x128xf32>
    %600 = vector.extract_strided_slice %581 {offsets = [0, 384], sizes = [8, 128], strides = [1, 1]} : vector<8x512xf32> to vector<8x128xf32>
    %cst_387 = arith.constant 5.000000e-01 : f32
    %601 = vector.broadcast %cst_387 : f32 to vector<8x128xf32>
    %602 = arith.mulf %601, %600 : vector<8x128xf32>
    %603 = math.tanh %602 : vector<8x128xf32>
    %cst_388 = arith.constant 5.000000e-01 : f32
    %604 = vector.broadcast %cst_388 : f32 to vector<8x128xf32>
    %605 = arith.mulf %604, %603 : vector<8x128xf32>
    %cst_389 = arith.constant 5.000000e-01 : f32
    %606 = vector.broadcast %cst_389 : f32 to vector<8x128xf32>
    %607 = arith.addf %605, %606 : vector<8x128xf32>
    %608 = arith.mulf %597, %577 : vector<8x128xf32>
    %609 = arith.mulf %589, %599 : vector<8x128xf32>
    %610 = arith.addf %608, %609 : vector<8x128xf32>
    %611 = math.tanh %610 : vector<8x128xf32>
    %612 = arith.mulf %607, %611 : vector<8x128xf32>
    %c8_390 = arith.constant 8 : index
    %c0_391 = arith.constant 0 : index
    %613 = vector.load %arg7[%c8_390, %c0_391] : memref<64x512xf32, #tpu.memory_space<vmem>>, vector<8x512xf32>
    %c0_392 = arith.constant 0 : index
    %c0_393 = arith.constant 0 : index
    %614 = vector.load %arg3[%c0_392, %c0_393] : memref<128x512xf32, #tpu.memory_space<vmem>>, vector<128x512xf32>
    %cst_394 = arith.constant dense<0.000000e+00> : vector<8x512xf32>
    %615 = tpu.matmul %612, %614, %cst_394 {dimension_numbers = #tpu.dot_dimension_numbers<[1], [0], [0], [1], [0, 0, 1, 1], [], []>} : vector<8x128xf32>, vector<128x512xf32>, vector<8x512xf32> -> vector<8x512xf32>
    %616 = arith.addf %613, %615 : vector<8x512xf32>
    %617 = vector.extract_strided_slice %616 {offsets = [0, 0], sizes = [8, 128], strides = [1, 1]} : vector<8x512xf32> to vector<8x128xf32>
    %cst_395 = arith.constant 5.000000e-01 : f32
    %618 = vector.broadcast %cst_395 : f32 to vector<8x128xf32>
    %619 = arith.mulf %618, %617 : vector<8x128xf32>
    %620 = math.tanh %619 : vector<8x128xf32>
    %cst_396 = arith.constant 5.000000e-01 : f32
    %621 = vector.broadcast %cst_396 : f32 to vector<8x128xf32>
    %622 = arith.mulf %621, %620 : vector<8x128xf32>
    %cst_397 = arith.constant 5.000000e-01 : f32
    %623 = vector.broadcast %cst_397 : f32 to vector<8x128xf32>
    %624 = arith.addf %622, %623 : vector<8x128xf32>
    %625 = vector.extract_strided_slice %616 {offsets = [0, 128], sizes = [8, 128], strides = [1, 1]} : vector<8x512xf32> to vector<8x128xf32>
    %cst_398 = arith.constant 5.000000e-01 : f32
    %626 = vector.broadcast %cst_398 : f32 to vector<8x128xf32>
    %627 = arith.mulf %626, %625 : vector<8x128xf32>
    %628 = math.tanh %627 : vector<8x128xf32>
    %cst_399 = arith.constant 5.000000e-01 : f32
    %629 = vector.broadcast %cst_399 : f32 to vector<8x128xf32>
    %630 = arith.mulf %629, %628 : vector<8x128xf32>
    %cst_400 = arith.constant 5.000000e-01 : f32
    %631 = vector.broadcast %cst_400 : f32 to vector<8x128xf32>
    %632 = arith.addf %630, %631 : vector<8x128xf32>
    %633 = vector.extract_strided_slice %616 {offsets = [0, 256], sizes = [8, 128], strides = [1, 1]} : vector<8x512xf32> to vector<8x128xf32>
    %634 = math.tanh %633 : vector<8x128xf32>
    %635 = vector.extract_strided_slice %616 {offsets = [0, 384], sizes = [8, 128], strides = [1, 1]} : vector<8x512xf32> to vector<8x128xf32>
    %cst_401 = arith.constant 5.000000e-01 : f32
    %636 = vector.broadcast %cst_401 : f32 to vector<8x128xf32>
    %637 = arith.mulf %636, %635 : vector<8x128xf32>
    %638 = math.tanh %637 : vector<8x128xf32>
    %cst_402 = arith.constant 5.000000e-01 : f32
    %639 = vector.broadcast %cst_402 : f32 to vector<8x128xf32>
    %640 = arith.mulf %639, %638 : vector<8x128xf32>
    %cst_403 = arith.constant 5.000000e-01 : f32
    %641 = vector.broadcast %cst_403 : f32 to vector<8x128xf32>
    %642 = arith.addf %640, %641 : vector<8x128xf32>
    %643 = arith.mulf %632, %610 : vector<8x128xf32>
    %644 = arith.mulf %624, %634 : vector<8x128xf32>
    %645 = arith.addf %643, %644 : vector<8x128xf32>
    %646 = math.tanh %645 : vector<8x128xf32>
    %647 = arith.mulf %642, %646 : vector<8x128xf32>
    %c16_404 = arith.constant 16 : index
    %c0_405 = arith.constant 0 : index
    %648 = vector.load %arg7[%c16_404, %c0_405] : memref<64x512xf32, #tpu.memory_space<vmem>>, vector<8x512xf32>
    %c0_406 = arith.constant 0 : index
    %c0_407 = arith.constant 0 : index
    %649 = vector.load %arg3[%c0_406, %c0_407] : memref<128x512xf32, #tpu.memory_space<vmem>>, vector<128x512xf32>
    %cst_408 = arith.constant dense<0.000000e+00> : vector<8x512xf32>
    %650 = tpu.matmul %647, %649, %cst_408 {dimension_numbers = #tpu.dot_dimension_numbers<[1], [0], [0], [1], [0, 0, 1, 1], [], []>} : vector<8x128xf32>, vector<128x512xf32>, vector<8x512xf32> -> vector<8x512xf32>
    %651 = arith.addf %648, %650 : vector<8x512xf32>
    %652 = vector.extract_strided_slice %651 {offsets = [0, 0], sizes = [8, 128], strides = [1, 1]} : vector<8x512xf32> to vector<8x128xf32>
    %cst_409 = arith.constant 5.000000e-01 : f32
    %653 = vector.broadcast %cst_409 : f32 to vector<8x128xf32>
    %654 = arith.mulf %653, %652 : vector<8x128xf32>
    %655 = math.tanh %654 : vector<8x128xf32>
    %cst_410 = arith.constant 5.000000e-01 : f32
    %656 = vector.broadcast %cst_410 : f32 to vector<8x128xf32>
    %657 = arith.mulf %656, %655 : vector<8x128xf32>
    %cst_411 = arith.constant 5.000000e-01 : f32
    %658 = vector.broadcast %cst_411 : f32 to vector<8x128xf32>
    %659 = arith.addf %657, %658 : vector<8x128xf32>
    %660 = vector.extract_strided_slice %651 {offsets = [0, 128], sizes = [8, 128], strides = [1, 1]} : vector<8x512xf32> to vector<8x128xf32>
    %cst_412 = arith.constant 5.000000e-01 : f32
    %661 = vector.broadcast %cst_412 : f32 to vector<8x128xf32>
    %662 = arith.mulf %661, %660 : vector<8x128xf32>
    %663 = math.tanh %662 : vector<8x128xf32>
    %cst_413 = arith.constant 5.000000e-01 : f32
    %664 = vector.broadcast %cst_413 : f32 to vector<8x128xf32>
    %665 = arith.mulf %664, %663 : vector<8x128xf32>
    %cst_414 = arith.constant 5.000000e-01 : f32
    %666 = vector.broadcast %cst_414 : f32 to vector<8x128xf32>
    %667 = arith.addf %665, %666 : vector<8x128xf32>
    %668 = vector.extract_strided_slice %651 {offsets = [0, 256], sizes = [8, 128], strides = [1, 1]} : vector<8x512xf32> to vector<8x128xf32>
    %669 = math.tanh %668 : vector<8x128xf32>
    %670 = vector.extract_strided_slice %651 {offsets = [0, 384], sizes = [8, 128], strides = [1, 1]} : vector<8x512xf32> to vector<8x128xf32>
    %cst_415 = arith.constant 5.000000e-01 : f32
    %671 = vector.broadcast %cst_415 : f32 to vector<8x128xf32>
    %672 = arith.mulf %671, %670 : vector<8x128xf32>
    %673 = math.tanh %672 : vector<8x128xf32>
    %cst_416 = arith.constant 5.000000e-01 : f32
    %674 = vector.broadcast %cst_416 : f32 to vector<8x128xf32>
    %675 = arith.mulf %674, %673 : vector<8x128xf32>
    %cst_417 = arith.constant 5.000000e-01 : f32
    %676 = vector.broadcast %cst_417 : f32 to vector<8x128xf32>
    %677 = arith.addf %675, %676 : vector<8x128xf32>
    %678 = arith.mulf %667, %645 : vector<8x128xf32>
    %679 = arith.mulf %659, %669 : vector<8x128xf32>
    %680 = arith.addf %678, %679 : vector<8x128xf32>
    %681 = math.tanh %680 : vector<8x128xf32>
    %682 = arith.mulf %677, %681 : vector<8x128xf32>
    %c24_418 = arith.constant 24 : index
    %c0_419 = arith.constant 0 : index
    %683 = vector.load %arg7[%c24_418, %c0_419] : memref<64x512xf32, #tpu.memory_space<vmem>>, vector<8x512xf32>
    %c0_420 = arith.constant 0 : index
    %c0_421 = arith.constant 0 : index
    %684 = vector.load %arg3[%c0_420, %c0_421] : memref<128x512xf32, #tpu.memory_space<vmem>>, vector<128x512xf32>
    %cst_422 = arith.constant dense<0.000000e+00> : vector<8x512xf32>
    %685 = tpu.matmul %682, %684, %cst_422 {dimension_numbers = #tpu.dot_dimension_numbers<[1], [0], [0], [1], [0, 0, 1, 1], [], []>} : vector<8x128xf32>, vector<128x512xf32>, vector<8x512xf32> -> vector<8x512xf32>
    %686 = arith.addf %683, %685 : vector<8x512xf32>
    %687 = vector.extract_strided_slice %686 {offsets = [0, 0], sizes = [8, 128], strides = [1, 1]} : vector<8x512xf32> to vector<8x128xf32>
    %cst_423 = arith.constant 5.000000e-01 : f32
    %688 = vector.broadcast %cst_423 : f32 to vector<8x128xf32>
    %689 = arith.mulf %688, %687 : vector<8x128xf32>
    %690 = math.tanh %689 : vector<8x128xf32>
    %cst_424 = arith.constant 5.000000e-01 : f32
    %691 = vector.broadcast %cst_424 : f32 to vector<8x128xf32>
    %692 = arith.mulf %691, %690 : vector<8x128xf32>
    %cst_425 = arith.constant 5.000000e-01 : f32
    %693 = vector.broadcast %cst_425 : f32 to vector<8x128xf32>
    %694 = arith.addf %692, %693 : vector<8x128xf32>
    %695 = vector.extract_strided_slice %686 {offsets = [0, 128], sizes = [8, 128], strides = [1, 1]} : vector<8x512xf32> to vector<8x128xf32>
    %cst_426 = arith.constant 5.000000e-01 : f32
    %696 = vector.broadcast %cst_426 : f32 to vector<8x128xf32>
    %697 = arith.mulf %696, %695 : vector<8x128xf32>
    %698 = math.tanh %697 : vector<8x128xf32>
    %cst_427 = arith.constant 5.000000e-01 : f32
    %699 = vector.broadcast %cst_427 : f32 to vector<8x128xf32>
    %700 = arith.mulf %699, %698 : vector<8x128xf32>
    %cst_428 = arith.constant 5.000000e-01 : f32
    %701 = vector.broadcast %cst_428 : f32 to vector<8x128xf32>
    %702 = arith.addf %700, %701 : vector<8x128xf32>
    %703 = vector.extract_strided_slice %686 {offsets = [0, 256], sizes = [8, 128], strides = [1, 1]} : vector<8x512xf32> to vector<8x128xf32>
    %704 = math.tanh %703 : vector<8x128xf32>
    %705 = vector.extract_strided_slice %686 {offsets = [0, 384], sizes = [8, 128], strides = [1, 1]} : vector<8x512xf32> to vector<8x128xf32>
    %cst_429 = arith.constant 5.000000e-01 : f32
    %706 = vector.broadcast %cst_429 : f32 to vector<8x128xf32>
    %707 = arith.mulf %706, %705 : vector<8x128xf32>
    %708 = math.tanh %707 : vector<8x128xf32>
    %cst_430 = arith.constant 5.000000e-01 : f32
    %709 = vector.broadcast %cst_430 : f32 to vector<8x128xf32>
    %710 = arith.mulf %709, %708 : vector<8x128xf32>
    %cst_431 = arith.constant 5.000000e-01 : f32
    %711 = vector.broadcast %cst_431 : f32 to vector<8x128xf32>
    %712 = arith.addf %710, %711 : vector<8x128xf32>
    %713 = arith.mulf %702, %680 : vector<8x128xf32>
    %714 = arith.mulf %694, %704 : vector<8x128xf32>
    %715 = arith.addf %713, %714 : vector<8x128xf32>
    %716 = math.tanh %715 : vector<8x128xf32>
    %717 = arith.mulf %712, %716 : vector<8x128xf32>
    %c32_432 = arith.constant 32 : index
    %c0_433 = arith.constant 0 : index
    %718 = vector.load %arg7[%c32_432, %c0_433] : memref<64x512xf32, #tpu.memory_space<vmem>>, vector<8x512xf32>
    %c0_434 = arith.constant 0 : index
    %c0_435 = arith.constant 0 : index
    %719 = vector.load %arg3[%c0_434, %c0_435] : memref<128x512xf32, #tpu.memory_space<vmem>>, vector<128x512xf32>
    %cst_436 = arith.constant dense<0.000000e+00> : vector<8x512xf32>
    %720 = tpu.matmul %717, %719, %cst_436 {dimension_numbers = #tpu.dot_dimension_numbers<[1], [0], [0], [1], [0, 0, 1, 1], [], []>} : vector<8x128xf32>, vector<128x512xf32>, vector<8x512xf32> -> vector<8x512xf32>
    %721 = arith.addf %718, %720 : vector<8x512xf32>
    %722 = vector.extract_strided_slice %721 {offsets = [0, 0], sizes = [8, 128], strides = [1, 1]} : vector<8x512xf32> to vector<8x128xf32>
    %cst_437 = arith.constant 5.000000e-01 : f32
    %723 = vector.broadcast %cst_437 : f32 to vector<8x128xf32>
    %724 = arith.mulf %723, %722 : vector<8x128xf32>
    %725 = math.tanh %724 : vector<8x128xf32>
    %cst_438 = arith.constant 5.000000e-01 : f32
    %726 = vector.broadcast %cst_438 : f32 to vector<8x128xf32>
    %727 = arith.mulf %726, %725 : vector<8x128xf32>
    %cst_439 = arith.constant 5.000000e-01 : f32
    %728 = vector.broadcast %cst_439 : f32 to vector<8x128xf32>
    %729 = arith.addf %727, %728 : vector<8x128xf32>
    %730 = vector.extract_strided_slice %721 {offsets = [0, 128], sizes = [8, 128], strides = [1, 1]} : vector<8x512xf32> to vector<8x128xf32>
    %cst_440 = arith.constant 5.000000e-01 : f32
    %731 = vector.broadcast %cst_440 : f32 to vector<8x128xf32>
    %732 = arith.mulf %731, %730 : vector<8x128xf32>
    %733 = math.tanh %732 : vector<8x128xf32>
    %cst_441 = arith.constant 5.000000e-01 : f32
    %734 = vector.broadcast %cst_441 : f32 to vector<8x128xf32>
    %735 = arith.mulf %734, %733 : vector<8x128xf32>
    %cst_442 = arith.constant 5.000000e-01 : f32
    %736 = vector.broadcast %cst_442 : f32 to vector<8x128xf32>
    %737 = arith.addf %735, %736 : vector<8x128xf32>
    %738 = vector.extract_strided_slice %721 {offsets = [0, 256], sizes = [8, 128], strides = [1, 1]} : vector<8x512xf32> to vector<8x128xf32>
    %739 = math.tanh %738 : vector<8x128xf32>
    %740 = vector.extract_strided_slice %721 {offsets = [0, 384], sizes = [8, 128], strides = [1, 1]} : vector<8x512xf32> to vector<8x128xf32>
    %cst_443 = arith.constant 5.000000e-01 : f32
    %741 = vector.broadcast %cst_443 : f32 to vector<8x128xf32>
    %742 = arith.mulf %741, %740 : vector<8x128xf32>
    %743 = math.tanh %742 : vector<8x128xf32>
    %cst_444 = arith.constant 5.000000e-01 : f32
    %744 = vector.broadcast %cst_444 : f32 to vector<8x128xf32>
    %745 = arith.mulf %744, %743 : vector<8x128xf32>
    %cst_445 = arith.constant 5.000000e-01 : f32
    %746 = vector.broadcast %cst_445 : f32 to vector<8x128xf32>
    %747 = arith.addf %745, %746 : vector<8x128xf32>
    %748 = arith.mulf %737, %715 : vector<8x128xf32>
    %749 = arith.mulf %729, %739 : vector<8x128xf32>
    %750 = arith.addf %748, %749 : vector<8x128xf32>
    %751 = math.tanh %750 : vector<8x128xf32>
    %752 = arith.mulf %747, %751 : vector<8x128xf32>
    %c40_446 = arith.constant 40 : index
    %c0_447 = arith.constant 0 : index
    %753 = vector.load %arg7[%c40_446, %c0_447] : memref<64x512xf32, #tpu.memory_space<vmem>>, vector<8x512xf32>
    %c0_448 = arith.constant 0 : index
    %c0_449 = arith.constant 0 : index
    %754 = vector.load %arg3[%c0_448, %c0_449] : memref<128x512xf32, #tpu.memory_space<vmem>>, vector<128x512xf32>
    %cst_450 = arith.constant dense<0.000000e+00> : vector<8x512xf32>
    %755 = tpu.matmul %752, %754, %cst_450 {dimension_numbers = #tpu.dot_dimension_numbers<[1], [0], [0], [1], [0, 0, 1, 1], [], []>} : vector<8x128xf32>, vector<128x512xf32>, vector<8x512xf32> -> vector<8x512xf32>
    %756 = arith.addf %753, %755 : vector<8x512xf32>
    %757 = vector.extract_strided_slice %756 {offsets = [0, 0], sizes = [8, 128], strides = [1, 1]} : vector<8x512xf32> to vector<8x128xf32>
    %cst_451 = arith.constant 5.000000e-01 : f32
    %758 = vector.broadcast %cst_451 : f32 to vector<8x128xf32>
    %759 = arith.mulf %758, %757 : vector<8x128xf32>
    %760 = math.tanh %759 : vector<8x128xf32>
    %cst_452 = arith.constant 5.000000e-01 : f32
    %761 = vector.broadcast %cst_452 : f32 to vector<8x128xf32>
    %762 = arith.mulf %761, %760 : vector<8x128xf32>
    %cst_453 = arith.constant 5.000000e-01 : f32
    %763 = vector.broadcast %cst_453 : f32 to vector<8x128xf32>
    %764 = arith.addf %762, %763 : vector<8x128xf32>
    %765 = vector.extract_strided_slice %756 {offsets = [0, 128], sizes = [8, 128], strides = [1, 1]} : vector<8x512xf32> to vector<8x128xf32>
    %cst_454 = arith.constant 5.000000e-01 : f32
    %766 = vector.broadcast %cst_454 : f32 to vector<8x128xf32>
    %767 = arith.mulf %766, %765 : vector<8x128xf32>
    %768 = math.tanh %767 : vector<8x128xf32>
    %cst_455 = arith.constant 5.000000e-01 : f32
    %769 = vector.broadcast %cst_455 : f32 to vector<8x128xf32>
    %770 = arith.mulf %769, %768 : vector<8x128xf32>
    %cst_456 = arith.constant 5.000000e-01 : f32
    %771 = vector.broadcast %cst_456 : f32 to vector<8x128xf32>
    %772 = arith.addf %770, %771 : vector<8x128xf32>
    %773 = vector.extract_strided_slice %756 {offsets = [0, 256], sizes = [8, 128], strides = [1, 1]} : vector<8x512xf32> to vector<8x128xf32>
    %774 = math.tanh %773 : vector<8x128xf32>
    %775 = vector.extract_strided_slice %756 {offsets = [0, 384], sizes = [8, 128], strides = [1, 1]} : vector<8x512xf32> to vector<8x128xf32>
    %cst_457 = arith.constant 5.000000e-01 : f32
    %776 = vector.broadcast %cst_457 : f32 to vector<8x128xf32>
    %777 = arith.mulf %776, %775 : vector<8x128xf32>
    %778 = math.tanh %777 : vector<8x128xf32>
    %cst_458 = arith.constant 5.000000e-01 : f32
    %779 = vector.broadcast %cst_458 : f32 to vector<8x128xf32>
    %780 = arith.mulf %779, %778 : vector<8x128xf32>
    %cst_459 = arith.constant 5.000000e-01 : f32
    %781 = vector.broadcast %cst_459 : f32 to vector<8x128xf32>
    %782 = arith.addf %780, %781 : vector<8x128xf32>
    %783 = arith.mulf %772, %750 : vector<8x128xf32>
    %784 = arith.mulf %764, %774 : vector<8x128xf32>
    %785 = arith.addf %783, %784 : vector<8x128xf32>
    %786 = math.tanh %785 : vector<8x128xf32>
    %787 = arith.mulf %782, %786 : vector<8x128xf32>
    %c48_460 = arith.constant 48 : index
    %c0_461 = arith.constant 0 : index
    %788 = vector.load %arg7[%c48_460, %c0_461] : memref<64x512xf32, #tpu.memory_space<vmem>>, vector<8x512xf32>
    %c0_462 = arith.constant 0 : index
    %c0_463 = arith.constant 0 : index
    %789 = vector.load %arg3[%c0_462, %c0_463] : memref<128x512xf32, #tpu.memory_space<vmem>>, vector<128x512xf32>
    %cst_464 = arith.constant dense<0.000000e+00> : vector<8x512xf32>
    %790 = tpu.matmul %787, %789, %cst_464 {dimension_numbers = #tpu.dot_dimension_numbers<[1], [0], [0], [1], [0, 0, 1, 1], [], []>} : vector<8x128xf32>, vector<128x512xf32>, vector<8x512xf32> -> vector<8x512xf32>
    %791 = arith.addf %788, %790 : vector<8x512xf32>
    %792 = vector.extract_strided_slice %791 {offsets = [0, 0], sizes = [8, 128], strides = [1, 1]} : vector<8x512xf32> to vector<8x128xf32>
    %cst_465 = arith.constant 5.000000e-01 : f32
    %793 = vector.broadcast %cst_465 : f32 to vector<8x128xf32>
    %794 = arith.mulf %793, %792 : vector<8x128xf32>
    %795 = math.tanh %794 : vector<8x128xf32>
    %cst_466 = arith.constant 5.000000e-01 : f32
    %796 = vector.broadcast %cst_466 : f32 to vector<8x128xf32>
    %797 = arith.mulf %796, %795 : vector<8x128xf32>
    %cst_467 = arith.constant 5.000000e-01 : f32
    %798 = vector.broadcast %cst_467 : f32 to vector<8x128xf32>
    %799 = arith.addf %797, %798 : vector<8x128xf32>
    %800 = vector.extract_strided_slice %791 {offsets = [0, 128], sizes = [8, 128], strides = [1, 1]} : vector<8x512xf32> to vector<8x128xf32>
    %cst_468 = arith.constant 5.000000e-01 : f32
    %801 = vector.broadcast %cst_468 : f32 to vector<8x128xf32>
    %802 = arith.mulf %801, %800 : vector<8x128xf32>
    %803 = math.tanh %802 : vector<8x128xf32>
    %cst_469 = arith.constant 5.000000e-01 : f32
    %804 = vector.broadcast %cst_469 : f32 to vector<8x128xf32>
    %805 = arith.mulf %804, %803 : vector<8x128xf32>
    %cst_470 = arith.constant 5.000000e-01 : f32
    %806 = vector.broadcast %cst_470 : f32 to vector<8x128xf32>
    %807 = arith.addf %805, %806 : vector<8x128xf32>
    %808 = vector.extract_strided_slice %791 {offsets = [0, 256], sizes = [8, 128], strides = [1, 1]} : vector<8x512xf32> to vector<8x128xf32>
    %809 = math.tanh %808 : vector<8x128xf32>
    %810 = vector.extract_strided_slice %791 {offsets = [0, 384], sizes = [8, 128], strides = [1, 1]} : vector<8x512xf32> to vector<8x128xf32>
    %cst_471 = arith.constant 5.000000e-01 : f32
    %811 = vector.broadcast %cst_471 : f32 to vector<8x128xf32>
    %812 = arith.mulf %811, %810 : vector<8x128xf32>
    %813 = math.tanh %812 : vector<8x128xf32>
    %cst_472 = arith.constant 5.000000e-01 : f32
    %814 = vector.broadcast %cst_472 : f32 to vector<8x128xf32>
    %815 = arith.mulf %814, %813 : vector<8x128xf32>
    %cst_473 = arith.constant 5.000000e-01 : f32
    %816 = vector.broadcast %cst_473 : f32 to vector<8x128xf32>
    %817 = arith.addf %815, %816 : vector<8x128xf32>
    %818 = arith.mulf %807, %785 : vector<8x128xf32>
    %819 = arith.mulf %799, %809 : vector<8x128xf32>
    %820 = arith.addf %818, %819 : vector<8x128xf32>
    %821 = math.tanh %820 : vector<8x128xf32>
    %822 = arith.mulf %817, %821 : vector<8x128xf32>
    %c56_474 = arith.constant 56 : index
    %c0_475 = arith.constant 0 : index
    %823 = vector.load %arg7[%c56_474, %c0_475] : memref<64x512xf32, #tpu.memory_space<vmem>>, vector<8x512xf32>
    %c0_476 = arith.constant 0 : index
    %c0_477 = arith.constant 0 : index
    %824 = vector.load %arg3[%c0_476, %c0_477] : memref<128x512xf32, #tpu.memory_space<vmem>>, vector<128x512xf32>
    %cst_478 = arith.constant dense<0.000000e+00> : vector<8x512xf32>
    %825 = tpu.matmul %822, %824, %cst_478 {dimension_numbers = #tpu.dot_dimension_numbers<[1], [0], [0], [1], [0, 0, 1, 1], [], []>} : vector<8x128xf32>, vector<128x512xf32>, vector<8x512xf32> -> vector<8x512xf32>
    %826 = arith.addf %823, %825 : vector<8x512xf32>
    %827 = vector.extract_strided_slice %826 {offsets = [0, 0], sizes = [8, 128], strides = [1, 1]} : vector<8x512xf32> to vector<8x128xf32>
    %cst_479 = arith.constant 5.000000e-01 : f32
    %828 = vector.broadcast %cst_479 : f32 to vector<8x128xf32>
    %829 = arith.mulf %828, %827 : vector<8x128xf32>
    %830 = math.tanh %829 : vector<8x128xf32>
    %cst_480 = arith.constant 5.000000e-01 : f32
    %831 = vector.broadcast %cst_480 : f32 to vector<8x128xf32>
    %832 = arith.mulf %831, %830 : vector<8x128xf32>
    %cst_481 = arith.constant 5.000000e-01 : f32
    %833 = vector.broadcast %cst_481 : f32 to vector<8x128xf32>
    %834 = arith.addf %832, %833 : vector<8x128xf32>
    %835 = vector.extract_strided_slice %826 {offsets = [0, 128], sizes = [8, 128], strides = [1, 1]} : vector<8x512xf32> to vector<8x128xf32>
    %cst_482 = arith.constant 5.000000e-01 : f32
    %836 = vector.broadcast %cst_482 : f32 to vector<8x128xf32>
    %837 = arith.mulf %836, %835 : vector<8x128xf32>
    %838 = math.tanh %837 : vector<8x128xf32>
    %cst_483 = arith.constant 5.000000e-01 : f32
    %839 = vector.broadcast %cst_483 : f32 to vector<8x128xf32>
    %840 = arith.mulf %839, %838 : vector<8x128xf32>
    %cst_484 = arith.constant 5.000000e-01 : f32
    %841 = vector.broadcast %cst_484 : f32 to vector<8x128xf32>
    %842 = arith.addf %840, %841 : vector<8x128xf32>
    %843 = vector.extract_strided_slice %826 {offsets = [0, 256], sizes = [8, 128], strides = [1, 1]} : vector<8x512xf32> to vector<8x128xf32>
    %844 = math.tanh %843 : vector<8x128xf32>
    %845 = vector.extract_strided_slice %826 {offsets = [0, 384], sizes = [8, 128], strides = [1, 1]} : vector<8x512xf32> to vector<8x128xf32>
    %cst_485 = arith.constant 5.000000e-01 : f32
    %846 = vector.broadcast %cst_485 : f32 to vector<8x128xf32>
    %847 = arith.mulf %846, %845 : vector<8x128xf32>
    %848 = math.tanh %847 : vector<8x128xf32>
    %cst_486 = arith.constant 5.000000e-01 : f32
    %849 = vector.broadcast %cst_486 : f32 to vector<8x128xf32>
    %850 = arith.mulf %849, %848 : vector<8x128xf32>
    %cst_487 = arith.constant 5.000000e-01 : f32
    %851 = vector.broadcast %cst_487 : f32 to vector<8x128xf32>
    %852 = arith.addf %850, %851 : vector<8x128xf32>
    %853 = arith.mulf %842, %820 : vector<8x128xf32>
    %854 = arith.mulf %834, %844 : vector<8x128xf32>
    %855 = arith.addf %853, %854 : vector<8x128xf32>
    %856 = math.tanh %855 : vector<8x128xf32>
    %857 = arith.mulf %852, %856 : vector<8x128xf32>
    %c0_488 = arith.constant 0 : index
    %c0_489 = arith.constant 0 : index
    %858 = vector.load %arg4[%c0_488, %c0_489] : memref<128x128xf32, #tpu.memory_space<vmem>>, vector<128x128xf32>
    %cst_490 = arith.constant dense<0.000000e+00> : vector<8x128xf32>
    %859 = tpu.matmul %857, %858, %cst_490 {dimension_numbers = #tpu.dot_dimension_numbers<[1], [0], [0], [1], [0, 0, 1, 1], [], []>} : vector<8x128xf32>, vector<128x128xf32>, vector<8x128xf32> -> vector<8x128xf32>
    %c0_491 = arith.constant 0 : index
    %c0_492 = arith.constant 0 : index
    %860 = vector.load %arg5[%c0_491, %c0_492] : memref<1x128xf32, #tpu.memory_space<vmem>>, vector<1x128xf32>
    %861 = vector.broadcast %860 : vector<1x128xf32> to vector<8x128xf32>
    %862 = arith.addf %859, %861 : vector<8x128xf32>
    %c0_493 = arith.constant 0 : index
    %c0_494 = arith.constant 0 : index
    %863 = vector.load %arg6[%c0_493, %c0_494] : memref<8x128xf32, #tpu.memory_space<vmem>>, vector<8x128xf32>
    tpu.vector_store %arg6[%c0_493, %c0_494], %862 {strides = array<i32>} : memref<8x128xf32, #tpu.memory_space<vmem>>, vector<8x128xf32>,
    return
  }
  func.func @transform_0(%arg0: i32, %arg1: memref<64xi32, #tpu.memory_space<smem>>) -> (i32, i32) {
    %c0_i32 = arith.constant 0 : i32
    %c0_i32_0 = arith.constant 0 : i32
    %c0_i32_1 = arith.constant 0 : i32
    return %c0_i32, %c0_i32_0 : i32, i32
  }
  func.func @transform_1(%arg0: i32, %arg1: memref<64xi32, #tpu.memory_space<smem>>) -> (i32, i32) {
    %c0_i32 = arith.constant 0 : i32
    %c0_i32_0 = arith.constant 0 : i32
    %c0_i32_1 = arith.constant 0 : i32
    return %c0_i32, %c0_i32_0 : i32, i32
  }
  func.func @transform_2(%arg0: i32, %arg1: memref<64xi32, #tpu.memory_space<smem>>) -> (i32, i32) {
    %c0_i32 = arith.constant 0 : i32
    %c0_i32_0 = arith.constant 0 : i32
    %c0_i32_1 = arith.constant 0 : i32
    return %c0_i32, %c0_i32_0 : i32, i32
  }
  func.func @transform_3(%arg0: i32, %arg1: memref<64xi32, #tpu.memory_space<smem>>) -> (i32, i32) {
    %c0_i32 = arith.constant 0 : i32
    %c0_i32_0 = arith.constant 0 : i32
    %c0_i32_1 = arith.constant 0 : i32
    return %c0_i32, %c0_i32_0 : i32, i32
  }
  func.func @transform_4(%arg0: i32, %arg1: memref<64xi32, #tpu.memory_space<smem>>) -> (i32, i32) {
    %c0_i32 = arith.constant 0 : i32
    %c0_i32_0 = arith.constant 0 : i32
    return %arg0, %c0_i32 : i32, i32
  }
}

</mosaic_0001>

<llo_original>
// kernel: tpu_custom_call.1
$region0: #{tpu_custom_call.1}
  #allocation0 [shape = 'u32[]', space=smem, size = 0x4, offset = 0x4, fixed_abs, tag = 'smem constant byte address 0x4 - core index']
  #allocation1 [shape = 'u32[144,128]{1,0:T(1,128)}', space=vmem, size = 0x12000, scoped, tag = 'internal scratch']
  #allocation2 [shape = 'f32[64,512]{1,0:T(8,128)}', space=vmem, size = 0x20000, scoped, tag = 'scratch operand']
  #allocation3 [shape = 's32[1]{0}', space=sflag, size = 0x4, scoped, tag = 'scoped memory for tpu_custom_call.1']
  #allocation4 [shape = 'u8[512]{0}', space=smem, size = 0x200, scoped, tag = 'prefetched SMEM operand 0']
  %s0 = inlined_call_operand.hbm [shape: s32[64], index: 0, kind: input, shape index: {}]
  %s1 = inlined_call_operand.hbm [shape: f32[32,512], index: 1, kind: input, shape index: {}]
  %s2 = inlined_call_operand.hbm [shape: f32[128,512], index: 2, kind: input, shape index: {}]
  %s3 = inlined_call_operand.hbm [shape: f32[128,128], index: 3, kind: input, shape index: {}]
  %s4 = inlined_call_operand.vmem [shape: f32[1,128], index: 4, kind: input, shape index: {}]
  %s5 = inlined_call_operand.hbm [shape: f32[8,128], index: 5, kind: output, shape index: {}]
  %s6 = sld [smem:[#allocation0]]
  $region38: #{tpu_custom_call.1} parent=0
    _
  %s8 = ssub.s32 1, %s6
  %s9 = scalar_select 0, %s8, %s6
  %11 = dma.hbm_to_smem %s0, 16, [#allocation4], [#allocation3]
  %12 = dma.done [#allocation3], 16
  %13 = sfence
  $region1: #{tpu_custom_call.1} parent=0
    #allocation5 [shape = 'u8[65536]{0}', space=vmem, size = 0x10000, scoped, tag = 'input window, operand 1, single buffered']
    #allocation6 [shape = 's32[1]{0}', space=sflag, size = 0x4, scoped, tag = 'scoped memory for tpu_custom_call.1']
    #allocation7 [shape = 's32[1]{0}', space=sflag, size = 0x4, scoped, tag = 'scoped memory for tpu_custom_call.1']
    #allocation8 [shape = 'u8[262144]{0}', space=vmem, size = 0x40000, scoped, tag = 'input window, operand 2, single buffered']
    #allocation9 [shape = 's32[1]{0}', space=sflag, size = 0x4, scoped, tag = 'scoped memory for tpu_custom_call.1']
    #allocation10 [shape = 'u8[65536]{0}', space=vmem, size = 0x10000, scoped, tag = 'input window, operand 3, single buffered']
    #allocation11 [shape = 'u8[4096]{0}', space=vmem, size = 0x1000, scoped, tag = 'output window, operand 0, single buffered']
    %14 = vsyncpa [#allocation6], 0
    %15 = vsyncpa [#allocation9], 0
    %16 = vsyncpa [#allocation7], 0
    // Predicated region
    $region2: #{tpu_custom_call.1} parent=1 // pred_check
      _
    $region3: #{tpu_custom_call.1} parent=1 // pred_check_branch
      %18 = sbr.rel (0) target = $region5
    $region4: #{tpu_custom_call.1} parent=1 // pred_region
      %s20 = ssub.s32 2048, 2048
      %21 = vsyncadd [#allocation6], %s20
      %s22 = sshll.u32 [#allocation5], 4
      %s23 = int_to_ptr.vmem [resolvable:$true] %s22
      %28 = dma.hbm_to_vmem [thread:$0]  %s1, 2048, %s23, [#allocation6], 512, 512, 32
    $region5: #{tpu_custom_call.1} parent=1 // pred_fallthru
      _
    // Predicated region
    $region6: #{tpu_custom_call.1} parent=1 // pred_check
      _
    $region7: #{tpu_custom_call.1} parent=1 // pred_check_branch
      %30 = sbr.rel (0) target = $region9
    $region8: #{tpu_custom_call.1} parent=1 // pred_region
      %s32 = ssub.s32 8192, 8192
      %33 = vsyncadd [#allocation9], %s32
      %s34 = sshll.u32 [#allocation8], 4
      %s35 = int_to_ptr.vmem [resolvable:$true] %s34
      %40 = dma.hbm_to_vmem [thread:$0]  %s2, 8192, %s35, [#allocation9], 512, 512, 32
    $region9: #{tpu_custom_call.1} parent=1 // pred_fallthru
      _
    // Predicated region
    $region10: #{tpu_custom_call.1} parent=1 // pred_check
      _
    $region11: #{tpu_custom_call.1} parent=1 // pred_check_branch
      %42 = sbr.rel (0) target = $region13
    $region12: #{tpu_custom_call.1} parent=1 // pred_region
      %s44 = ssub.s32 2048, 2048
      %45 = vsyncadd [#allocation9], %s44
      %s46 = sshll.u32 [#allocation10], 4
      %s47 = int_to_ptr.vmem [resolvable:$true] %s46
      %52 = dma.hbm_to_vmem [thread:$0]  %s3, 2048, %s47, [#allocation9], 128, 128, 8
    $region13: #{tpu_custom_call.1} parent=1 // pred_fallthru
      _
    // Predicated region
    $region14: #{tpu_custom_call.1} parent=1 // pred_check
      _
    $region15: #{tpu_custom_call.1} parent=1 // pred_check_branch
      %54 = sbr.rel (0) target = $region17
    $region16: #{tpu_custom_call.1} parent=1 // pred_region
      _
    $region17: #{tpu_custom_call.1} parent=1 // pred_fallthru
      _
    // Predicated region
    $region18: #{tpu_custom_call.1} parent=1 // pred_check
      _
    $region19: #{tpu_custom_call.1} parent=1 // pred_check_branch
      %56 = sbr.rel (0) target = $region21
    $region20: #{tpu_custom_call.1} parent=1 // pred_region
      %57 = dma.done [#allocation6], 2048
    $region21: #{tpu_custom_call.1} parent=1 // pred_fallthru
      _
    // Predicated region
    $region22: #{tpu_custom_call.1} parent=1 // pred_check
      _
    $region23: #{tpu_custom_call.1} parent=1 // pred_check_branch
      %59 = sbr.rel (0) target = $region25
    $region24: #{tpu_custom_call.1} parent=1 // pred_region
      %60 = dma.done [#allocation9], 8192
    $region25: #{tpu_custom_call.1} parent=1 // pred_fallthru
      _
    // Predicated region
    $region26: #{tpu_custom_call.1} parent=1 // pred_check
      _
    $region27: #{tpu_custom_call.1} parent=1 // pred_check_branch
      %62 = sbr.rel (0) target = $region29
    $region28: #{tpu_custom_call.1} parent=1 // pred_region
      %63 = dma.done [#allocation9], 2048
    $region29: #{tpu_custom_call.1} parent=1 // pred_fallthru
      _
    %s64 = smul.u32 0, 64
    %s65 = sld [smem:[#allocation4 + %s64]]
    %s66 = sshra.s32 %s65, 3
    %s67 = sand.u32 %s65, 7
    %s68 = sshra.s32 %s65, 3
    %s69 = sand.u32 %s65, 7
    %s70 = smul.u32 %s66, 4
    %s71 = smul.u32 %s70, 8
    %s72 = sadd.s32 %s71, %s69
    %s73 = scalar_lea.vmem [#allocation5], %s72
    %v74 = vld [vmem:[%s73] ss:$8 sm:$0xf]
    %v75 = vlaneseq
    %vm76 = vcmp.ge.s32.totalorder %v75, 0
    %vm77 = vcmp.lt.s32.totalorder %v75, 512
    %vm78 = vmand %vm76, %vm77
    %79 = vst.msk [vmem:[#allocation2] ss:$8 sm:$0xf] %vm78, %v74
    %80 = vst.msk [vmem:[#allocation2] ss:$8 sm:$0x0] %vm78, %v74
    %s81 = smul.u32 0, 8
    %s82 = sadd.s32 %s81, 1
    %s83 = smul.u32 %s82, 8
    %s84 = sld [smem:[#allocation4 + %s83]]
    %s85 = sshra.s32 %s84, 3
    %s86 = sand.u32 %s84, 7
    %s87 = sshra.s32 %s84, 3
    %s88 = sand.u32 %s84, 7
    %s89 = smul.u32 %s85, 4
    %s90 = smul.u32 %s89, 8
    %s91 = sadd.s32 %s90, %s88
    %s92 = scalar_lea.vmem [#allocation5], %s91
    %v93 = vld [vmem:[%s92] ss:$8 sm:$0xf]
    %s94 = scalar_lea.vmem [#allocation2], 1
    %95 = vst.msk [vmem:[%s94] ss:$8 sm:$0xf] %vm78, %v93
    %96 = vst.msk [vmem:[%s94] ss:$8 sm:$0x0] %vm78, %v93
    %s97 = sadd.s32 %s81, 2
    %s98 = smul.u32 %s97, 8
    %s99 = sld [smem:[#allocation4 + %s98]]
    %s100 = sshra.s32 %s99, 3
    %s101 = sand.u32 %s99, 7
    %s102 = sshra.s32 %s99, 3
    %s103 = sand.u32 %s99, 7
    %s104 = smul.u32 %s100, 4
    %s105 = smul.u32 %s104, 8
    %s106 = sadd.s32 %s105, %s103
    %s107 = scalar_lea.vmem [#allocation5], %s106
    %v108 = vld [vmem:[%s107] ss:$8 sm:$0xf]
    %s109 = scalar_lea.vmem [#allocation2], 2
    %110 = vst.msk [vmem:[%s109] ss:$8 sm:$0xf] %vm78, %v108
    %111 = vst.msk [vmem:[%s109] ss:$8 sm:$0x0] %vm78, %v108
    %s112 = sadd.s32 %s81, 3
    %s113 = smul.u32 %s112, 8
    %s114 = sld [smem:[#allocation4 + %s113]]
    %s115 = sshra.s32 %s114, 3
    %s116 = sand.u32 %s114, 7
    %s117 = sshra.s32 %s114, 3
    %s118 = sand.u32 %s114, 7
    %s119 = smul.u32 %s115, 4
    %s120 = smul.u32 %s119, 8
    %s121 = sadd.s32 %s120, %s118
    %s122 = scalar_lea.vmem [#allocation5], %s121
    %v123 = vld [vmem:[%s122] ss:$8 sm:$0xf]
    %s124 = scalar_lea.vmem [#allocation2], 3
    %125 = vst.msk [vmem:[%s124] ss:$8 sm:$0xf] %vm78, %v123
    %126 = vst.msk [vmem:[%s124] ss:$8 sm:$0x0] %vm78, %v123
    %s127 = sadd.s32 %s81, 4
    %s128 = smul.u32 %s127, 8
    %s129 = sld [smem:[#allocation4 + %s128]]
    %s130 = sshra.s32 %s129, 3
    %s131 = sand.u32 %s129, 7
    %s132 = sshra.s32 %s129, 3
    %s133 = sand.u32 %s129, 7
    %s134 = smul.u32 %s130, 4
    %s135 = smul.u32 %s134, 8
    %s136 = sadd.s32 %s135, %s133
    %s137 = scalar_lea.vmem [#allocation5], %s136
    %v138 = vld [vmem:[%s137] ss:$8 sm:$0xf]
    %s139 = scalar_lea.vmem [#allocation2], 4
    %140 = vst.msk [vmem:[%s139] ss:$8 sm:$0xf] %vm78, %v138
    %141 = vst.msk [vmem:[%s139] ss:$8 sm:$0x0] %vm78, %v138
    %s142 = sadd.s32 %s81, 5
    %s143 = smul.u32 %s142, 8
    %s144 = sld [smem:[#allocation4 + %s143]]
    %s145 = sshra.s32 %s144, 3
    %s146 = sand.u32 %s144, 7
    %s147 = sshra.s32 %s144, 3
    %s148 = sand.u32 %s144, 7
    %s149 = smul.u32 %s145, 4
    %s150 = smul.u32 %s149, 8
    %s151 = sadd.s32 %s150, %s148
    %s152 = scalar_lea.vmem [#allocation5], %s151
    %v153 = vld [vmem:[%s152] ss:$8 sm:$0xf]
    %s154 = scalar_lea.vmem [#allocation2], 5
    %155 = vst.msk [vmem:[%s154] ss:$8 sm:$0xf] %vm78, %v153
    %156 = vst.msk [vmem:[%s154] ss:$8 sm:$0x0] %vm78, %v153
    %s157 = sadd.s32 %s81, 6
    %s158 = smul.u32 %s157, 8
    %s159 = sld [smem:[#allocation4 + %s158]]
    %s160 = sshra.s32 %s159, 3
    %s161 = sand.u32 %s159, 7
    %s162 = sshra.s32 %s159, 3
    %s163 = sand.u32 %s159, 7
    %s164 = smul.u32 %s160, 4
    %s165 = smul.u32 %s164, 8
    %s166 = sadd.s32 %s165, %s163
    %s167 = scalar_lea.vmem [#allocation5], %s166
    %v168 = vld [vmem:[%s167] ss:$8 sm:$0xf]
    %s169 = scalar_lea.vmem [#allocation2], 6
    %170 = vst.msk [vmem:[%s169] ss:$8 sm:$0xf] %vm78, %v168
    %171 = vst.msk [vmem:[%s169] ss:$8 sm:$0x0] %vm78, %v168
    %s172 = sadd.s32 %s81, 7
    %s173 = smul.u32 %s172, 8
    %s174 = sld [smem:[#allocation4 + %s173]]
    %s175 = sshra.s32 %s174, 3
    %s176 = sand.u32 %s174, 7
    %s177 = sshra.s32 %s174, 3
    %s178 = sand.u32 %s174, 7
    %s179 = smul.u32 %s175, 4
    %s180 = smul.u32 %s179, 8
    %s181 = sadd.s32 %s180, %s178
    %s182 = scalar_lea.vmem [#allocation5], %s181
    %v183 = vld [vmem:[%s182] ss:$8 sm:$0xf]
    %s184 = scalar_lea.vmem [#allocation2], 7
    %185 = vst.msk [vmem:[%s184] ss:$8 sm:$0xf] %vm78, %v183
    %186 = vst.msk [vmem:[%s184] ss:$8 sm:$0x0] %vm78, %v183
    %s187 = sadd.s32 %s64, 1
    %s188 = sld [smem:[#allocation4 + %s187]]
    %s189 = sshra.s32 %s188, 3
    %s190 = sand.u32 %s188, 7
    %s191 = sshra.s32 %s188, 3
    %s192 = sand.u32 %s188, 7
    %s193 = smul.u32 %s189, 4
    %s194 = smul.u32 %s193, 8
    %s195 = sadd.s32 %s194, %s192
    %s196 = scalar_lea.vmem [#allocation5], %s195
    %v197 = vld [vmem:[%s196] ss:$8 sm:$0xf]
    %s198 = scalar_lea.vmem [#allocation2], 32
    %199 = vst.msk [vmem:[%s198] ss:$8 sm:$0xf] %vm78, %v197
    %200 = vst.msk [vmem:[%s198] ss:$8 sm:$0x0] %vm78, %v197
    %s201 = sadd.s32 %s83, 1
    %s202 = sld [smem:[#allocation4 + %s201]]
    %s203 = sshra.s32 %s202, 3
    %s204 = sand.u32 %s202, 7
    %s205 = sshra.s32 %s202, 3
    %s206 = sand.u32 %s202, 7
    %s207 = smul.u32 %s203, 4
    %s208 = smul.u32 %s207, 8
    %s209 = sadd.s32 %s208, %s206
    %s210 = scalar_lea.vmem [#allocation5], %s209
    %v211 = vld [vmem:[%s210] ss:$8 sm:$0xf]
    %s212 = scalar_lea.vmem [#allocation2], 33
    %213 = vst.msk [vmem:[%s212] ss:$8 sm:$0xf] %vm78, %v211
    %214 = vst.msk [vmem:[%s212] ss:$8 sm:$0x0] %vm78, %v211
    %s215 = sadd.s32 %s98, 1
    %s216 = sld [smem:[#allocation4 + %s215]]
    %s217 = sshra.s32 %s216, 3
    %s218 = sand.u32 %s216, 7
    %s219 = sshra.s32 %s216, 3
    %s220 = sand.u32 %s216, 7
    %s221 = smul.u32 %s217, 4
    %s222 = smul.u32 %s221, 8
    %s223 = sadd.s32 %s222, %s220
    %s224 = scalar_lea.vmem [#allocation5], %s223
    %v225 = vld [vmem:[%s224] ss:$8 sm:$0xf]
    %s226 = scalar_lea.vmem [#allocation2], 34
    %227 = vst.msk [vmem:[%s226] ss:$8 sm:$0xf] %vm78, %v225
    %228 = vst.msk [vmem:[%s226] ss:$8 sm:$0x0] %vm78, %v225
    %s229 = sadd.s32 %s113, 1
    %s230 = sld [smem:[#allocation4 + %s229]]
    %s231 = sshra.s32 %s230, 3
    %s232 = sand.u32 %s230, 7
    %s233 = sshra.s32 %s230, 3
    %s234 = sand.u32 %s230, 7
    %s235 = smul.u32 %s231, 4
    %s236 = smul.u32 %s235, 8
    %s237 = sadd.s32 %s236, %s234
    %s238 = scalar_lea.vmem [#allocation5], %s237
    %v239 = vld [vmem:[%s238] ss:$8 sm:$0xf]
    %s240 = scalar_lea.vmem [#allocation2], 35
    %241 = vst.msk [vmem:[%s240] ss:$8 sm:$0xf] %vm78, %v239
    %242 = vst.msk [vmem:[%s240] ss:$8 sm:$0x0] %vm78, %v239
    %s243 = sadd.s32 %s128, 1
    %s244 = sld [smem:[#allocation4 + %s243]]
    %s245 = sshra.s32 %s244, 3
    %s246 = sand.u32 %s244, 7
    %s247 = sshra.s32 %s244, 3
    %s248 = sand.u32 %s244, 7
    %s249 = smul.u32 %s245, 4
    %s250 = smul.u32 %s249, 8
    %s251 = sadd.s32 %s250, %s248
    %s252 = scalar_lea.vmem [#allocation5], %s251
    %v253 = vld [vmem:[%s252] ss:$8 sm:$0xf]
    %s254 = scalar_lea.vmem [#allocation2], 36
    %255 = vst.msk [vmem:[%s254] ss:$8 sm:$0xf] %vm78, %v253
    %256 = vst.msk [vmem:[%s254] ss:$8 sm:$0x0] %vm78, %v253
    %s257 = sadd.s32 %s143, 1
    %s258 = sld [smem:[#allocation4 + %s257]]
    %s259 = sshra.s32 %s258, 3
    %s260 = sand.u32 %s258, 7
    %s261 = sshra.s32 %s258, 3
    %s262 = sand.u32 %s258, 7
    %s263 = smul.u32 %s259, 4
    %s264 = smul.u32 %s263, 8
    %s265 = sadd.s32 %s264, %s262
    %s266 = scalar_lea.vmem [#allocation5], %s265
    %v267 = vld [vmem:[%s266] ss:$8 sm:$0xf]
    %s268 = scalar_lea.vmem [#allocation2], 37
    %269 = vst.msk [vmem:[%s268] ss:$8 sm:$0xf] %vm78, %v267
    %270 = vst.msk [vmem:[%s268] ss:$8 sm:$0x0] %vm78, %v267
    %s271 = sadd.s32 %s158, 1
    %s272 = sld [smem:[#allocation4 + %s271]]
    %s273 = sshra.s32 %s272, 3
    %s274 = sand.u32 %s272, 7
    %s275 = sshra.s32 %s272, 3
    %s276 = sand.u32 %s272, 7
    %s277 = smul.u32 %s273, 4
    %s278 = smul.u32 %s277, 8
    %s279 = sadd.s32 %s278, %s276
    %s280 = scalar_lea.vmem [#allocation5], %s279
    %v281 = vld [vmem:[%s280] ss:$8 sm:$0xf]
    %s282 = scalar_lea.vmem [#allocation2], 38
    %283 = vst.msk [vmem:[%s282] ss:$8 sm:$0xf] %vm78, %v281
    %284 = vst.msk [vmem:[%s282] ss:$8 sm:$0x0] %vm78, %v281
    %s285 = sadd.s32 %s173, 1
    %s286 = sld [smem:[#allocation4 + %s285]]
    %s287 = sshra.s32 %s286, 3
    %s288 = sand.u32 %s286, 7
    %s289 = sshra.s32 %s286, 3
    %s290 = sand.u32 %s286, 7
    %s291 = smul.u32 %s287, 4
    %s292 = smul.u32 %s291, 8
    %s293 = sadd.s32 %s292, %s290
    %s294 = scalar_lea.vmem [#allocation5], %s293
    %v295 = vld [vmem:[%s294] ss:$8 sm:$0xf]
    %s296 = scalar_lea.vmem [#allocation2], 39
    %297 = vst.msk [vmem:[%s296] ss:$8 sm:$0xf] %vm78, %v295
    %298 = vst.msk [vmem:[%s296] ss:$8 sm:$0x0] %vm78, %v295
    %s299 = sadd.s32 %s64, 2
    %s300 = sld [smem:[#allocation4 + %s299]]
    %s301 = sshra.s32 %s300, 3
    %s302 = sand.u32 %s300, 7
    %s303 = sshra.s32 %s300, 3
    %s304 = sand.u32 %s300, 7
    %s305 = smul.u32 %s301, 4
    %s306 = smul.u32 %s305, 8
    %s307 = sadd.s32 %s306, %s304
    %s308 = scalar_lea.vmem [#allocation5], %s307
    %v309 = vld [vmem:[%s308] ss:$8 sm:$0xf]
    %s310 = scalar_lea.vmem [#allocation2], 64
    %311 = vst.msk [vmem:[%s310] ss:$8 sm:$0xf] %vm78, %v309
    %312 = vst.msk [vmem:[%s310] ss:$8 sm:$0x0] %vm78, %v309
    %s313 = sadd.s32 %s83, 2
    %s314 = sld [smem:[#allocation4 + %s313]]
    %s315 = sshra.s32 %s314, 3
    %s316 = sand.u32 %s314, 7
    %s317 = sshra.s32 %s314, 3
    %s318 = sand.u32 %s314, 7
    %s319 = smul.u32 %s315, 4
    %s320 = smul.u32 %s319, 8
    %s321 = sadd.s32 %s320, %s318
    %s322 = scalar_lea.vmem [#allocation5], %s321
    %v323 = vld [vmem:[%s322] ss:$8 sm:$0xf]
    %s324 = scalar_lea.vmem [#allocation2], 65
    %325 = vst.msk [vmem:[%s324] ss:$8 sm:$0xf] %vm78, %v323
    %326 = vst.msk [vmem:[%s324] ss:$8 sm:$0x0] %vm78, %v323
    %s327 = sadd.s32 %s98, 2
    %s328 = sld [smem:[#allocation4 + %s327]]
    %s329 = sshra.s32 %s328, 3
    %s330 = sand.u32 %s328, 7
    %s331 = sshra.s32 %s328, 3
    %s332 = sand.u32 %s328, 7
    %s333 = smul.u32 %s329, 4
    %s334 = smul.u32 %s333, 8
    %s335 = sadd.s32 %s334, %s332
    %s336 = scalar_lea.vmem [#allocation5], %s335
    %v337 = vld [vmem:[%s336] ss:$8 sm:$0xf]
    %s338 = scalar_lea.vmem [#allocation2], 66
    %339 = vst.msk [vmem:[%s338] ss:$8 sm:$0xf] %vm78, %v337
    %340 = vst.msk [vmem:[%s338] ss:$8 sm:$0x0] %vm78, %v337
    %s341 = sadd.s32 %s113, 2
    %s342 = sld [smem:[#allocation4 + %s341]]
    %s343 = sshra.s32 %s342, 3
    %s344 = sand.u32 %s342, 7
    %s345 = sshra.s32 %s342, 3
    %s346 = sand.u32 %s342, 7
    %s347 = smul.u32 %s343, 4
    %s348 = smul.u32 %s347, 8
    %s349 = sadd.s32 %s348, %s346
    %s350 = scalar_lea.vmem [#allocation5], %s349
    %v351 = vld [vmem:[%s350] ss:$8 sm:$0xf]
    %s352 = scalar_lea.vmem [#allocation2], 67
    %353 = vst.msk [vmem:[%s352] ss:$8 sm:$0xf] %vm78, %v351
    %354 = vst.msk [vmem:[%s352] ss:$8 sm:$0x0] %vm78, %v351
    %s355 = sadd.s32 %s128, 2
    %s356 = sld [smem:[#allocation4 + %s355]]
    %s357 = sshra.s32 %s356, 3
    %s358 = sand.u32 %s356, 7
    %s359 = sshra.s32 %s356, 3
    %s360 = sand.u32 %s356, 7
    %s361 = smul.u32 %s357, 4
    %s362 = smul.u32 %s361, 8
    %s363 = sadd.s32 %s362, %s360
    %s364 = scalar_lea.vmem [#allocation5], %s363
    %v365 = vld [vmem:[%s364] ss:$8 sm:$0xf]
    %s366 = scalar_lea.vmem [#allocation2], 68
    %367 = vst.msk [vmem:[%s366] ss:$8 sm:$0xf] %vm78, %v365
    %368 = vst.msk [vmem:[%s366] ss:$8 sm:$0x0] %vm78, %v365
    %s369 = sadd.s32 %s143, 2
    %s370 = sld [smem:[#allocation4 + %s369]]
    %s371 = sshra.s32 %s370, 3
    %s372 = sand.u32 %s370, 7
    %s373 = sshra.s32 %s370, 3
    %s374 = sand.u32 %s370, 7
    %s375 = smul.u32 %s371, 4
    %s376 = smul.u32 %s375, 8
    %s377 = sadd.s32 %s376, %s374
    %s378 = scalar_lea.vmem [#allocation5], %s377
    %v379 = vld [vmem:[%s378] ss:$8 sm:$0xf]
    %s380 = scalar_lea.vmem [#allocation2], 69
    %381 = vst.msk [vmem:[%s380] ss:$8 sm:$0xf] %vm78, %v379
    %382 = vst.msk [vmem:[%s380] ss:$8 sm:$0x0] %vm78, %v379
    %s383 = sadd.s32 %s158, 2
    %s384 = sld [smem:[#allocation4 + %s383]]
    %s385 = sshra.s32 %s384, 3
    %s386 = sand.u32 %s384, 7
    %s387 = sshra.s32 %s384, 3
    %s388 = sand.u32 %s384, 7
    %s389 = smul.u32 %s385, 4
    %s390 = smul.u32 %s389, 8
    %s391 = sadd.s32 %s390, %s388
    %s392 = scalar_lea.vmem [#allocation5], %s391
    %v393 = vld [vmem:[%s392] ss:$8 sm:$0xf]
    %s394 = scalar_lea.vmem [#allocation2], 70
    %395 = vst.msk [vmem:[%s394] ss:$8 sm:$0xf] %vm78, %v393
    %396 = vst.msk [vmem:[%s394] ss:$8 sm:$0x0] %vm78, %v393
    %s397 = sadd.s32 %s173, 2
    %s398 = sld [smem:[#allocation4 + %s397]]
    %s399 = sshra.s32 %s398, 3
    %s400 = sand.u32 %s398, 7
    %s401 = sshra.s32 %s398, 3
    %s402 = sand.u32 %s398, 7
    %s403 = smul.u32 %s399, 4
    %s404 = smul.u32 %s403, 8
    %s405 = sadd.s32 %s404, %s402
    %s406 = scalar_lea.vmem [#allocation5], %s405
    %v407 = vld [vmem:[%s406] ss:$8 sm:$0xf]
    %s408 = scalar_lea.vmem [#allocation2], 71
    %409 = vst.msk [vmem:[%s408] ss:$8 sm:$0xf] %vm78, %v407
    %410 = vst.msk [vmem:[%s408] ss:$8 sm:$0x0] %vm78, %v407
    %s411 = sadd.s32 %s64, 3
    %s412 = sld [smem:[#allocation4 + %s411]]
    %s413 = sshra.s32 %s412, 3
    %s414 = sand.u32 %s412, 7
    %s415 = sshra.s32 %s412, 3
    %s416 = sand.u32 %s412, 7
    %s417 = smul.u32 %s413, 4
    %s418 = smul.u32 %s417, 8
    %s419 = sadd.s32 %s418, %s416
    %s420 = scalar_lea.vmem [#allocation5], %s419
    %v421 = vld [vmem:[%s420] ss:$8 sm:$0xf]
    %s422 = scalar_lea.vmem [#allocation2], 96
    %423 = vst.msk [vmem:[%s422] ss:$8 sm:$0xf] %vm78, %v421
    %424 = vst.msk [vmem:[%s422] ss:$8 sm:$0x0] %vm78, %v421
    %s425 = sadd.s32 %s83, 3
    %s426 = sld [smem:[#allocation4 + %s425]]
    %s427 = sshra.s32 %s426, 3
    %s428 = sand.u32 %s426, 7
    %s429 = sshra.s32 %s426, 3
    %s430 = sand.u32 %s426, 7
    %s431 = smul.u32 %s427, 4
    %s432 = smul.u32 %s431, 8
    %s433 = sadd.s32 %s432, %s430
    %s434 = scalar_lea.vmem [#allocation5], %s433
    %v435 = vld [vmem:[%s434] ss:$8 sm:$0xf]
    %s436 = scalar_lea.vmem [#allocation2], 97
    %437 = vst.msk [vmem:[%s436] ss:$8 sm:$0xf] %vm78, %v435
    %438 = vst.msk [vmem:[%s436] ss:$8 sm:$0x0] %vm78, %v435
    %s439 = sadd.s32 %s98, 3
    %s440 = sld [smem:[#allocation4 + %s439]]
    %s441 = sshra.s32 %s440, 3
    %s442 = sand.u32 %s440, 7
    %s443 = sshra.s32 %s440, 3
    %s444 = sand.u32 %s440, 7
    %s445 = smul.u32 %s441, 4
    %s446 = smul.u32 %s445, 8
    %s447 = sadd.s32 %s446, %s444
    %s448 = scalar_lea.vmem [#allocation5], %s447
    %v449 = vld [vmem:[%s448] ss:$8 sm:$0xf]
    %s450 = scalar_lea.vmem [#allocation2], 98
    %451 = vst.msk [vmem:[%s450] ss:$8 sm:$0xf] %vm78, %v449
    %452 = vst.msk [vmem:[%s450] ss:$8 sm:$0x0] %vm78, %v449
    %s453 = sadd.s32 %s113, 3
    %s454 = sld [smem:[#allocation4 + %s453]]
    %s455 = sshra.s32 %s454, 3
    %s456 = sand.u32 %s454, 7
    %s457 = sshra.s32 %s454, 3
    %s458 = sand.u32 %s454, 7
    %s459 = smul.u32 %s455, 4
    %s460 = smul.u32 %s459, 8
    %s461 = sadd.s32 %s460, %s458
    %s462 = scalar_lea.vmem [#allocation5], %s461
    %v463 = vld [vmem:[%s462] ss:$8 sm:$0xf]
    %s464 = scalar_lea.vmem [#allocation2], 99
    %465 = vst.msk [vmem:[%s464] ss:$8 sm:$0xf] %vm78, %v463
    %466 = vst.msk [vmem:[%s464] ss:$8 sm:$0x0] %vm78, %v463
    %s467 = sadd.s32 %s128, 3
    %s468 = sld [smem:[#allocation4 + %s467]]
    %s469 = sshra.s32 %s468, 3
    %s470 = sand.u32 %s468, 7
    %s471 = sshra.s32 %s468, 3
    %s472 = sand.u32 %s468, 7
    %s473 = smul.u32 %s469, 4
    %s474 = smul.u32 %s473, 8
    %s475 = sadd.s32 %s474, %s472
    %s476 = scalar_lea.vmem [#allocation5], %s475
    %v477 = vld [vmem:[%s476] ss:$8 sm:$0xf]
    %s478 = scalar_lea.vmem [#allocation2], 100
    %479 = vst.msk [vmem:[%s478] ss:$8 sm:$0xf] %vm78, %v477
    %480 = vst.msk [vmem:[%s478] ss:$8 sm:$0x0] %vm78, %v477
    %s481 = sadd.s32 %s143, 3
    %s482 = sld [smem:[#allocation4 + %s481]]
    %s483 = sshra.s32 %s482, 3
    %s484 = sand.u32 %s482, 7
    %s485 = sshra.s32 %s482, 3
    %s486 = sand.u32 %s482, 7
    %s487 = smul.u32 %s483, 4
    %s488 = smul.u32 %s487, 8
    %s489 = sadd.s32 %s488, %s486
    %s490 = scalar_lea.vmem [#allocation5], %s489
    %v491 = vld [vmem:[%s490] ss:$8 sm:$0xf]
    %s492 = scalar_lea.vmem [#allocation2], 101
    %493 = vst.msk [vmem:[%s492] ss:$8 sm:$0xf] %vm78, %v491
    %494 = vst.msk [vmem:[%s492] ss:$8 sm:$0x0] %vm78, %v491
    %s495 = sadd.s32 %s158, 3
    %s496 = sld [smem:[#allocation4 + %s495]]
    %s497 = sshra.s32 %s496, 3
    %s498 = sand.u32 %s496, 7
    %s499 = sshra.s32 %s496, 3
    %s500 = sand.u32 %s496, 7
    %s501 = smul.u32 %s497, 4
    %s502 = smul.u32 %s501, 8
    %s503 = sadd.s32 %s502, %s500
    %s504 = scalar_lea.vmem [#allocation5], %s503
    %v505 = vld [vmem:[%s504] ss:$8 sm:$0xf]
    %s506 = scalar_lea.vmem [#allocation2], 102
    %507 = vst.msk [vmem:[%s506] ss:$8 sm:$0xf] %vm78, %v505
    %508 = vst.msk [vmem:[%s506] ss:$8 sm:$0x0] %vm78, %v505
    %s509 = sadd.s32 %s173, 3
    %s510 = sld [smem:[#allocation4 + %s509]]
    %s511 = sshra.s32 %s510, 3
    %s512 = sand.u32 %s510, 7
    %s513 = sshra.s32 %s510, 3
    %s514 = sand.u32 %s510, 7
    %s515 = smul.u32 %s511, 4
    %s516 = smul.u32 %s515, 8
    %s517 = sadd.s32 %s516, %s514
    %s518 = scalar_lea.vmem [#allocation5], %s517
    %v519 = vld [vmem:[%s518] ss:$8 sm:$0xf]
    %s520 = scalar_lea.vmem [#allocation2], 103
    %521 = vst.msk [vmem:[%s520] ss:$8 sm:$0xf] %vm78, %v519
    %522 = vst.msk [vmem:[%s520] ss:$8 sm:$0x0] %vm78, %v519
    %s523 = sadd.s32 %s64, 4
    %s524 = sld [smem:[#allocation4 + %s523]]
    %s525 = sshra.s32 %s524, 3
    %s526 = sand.u32 %s524, 7
    %s527 = sshra.s32 %s524, 3
    %s528 = sand.u32 %s524, 7
    %s529 = smul.u32 %s525, 4
    %s530 = smul.u32 %s529, 8
    %s531 = sadd.s32 %s530, %s528
    %s532 = scalar_lea.vmem [#allocation5], %s531
    %v533 = vld [vmem:[%s532] ss:$8 sm:$0xf]
    %s534 = scalar_lea.vmem [#allocation2], 128
    %535 = vst.msk [vmem:[%s534] ss:$8 sm:$0xf] %vm78, %v533
    %536 = vst.msk [vmem:[%s534] ss:$8 sm:$0x0] %vm78, %v533
    %s537 = sadd.s32 %s83, 4
    %s538 = sld [smem:[#allocation4 + %s537]]
    %s539 = sshra.s32 %s538, 3
    %s540 = sand.u32 %s538, 7
    %s541 = sshra.s32 %s538, 3
    %s542 = sand.u32 %s538, 7
    %s543 = smul.u32 %s539, 4
    %s544 = smul.u32 %s543, 8
    %s545 = sadd.s32 %s544, %s542
    %s546 = scalar_lea.vmem [#allocation5], %s545
    %v547 = vld [vmem:[%s546] ss:$8 sm:$0xf]
    %s548 = scalar_lea.vmem [#allocation2], 129
    %549 = vst.msk [vmem:[%s548] ss:$8 sm:$0xf] %vm78, %v547
    %550 = vst.msk [vmem:[%s548] ss:$8 sm:$0x0] %vm78, %v547
    %s551 = sadd.s32 %s98, 4
    %s552 = sld [smem:[#allocation4 + %s551]]
    %s553 = sshra.s32 %s552, 3
    %s554 = sand.u32 %s552, 7
    %s555 = sshra.s32 %s552, 3
    %s556 = sand.u32 %s552, 7
    %s557 = smul.u32 %s553, 4
    %s558 = smul.u32 %s557, 8
    %s559 = sadd.s32 %s558, %s556
    %s560 = scalar_lea.vmem [#allocation5], %s559
    %v561 = vld [vmem:[%s560] ss:$8 sm:$0xf]
    %s562 = scalar_lea.vmem [#allocation2], 130
    %563 = vst.msk [vmem:[%s562] ss:$8 sm:$0xf] %vm78, %v561
    %564 = vst.msk [vmem:[%s562] ss:$8 sm:$0x0] %vm78, %v561
    %s565 = sadd.s32 %s113, 4
    %s566 = sld [smem:[#allocation4 + %s565]]
    %s567 = sshra.s32 %s566, 3
    %s568 = sand.u32 %s566, 7
    %s569 = sshra.s32 %s566, 3
    %s570 = sand.u32 %s566, 7
    %s571 = smul.u32 %s567, 4
    %s572 = smul.u32 %s571, 8
    %s573 = sadd.s32 %s572, %s570
    %s574 = scalar_lea.vmem [#allocation5], %s573
    %v575 = vld [vmem:[%s574] ss:$8 sm:$0xf]
    %s576 = scalar_lea.vmem [#allocation2], 131
    %577 = vst.msk [vmem:[%s576] ss:$8 sm:$0xf] %vm78, %v575
    %578 = vst.msk [vmem:[%s576] ss:$8 sm:$0x0] %vm78, %v575
    %s579 = sadd.s32 %s128, 4
    %s580 = sld [smem:[#allocation4 + %s579]]
    %s581 = sshra.s32 %s580, 3
    %s582 = sand.u32 %s580, 7
    %s583 = sshra.s32 %s580, 3
    %s584 = sand.u32 %s580, 7
    %s585 = smul.u32 %s581, 4
    %s586 = smul.u32 %s585, 8
    %s587 = sadd.s32 %s586, %s584
    %s588 = scalar_lea.vmem [#allocation5], %s587
    %v589 = vld [vmem:[%s588] ss:$8 sm:$0xf]
    %s590 = scalar_lea.vmem [#allocation2], 132
    %591 = vst.msk [vmem:[%s590] ss:$8 sm:$0xf] %vm78, %v589
    %592 = vst.msk [vmem:[%s590] ss:$8 sm:$0x0] %vm78, %v589
    %s593 = sadd.s32 %s143, 4
    %s594 = sld [smem:[#allocation4 + %s593]]
    %s595 = sshra.s32 %s594, 3
    %s596 = sand.u32 %s594, 7
    %s597 = sshra.s32 %s594, 3
    %s598 = sand.u32 %s594, 7
    %s599 = smul.u32 %s595, 4
    %s600 = smul.u32 %s599, 8
    %s601 = sadd.s32 %s600, %s598
    %s602 = scalar_lea.vmem [#allocation5], %s601
    %v603 = vld [vmem:[%s602] ss:$8 sm:$0xf]
    %s604 = scalar_lea.vmem [#allocation2], 133
    %605 = vst.msk [vmem:[%s604] ss:$8 sm:$0xf] %vm78, %v603
    %606 = vst.msk [vmem:[%s604] ss:$8 sm:$0x0] %vm78, %v603
    %s607 = sadd.s32 %s158, 4
    %s608 = sld [smem:[#allocation4 + %s607]]
    %s609 = sshra.s32 %s608, 3
    %s610 = sand.u32 %s608, 7
    %s611 = sshra.s32 %s608, 3
    %s612 = sand.u32 %s608, 7
    %s613 = smul.u32 %s609, 4
    %s614 = smul.u32 %s613, 8
    %s615 = sadd.s32 %s614, %s612
    %s616 = scalar_lea.vmem [#allocation5], %s615
    %v617 = vld [vmem:[%s616] ss:$8 sm:$0xf]
    %s618 = scalar_lea.vmem [#allocation2], 134
    %619 = vst.msk [vmem:[%s618] ss:$8 sm:$0xf] %vm78, %v617
    %620 = vst.msk [vmem:[%s618] ss:$8 sm:$0x0] %vm78, %v617
    %s621 = sadd.s32 %s173, 4
    %s622 = sld [smem:[#allocation4 + %s621]]
    %s623 = sshra.s32 %s622, 3
    %s624 = sand.u32 %s622, 7
    %s625 = sshra.s32 %s622, 3
    %s626 = sand.u32 %s622, 7
    %s627 = smul.u32 %s623, 4
    %s628 = smul.u32 %s627, 8
    %s629 = sadd.s32 %s628, %s626
    %s630 = scalar_lea.vmem [#allocation5], %s629
    %v631 = vld [vmem:[%s630] ss:$8 sm:$0xf]
    %s632 = scalar_lea.vmem [#allocation2], 135
    %633 = vst.msk [vmem:[%s632] ss:$8 sm:$0xf] %vm78, %v631
    %634 = vst.msk [vmem:[%s632] ss:$8 sm:$0x0] %vm78, %v631
    %s635 = sadd.s32 %s64, 5
    %s636 = sld [smem:[#allocation4 + %s635]]
    %s637 = sshra.s32 %s636, 3
    %s638 = sand.u32 %s636, 7
    %s639 = sshra.s32 %s636, 3
    %s640 = sand.u32 %s636, 7
    %s641 = smul.u32 %s637, 4
    %s642 = smul.u32 %s641, 8
    %s643 = sadd.s32 %s642, %s640
    %s644 = scalar_lea.vmem [#allocation5], %s643
    %v645 = vld [vmem:[%s644] ss:$8 sm:$0xf]
    %s646 = scalar_lea.vmem [#allocation2], 160
    %647 = vst.msk [vmem:[%s646] ss:$8 sm:$0xf] %vm78, %v645
    %648 = vst.msk [vmem:[%s646] ss:$8 sm:$0x0] %vm78, %v645
    %s649 = sadd.s32 %s83, 5
    %s650 = sld [smem:[#allocation4 + %s649]]
    %s651 = sshra.s32 %s650, 3
    %s652 = sand.u32 %s650, 7
    %s653 = sshra.s32 %s650, 3
    %s654 = sand.u32 %s650, 7
    %s655 = smul.u32 %s651, 4
    %s656 = smul.u32 %s655, 8
    %s657 = sadd.s32 %s656, %s654
    %s658 = scalar_lea.vmem [#allocation5], %s657
    %v659 = vld [vmem:[%s658] ss:$8 sm:$0xf]
    %s660 = scalar_lea.vmem [#allocation2], 161
    %661 = vst.msk [vmem:[%s660] ss:$8 sm:$0xf] %vm78, %v659
    %662 = vst.msk [vmem:[%s660] ss:$8 sm:$0x0] %vm78, %v659
    %s663 = sadd.s32 %s98, 5
    %s664 = sld [smem:[#allocation4 + %s663]]
    %s665 = sshra.s32 %s664, 3
    %s666 = sand.u32 %s664, 7
    %s667 = sshra.s32 %s664, 3
    %s668 = sand.u32 %s664, 7
    %s669 = smul.u32 %s665, 4
    %s670 = smul.u32 %s669, 8
    %s671 = sadd.s32 %s670, %s668
    %s672 = scalar_lea.vmem [#allocation5], %s671
    %v673 = vld [vmem:[%s672] ss:$8 sm:$0xf]
    %s674 = scalar_lea.vmem [#allocation2], 162
    %675 = vst.msk [vmem:[%s674] ss:$8 sm:$0xf] %vm78, %v673
    %676 = vst.msk [vmem:[%s674] ss:$8 sm:$0x0] %vm78, %v673
    %s677 = sadd.s32 %s113, 5
    %s678 = sld [smem:[#allocation4 + %s677]]
    %s679 = sshra.s32 %s678, 3
    %s680 = sand.u32 %s678, 7
    %s681 = sshra.s32 %s678, 3
    %s682 = sand.u32 %s678, 7
    %s683 = smul.u32 %s679, 4
    %s684 = smul.u32 %s683, 8
    %s685 = sadd.s32 %s684, %s682
    %s686 = scalar_lea.vmem [#allocation5], %s685
    %v687 = vld [vmem:[%s686] ss:$8 sm:$0xf]
    %s688 = scalar_lea.vmem [#allocation2], 163
    %689 = vst.msk [vmem:[%s688] ss:$8 sm:$0xf] %vm78, %v687
    %690 = vst.msk [vmem:[%s688] ss:$8 sm:$0x0] %vm78, %v687
    %s691 = sadd.s32 %s128, 5
    %s692 = sld [smem:[#allocation4 + %s691]]
    %s693 = sshra.s32 %s692, 3
    %s694 = sand.u32 %s692, 7
    %s695 = sshra.s32 %s692, 3
    %s696 = sand.u32 %s692, 7
    %s697 = smul.u32 %s693, 4
    %s698 = smul.u32 %s697, 8
    %s699 = sadd.s32 %s698, %s696
    %s700 = scalar_lea.vmem [#allocation5], %s699
    %v701 = vld [vmem:[%s700] ss:$8 sm:$0xf]
    %s702 = scalar_lea.vmem [#allocation2], 164
    %703 = vst.msk [vmem:[%s702] ss:$8 sm:$0xf] %vm78, %v701
    %704 = vst.msk [vmem:[%s702] ss:$8 sm:$0x0] %vm78, %v701
    %s705 = sadd.s32 %s143, 5
    %s706 = sld [smem:[#allocation4 + %s705]]
    %s707 = sshra.s32 %s706, 3
    %s708 = sand.u32 %s706, 7
    %s709 = sshra.s32 %s706, 3
    %s710 = sand.u32 %s706, 7
    %s711 = smul.u32 %s707, 4
    %s712 = smul.u32 %s711, 8
    %s713 = sadd.s32 %s712, %s710
    %s714 = scalar_lea.vmem [#allocation5], %s713
    %v715 = vld [vmem:[%s714] ss:$8 sm:$0xf]
    %s716 = scalar_lea.vmem [#allocation2], 165
    %717 = vst.msk [vmem:[%s716] ss:$8 sm:$0xf] %vm78, %v715
    %718 = vst.msk [vmem:[%s716] ss:$8 sm:$0x0] %vm78, %v715
    %s719 = sadd.s32 %s158, 5
    %s720 = sld [smem:[#allocation4 + %s719]]
    %s721 = sshra.s32 %s720, 3
    %s722 = sand.u32 %s720, 7
    %s723 = sshra.s32 %s720, 3
    %s724 = sand.u32 %s720, 7
    %s725 = smul.u32 %s721, 4
    %s726 = smul.u32 %s725, 8
    %s727 = sadd.s32 %s726, %s724
    %s728 = scalar_lea.vmem [#allocation5], %s727
    %v729 = vld [vmem:[%s728] ss:$8 sm:$0xf]
    %s730 = scalar_lea.vmem [#allocation2], 166
    %731 = vst.msk [vmem:[%s730] ss:$8 sm:$0xf] %vm78, %v729
    %732 = vst.msk [vmem:[%s730] ss:$8 sm:$0x0] %vm78, %v729
    %s733 = sadd.s32 %s173, 5
    %s734 = sld [smem:[#allocation4 + %s733]]
    %s735 = sshra.s32 %s734, 3
    %s736 = sand.u32 %s734, 7
    %s737 = sshra.s32 %s734, 3
    %s738 = sand.u32 %s734, 7
    %s739 = smul.u32 %s735, 4
    %s740 = smul.u32 %s739, 8
    %s741 = sadd.s32 %s740, %s738
    %s742 = scalar_lea.vmem [#allocation5], %s741
    %v743 = vld [vmem:[%s742] ss:$8 sm:$0xf]
    %s744 = scalar_lea.vmem [#allocation2], 167
    %745 = vst.msk [vmem:[%s744] ss:$8 sm:$0xf] %vm78, %v743
    %746 = vst.msk [vmem:[%s744] ss:$8 sm:$0x0] %vm78, %v743
    %s747 = sadd.s32 %s64, 6
    %s748 = sld [smem:[#allocation4 + %s747]]
    %s749 = sshra.s32 %s748, 3
    %s750 = sand.u32 %s748, 7
    %s751 = sshra.s32 %s748, 3
    %s752 = sand.u32 %s748, 7
    %s753 = smul.u32 %s749, 4
    %s754 = smul.u32 %s753, 8
    %s755 = sadd.s32 %s754, %s752
    %s756 = scalar_lea.vmem [#allocation5], %s755
    %v757 = vld [vmem:[%s756] ss:$8 sm:$0xf]
    %s758 = scalar_lea.vmem [#allocation2], 192
    %759 = vst.msk [vmem:[%s758] ss:$8 sm:$0xf] %vm78, %v757
    %760 = vst.msk [vmem:[%s758] ss:$8 sm:$0x0] %vm78, %v757
    %s761 = sadd.s32 %s83, 6
    %s762 = sld [smem:[#allocation4 + %s761]]
    %s763 = sshra.s32 %s762, 3
    %s764 = sand.u32 %s762, 7
    %s765 = sshra.s32 %s762, 3
    %s766 = sand.u32 %s762, 7
    %s767 = smul.u32 %s763, 4
    %s768 = smul.u32 %s767, 8
    %s769 = sadd.s32 %s768, %s766
    %s770 = scalar_lea.vmem [#allocation5], %s769
    %v771 = vld [vmem:[%s770] ss:$8 sm:$0xf]
    %s772 = scalar_lea.vmem [#allocation2], 193
    %773 = vst.msk [vmem:[%s772] ss:$8 sm:$0xf] %vm78, %v771
    %774 = vst.msk [vmem:[%s772] ss:$8 sm:$0x0] %vm78, %v771
    %s775 = sadd.s32 %s98, 6
    %s776 = sld [smem:[#allocation4 + %s775]]
    %s777 = sshra.s32 %s776, 3
    %s778 = sand.u32 %s776, 7
    %s779 = sshra.s32 %s776, 3
    %s780 = sand.u32 %s776, 7
    %s781 = smul.u32 %s777, 4
    %s782 = smul.u32 %s781, 8
    %s783 = sadd.s32 %s782, %s780
    %s784 = scalar_lea.vmem [#allocation5], %s783
    %v785 = vld [vmem:[%s784] ss:$8 sm:$0xf]
    %s786 = scalar_lea.vmem [#allocation2], 194
    %787 = vst.msk [vmem:[%s786] ss:$8 sm:$0xf] %vm78, %v785
    %788 = vst.msk [vmem:[%s786] ss:$8 sm:$0x0] %vm78, %v785
    %s789 = sadd.s32 %s113, 6
    %s790 = sld [smem:[#allocation4 + %s789]]
    %s791 = sshra.s32 %s790, 3
    %s792 = sand.u32 %s790, 7
    %s793 = sshra.s32 %s790, 3
    %s794 = sand.u32 %s790, 7
    %s795 = smul.u32 %s791, 4
    %s796 = smul.u32 %s795, 8
    %s797 = sadd.s32 %s796, %s794
    %s798 = scalar_lea.vmem [#allocation5], %s797
    %v799 = vld [vmem:[%s798] ss:$8 sm:$0xf]
    %s800 = scalar_lea.vmem [#allocation2], 195
    %801 = vst.msk [vmem:[%s800] ss:$8 sm:$0xf] %vm78, %v799
    %802 = vst.msk [vmem:[%s800] ss:$8 sm:$0x0] %vm78, %v799
    %s803 = sadd.s32 %s128, 6
    %s804 = sld [smem:[#allocation4 + %s803]]
    %s805 = sshra.s32 %s804, 3
    %s806 = sand.u32 %s804, 7
    %s807 = sshra.s32 %s804, 3
    %s808 = sand.u32 %s804, 7
    %s809 = smul.u32 %s805, 4
    %s810 = smul.u32 %s809, 8
    %s811 = sadd.s32 %s810, %s808
    %s812 = scalar_lea.vmem [#allocation5], %s811
    %v813 = vld [vmem:[%s812] ss:$8 sm:$0xf]
    %s814 = scalar_lea.vmem [#allocation2], 196
    %815 = vst.msk [vmem:[%s814] ss:$8 sm:$0xf] %vm78, %v813
    %816 = vst.msk [vmem:[%s814] ss:$8 sm:$0x0] %vm78, %v813
    %s817 = sadd.s32 %s143, 6
    %s818 = sld [smem:[#allocation4 + %s817]]
    %s819 = sshra.s32 %s818, 3
    %s820 = sand.u32 %s818, 7
    %s821 = sshra.s32 %s818, 3
    %s822 = sand.u32 %s818, 7
    %s823 = smul.u32 %s819, 4
    %s824 = smul.u32 %s823, 8
    %s825 = sadd.s32 %s824, %s822
    %s826 = scalar_lea.vmem [#allocation5], %s825
    %v827 = vld [vmem:[%s826] ss:$8 sm:$0xf]
    %s828 = scalar_lea.vmem [#allocation2], 197
    %829 = vst.msk [vmem:[%s828] ss:$8 sm:$0xf] %vm78, %v827
    %830 = vst.msk [vmem:[%s828] ss:$8 sm:$0x0] %vm78, %v827
    %s831 = sadd.s32 %s158, 6
    %s832 = sld [smem:[#allocation4 + %s831]]
    %s833 = sshra.s32 %s832, 3
    %s834 = sand.u32 %s832, 7
    %s835 = sshra.s32 %s832, 3
    %s836 = sand.u32 %s832, 7
    %s837 = smul.u32 %s833, 4
    %s838 = smul.u32 %s837, 8
    %s839 = sadd.s32 %s838, %s836
    %s840 = scalar_lea.vmem [#allocation5], %s839
    %v841 = vld [vmem:[%s840] ss:$8 sm:$0xf]
    %s842 = scalar_lea.vmem [#allocation2], 198
    %843 = vst.msk [vmem:[%s842] ss:$8 sm:$0xf] %vm78, %v841
    %844 = vst.msk [vmem:[%s842] ss:$8 sm:$0x0] %vm78, %v841
    %s845 = sadd.s32 %s173, 6
    %s846 = sld [smem:[#allocation4 + %s845]]
    %s847 = sshra.s32 %s846, 3
    %s848 = sand.u32 %s846, 7
    %s849 = sshra.s32 %s846, 3
    %s850 = sand.u32 %s846, 7
    %s851 = smul.u32 %s847, 4
    %s852 = smul.u32 %s851, 8
    %s853 = sadd.s32 %s852, %s850
    %s854 = scalar_lea.vmem [#allocation5], %s853
    %v855 = vld [vmem:[%s854] ss:$8 sm:$0xf]
    %s856 = scalar_lea.vmem [#allocation2], 199
    %857 = vst.msk [vmem:[%s856] ss:$8 sm:$0xf] %vm78, %v855
    %858 = vst.msk [vmem:[%s856] ss:$8 sm:$0x0] %vm78, %v855
    %s859 = sadd.s32 %s64, 7
    %s860 = sld [smem:[#allocation4 + %s859]]
    %s861 = sshra.s32 %s860, 3
    %s862 = sand.u32 %s860, 7
    %s863 = sshra.s32 %s860, 3
    %s864 = sand.u32 %s860, 7
    %s865 = smul.u32 %s861, 4
    %s866 = smul.u32 %s865, 8
    %s867 = sadd.s32 %s866, %s864
    %s868 = scalar_lea.vmem [#allocation5], %s867
    %v869 = vld [vmem:[%s868] ss:$8 sm:$0xf]
    %s870 = scalar_lea.vmem [#allocation2], 224
    %871 = vst.msk [vmem:[%s870] ss:$8 sm:$0xf] %vm78, %v869
    %872 = vst.msk [vmem:[%s870] ss:$8 sm:$0x0] %vm78, %v869
    %s873 = sadd.s32 %s83, 7
    %s874 = sld [smem:[#allocation4 + %s873]]
    %s875 = sshra.s32 %s874, 3
    %s876 = sand.u32 %s874, 7
    %s877 = sshra.s32 %s874, 3
    %s878 = sand.u32 %s874, 7
    %s879 = smul.u32 %s875, 4
    %s880 = smul.u32 %s879, 8
    %s881 = sadd.s32 %s880, %s878
    %s882 = scalar_lea.vmem [#allocation5], %s881
    %v883 = vld [vmem:[%s882] ss:$8 sm:$0xf]
    %s884 = scalar_lea.vmem [#allocation2], 225
    %885 = vst.msk [vmem:[%s884] ss:$8 sm:$0xf] %vm78, %v883
    %886 = vst.msk [vmem:[%s884] ss:$8 sm:$0x0] %vm78, %v883
    %s887 = sadd.s32 %s98, 7
    %s888 = sld [smem:[#allocation4 + %s887]]
    %s889 = sshra.s32 %s888, 3
    %s890 = sand.u32 %s888, 7
    %s891 = sshra.s32 %s888, 3
    %s892 = sand.u32 %s888, 7
    %s893 = smul.u32 %s889, 4
    %s894 = smul.u32 %s893, 8
    %s895 = sadd.s32 %s894, %s892
    %s896 = scalar_lea.vmem [#allocation5], %s895
    %v897 = vld [vmem:[%s896] ss:$8 sm:$0xf]
    %s898 = scalar_lea.vmem [#allocation2], 226
    %899 = vst.msk [vmem:[%s898] ss:$8 sm:$0xf] %vm78, %v897
    %900 = vst.msk [vmem:[%s898] ss:$8 sm:$0x0] %vm78, %v897
    %s901 = sadd.s32 %s113, 7
    %s902 = sld [smem:[#allocation4 + %s901]]
    %s903 = sshra.s32 %s902, 3
    %s904 = sand.u32 %s902, 7
    %s905 = sshra.s32 %s902, 3
    %s906 = sand.u32 %s902, 7
    %s907 = smul.u32 %s903, 4
    %s908 = smul.u32 %s907, 8
    %s909 = sadd.s32 %s908, %s906
    %s910 = scalar_lea.vmem [#allocation5], %s909
    %v911 = vld [vmem:[%s910] ss:$8 sm:$0xf]
    %s912 = scalar_lea.vmem [#allocation2], 227
    %913 = vst.msk [vmem:[%s912] ss:$8 sm:$0xf] %vm78, %v911
    %914 = vst.msk [vmem:[%s912] ss:$8 sm:$0x0] %vm78, %v911
    %s915 = sadd.s32 %s128, 7
    %s916 = sld [smem:[#allocation4 + %s915]]
    %s917 = sshra.s32 %s916, 3
    %s918 = sand.u32 %s916, 7
    %s919 = sshra.s32 %s916, 3
    %s920 = sand.u32 %s916, 7
    %s921 = smul.u32 %s917, 4
    %s922 = smul.u32 %s921, 8
    %s923 = sadd.s32 %s922, %s920
    %s924 = scalar_lea.vmem [#allocation5], %s923
    %v925 = vld [vmem:[%s924] ss:$8 sm:$0xf]
    %s926 = scalar_lea.vmem [#allocation2], 228
    %927 = vst.msk [vmem:[%s926] ss:$8 sm:$0xf] %vm78, %v925
    %928 = vst.msk [vmem:[%s926] ss:$8 sm:$0x0] %vm78, %v925
    %s929 = sadd.s32 %s143, 7
    %s930 = sld [smem:[#allocation4 + %s929]]
    %s931 = sshra.s32 %s930, 3
    %s932 = sand.u32 %s930, 7
    %s933 = sshra.s32 %s930, 3
    %s934 = sand.u32 %s930, 7
    %s935 = smul.u32 %s931, 4
    %s936 = smul.u32 %s935, 8
    %s937 = sadd.s32 %s936, %s934
    %s938 = scalar_lea.vmem [#allocation5], %s937
    %v939 = vld [vmem:[%s938] ss:$8 sm:$0xf]
    %s940 = scalar_lea.vmem [#allocation2], 229
    %941 = vst.msk [vmem:[%s940] ss:$8 sm:$0xf] %vm78, %v939
    %942 = vst.msk [vmem:[%s940] ss:$8 sm:$0x0] %vm78, %v939
    %s943 = sadd.s32 %s158, 7
    %s944 = sld [smem:[#allocation4 + %s943]]
    %s945 = sshra.s32 %s944, 3
    %s946 = sand.u32 %s944, 7
    %s947 = sshra.s32 %s944, 3
    %s948 = sand.u32 %s944, 7
    %s949 = smul.u32 %s945, 4
    %s950 = smul.u32 %s949, 8
    %s951 = sadd.s32 %s950, %s948
    %s952 = scalar_lea.vmem [#allocation5], %s951
    %v953 = vld [vmem:[%s952] ss:$8 sm:$0xf]
    %s954 = scalar_lea.vmem [#allocation2], 230
    %955 = vst.msk [vmem:[%s954] ss:$8 sm:$0xf] %vm78, %v953
    %956 = vst.msk [vmem:[%s954] ss:$8 sm:$0x0] %vm78, %v953
    %s957 = sadd.s32 %s173, 7
    %s958 = sld [smem:[#allocation4 + %s957]]
    %s959 = sshra.s32 %s958, 3
    %s960 = sand.u32 %s958, 7
    %s961 = sshra.s32 %s958, 3
    %s962 = sand.u32 %s958, 7
    %s963 = smul.u32 %s959, 4
    %s964 = smul.u32 %s963, 8
    %s965 = sadd.s32 %s964, %s962
    %s966 = scalar_lea.vmem [#allocation5], %s965
    %v967 = vld [vmem:[%s966] ss:$8 sm:$0xf]
    %s968 = scalar_lea.vmem [#allocation2], 231
    %969 = vst.msk [vmem:[%s968] ss:$8 sm:$0xf] %vm78, %v967
    %970 = vst.msk [vmem:[%s968] ss:$8 sm:$0x0] %vm78, %v967
    %v971 = vld [vmem:[#allocation2] sm:$0xff]
    %v972 = vld [vmem:[#allocation2 + $0x8] sm:$0xff]
    %v973 = vld [vmem:[#allocation2 + $0x10] sm:$0xff]
    %v974 = vld [vmem:[#allocation2 + $0x18] sm:$0xff]
    %v975 = vld [vmem:[#allocation8] sm:$0xff]
    %v976 = vld [vmem:[#allocation8 + $0x8] sm:$0xff]
    %v977 = vld [vmem:[#allocation8 + $0x10] sm:$0xff]
    %v978 = vld [vmem:[#allocation8 + $0x18] sm:$0xff]
    %v979 = vld [vmem:[#allocation8 + $0x20] sm:$0xff]
    %v980 = vld [vmem:[#allocation8 + $0x28] sm:$0xff]
    %v981 = vld [vmem:[#allocation8 + $0x30] sm:$0xff]
    %v982 = vld [vmem:[#allocation8 + $0x38] sm:$0xff]
    %v983 = vld [vmem:[#allocation8 + $0x40] sm:$0xff]
    %v984 = vld [vmem:[#allocation8 + $0x48] sm:$0xff]
    %v985 = vld [vmem:[#allocation8 + $0x50] sm:$0xff]
    %v986 = vld [vmem:[#allocation8 + $0x58] sm:$0xff]
    %v987 = vld [vmem:[#allocation8 + $0x60] sm:$0xff]
    %v988 = vld [vmem:[#allocation8 + $0x68] sm:$0xff]
    %v989 = vld [vmem:[#allocation8 + $0x70] sm:$0xff]
    %v990 = vld [vmem:[#allocation8 + $0x78] sm:$0xff]
    %v991 = vld [vmem:[#allocation8 + $0x80] sm:$0xff]
    %v992 = vld [vmem:[#allocation8 + $0x88] sm:$0xff]
    %v993 = vld [vmem:[#allocation8 + $0x90] sm:$0xff]
    %v994 = vld [vmem:[#allocation8 + $0x98] sm:$0xff]
    %v995 = vld [vmem:[#allocation8 + $0xa0] sm:$0xff]
    %v996 = vld [vmem:[#allocation8 + $0xa8] sm:$0xff]
    %v997 = vld [vmem:[#allocation8 + $0xb0] sm:$0xff]
    %v998 = vld [vmem:[#allocation8 + $0xb8] sm:$0xff]
    %v999 = vld [vmem:[#allocation8 + $0xc0] sm:$0xff]
    %v1000 = vld [vmem:[#allocation8 + $0xc8] sm:$0xff]
    %v1001 = vld [vmem:[#allocation8 + $0xd0] sm:$0xff]
    %v1002 = vld [vmem:[#allocation8 + $0xd8] sm:$0xff]
    %v1003 = vld [vmem:[#allocation8 + $0xe0] sm:$0xff]
    %v1004 = vld [vmem:[#allocation8 + $0xe8] sm:$0xff]
    %v1005 = vld [vmem:[#allocation8 + $0xf0] sm:$0xff]
    %v1006 = vld [vmem:[#allocation8 + $0xf8] sm:$0xff]
    %v1007 = vld [vmem:[#allocation8 + $0x100] sm:$0xff]
    %v1008 = vld [vmem:[#allocation8 + $0x108] sm:$0xff]
    %v1009 = vld [vmem:[#allocation8 + $0x110] sm:$0xff]
    %v1010 = vld [vmem:[#allocation8 + $0x118] sm:$0xff]
    %v1011 = vld [vmem:[#allocation8 + $0x120] sm:$0xff]
    %v1012 = vld [vmem:[#allocation8 + $0x128] sm:$0xff]
    %v1013 = vld [vmem:[#allocation8 + $0x130] sm:$0xff]
    %v1014 = vld [vmem:[#allocation8 + $0x138] sm:$0xff]
    %v1015 = vld [vmem:[#allocation8 + $0x140] sm:$0xff]
    %v1016 = vld [vmem:[#allocation8 + $0x148] sm:$0xff]
    %v1017 = vld [vmem:[#allocation8 + $0x150] sm:$0xff]
    %v1018 = vld [vmem:[#allocation8 + $0x158] sm:$0xff]
    %v1019 = vld [vmem:[#allocation8 + $0x160] sm:$0xff]
    %v1020 = vld [vmem:[#allocation8 + $0x168] sm:$0xff]
    %v1021 = vld [vmem:[#allocation8 + $0x170] sm:$0xff]
    %v1022 = vld [vmem:[#allocation8 + $0x178] sm:$0xff]
    %v1023 = vld [vmem:[#allocation8 + $0x180] sm:$0xff]
    %v1024 = vld [vmem:[#allocation8 + $0x188] sm:$0xff]
    %v1025 = vld [vmem:[#allocation8 + $0x190] sm:$0xff]
    %v1026 = vld [vmem:[#allocation8 + $0x198] sm:$0xff]
    %v1027 = vld [vmem:[#allocation8 + $0x1a0] sm:$0xff]
    %v1028 = vld [vmem:[#allocation8 + $0x1a8] sm:$0xff]
    %v1029 = vld [vmem:[#allocation8 + $0x1b0] sm:$0xff]
    %v1030 = vld [vmem:[#allocation8 + $0x1b8] sm:$0xff]
    %v1031 = vld [vmem:[#allocation8 + $0x1c0] sm:$0xff]
    %v1032 = vld [vmem:[#allocation8 + $0x1c8] sm:$0xff]
    %v1033 = vld [vmem:[#allocation8 + $0x1d0] sm:$0xff]
    %v1034 = vld [vmem:[#allocation8 + $0x1d8] sm:$0xff]
    %v1035 = vld [vmem:[#allocation8 + $0x1e0] sm:$0xff]
    %v1036 = vld [vmem:[#allocation8 + $0x1e8] sm:$0xff]
    %v1037 = vld [vmem:[#allocation8 + $0x1f0] sm:$0xff]
    %v1038 = vld [vmem:[#allocation8 + $0x1f8] sm:$0xff]
    %1039 = vmatprep.subr.mxu0 %v1036
    %1040 = vmatpush1.msra.mxu0 %v1035
    %1041 = vmatprep.subr.mxu0 %v1032
    %1042 = vmatpush1.msra.mxu0 %v1031
    %1043 = vmatprep.subr.mxu0 %v1028
    %1044 = vmatpush1.msra.mxu0 %v1027
    %1045 = vmatprep.subr.mxu0 %v1024
    %1046 = vmatpush1.msra.mxu0 %v1023
    %1047 = vmatprep.subr.mxu0 %v1020
    %1048 = vmatpush1.msra.mxu0 %v1019
    %1049 = vmatprep.subr.mxu0 %v1016
    %1050 = vmatpush1.msra.mxu0 %v1015
    %1051 = vmatprep.subr.mxu0 %v1012
    %1052 = vmatpush1.msra.mxu0 %v1011
    %1053 = vmatprep.subr.mxu0 %v1008
    %1054 = vmatpush1.msra.mxu0 %v1007
    %1055 = vmatprep.subr.mxu0 %v1004
    %1056 = vmatpush1.msra.mxu0 %v1003
    %1057 = vmatprep.subr.mxu0 %v1000
    %1058 = vmatpush1.msra.mxu0 %v999
    %1059 = vmatprep.subr.mxu0 %v996
    %1060 = vmatpush1.msra.mxu0 %v995
    %1061 = vmatprep.subr.mxu0 %v992
    %1062 = vmatpush1.msra.mxu0 %v991
    %1063 = vmatprep.subr.mxu0 %v988
    %1064 = vmatpush1.msra.mxu0 %v987
    %1065 = vmatprep.subr.mxu0 %v984
    %1066 = vmatpush1.msra.mxu0 %v983
    %1067 = vmatprep.subr.mxu0 %v980
    %1068 = vmatpush1.msra.mxu0 %v979
    %1069 = vmatprep.subr.mxu0 %v976
    %1070 = vmatpush1.msra.mxu0 %v975
    %1071 = vmatprep.subr.mxu0 0.0
    %1072 = vmatpush2.msra.mxu0 0.0
    %1073 = vmatprep.subr.mxu0 0.0
    %1074 = vmatpush2.msra.mxu0 0.0
    %1075 = vmatprep.subr.mxu0 0.0
    %1076 = vmatpush2.msra.mxu0 0.0
    %1077 = vmatprep.subr.mxu0 0.0
    %1078 = vmatpush2.msra.mxu0 0.0
    %1079 = vmatprep.subr.mxu0 0.0
    %1080 = vmatpush2.msra.mxu0 0.0
    %1081 = vmatprep.subr.mxu0 0.0
    %1082 = vmatpush2.msra.mxu0 0.0
    %1083 = vmatprep.subr.mxu0 0.0
    %1084 = vmatpush2.msra.mxu0 0.0
    %1085 = vmatprep.subr.mxu0 0.0
    %1086 = vmatpush2.msra.mxu0 0.0
    %1087 = vmatprep.subr.mxu0 0.0
    %1088 = vmatpush2.msra.mxu0 0.0
    %1089 = vmatprep.subr.mxu0 0.0
    %1090 = vmatpush2.msra.mxu0 0.0
    %1091 = vmatprep.subr.mxu0 0.0
    %1092 = vmatpush2.msra.mxu0 0.0
    %1093 = vmatprep.subr.mxu0 0.0
    %1094 = vmatpush2.msra.mxu0 0.0
    %1095 = vmatprep.subr.mxu0 0.0
    %1096 = vmatpush2.msra.mxu0 0.0
    %1097 = vmatprep.subr.mxu0 0.0
    %1098 = vmatpush2.msra.mxu0 0.0
    %1099 = vmatprep.subr.mxu0 0.0
    %1100 = vmatpush2.msra.mxu0 0.0
    %1101 = vmatprep.subr.mxu0 0.0
    %1102 = vmatpush2.msra.mxu0 0.0
    %1103 = vmatprep.mubr.f32.mxu0 0.0
    %1104 = vmatmul.mubr.f32.gmra.mxu0 0.0
    %v1105 = vpop.f32.mrf.mxu0
    %v1106 = vadd.f32 0.0, %v1105
    %v1107 = vpop.f32.mrf.mxu0
    %v1108 = vadd.f32 0.0, %v1107
    %1109 = vdwg.mxu0
    %1110 = vmatprep.subr.mxu0 %v1038
    %1111 = vmatpush1.msra.mxu0 %v1037
    %1112 = vmatprep.subr.mxu0 %v1034
    %1113 = vmatpush1.msra.mxu0 %v1033
    %1114 = vmatprep.subr.mxu0 %v1030
    %1115 = vmatpush1.msra.mxu0 %v1029
    %1116 = vmatprep.subr.mxu0 %v1026
    %1117 = vmatpush1.msra.mxu0 %v1025
    %1118 = vmatprep.subr.mxu0 %v1022
    %1119 = vmatpush1.msra.mxu0 %v1021
    %1120 = vmatprep.subr.mxu0 %v1018
    %1121 = vmatpush1.msra.mxu0 %v1017
    %1122 = vmatprep.subr.mxu0 %v1014
    %1123 = vmatpush1.msra.mxu0 %v1013
    %1124 = vmatprep.subr.mxu0 %v1010
    %1125 = vmatpush1.msra.mxu0 %v1009
    %1126 = vmatprep.subr.mxu0 %v1006
    %1127 = vmatpush1.msra.mxu0 %v1005
    %1128 = vmatprep.subr.mxu0 %v1002
    %1129 = vmatpush1.msra.mxu0 %v1001
    %1130 = vmatprep.subr.mxu0 %v998
    %1131 = vmatpush1.msra.mxu0 %v997
    %1132 = vmatprep.subr.mxu0 %v994
    %1133 = vmatpush1.msra.mxu0 %v993
    %1134 = vmatprep.subr.mxu0 %v990
    %1135 = vmatpush1.msra.mxu0 %v989
    %1136 = vmatprep.subr.mxu0 %v986
    %1137 = vmatpush1.msra.mxu0 %v985
    %1138 = vmatprep.subr.mxu0 %v982
    %1139 = vmatpush1.msra.mxu0 %v981
    %1140 = vmatprep.subr.mxu0 %v978
    %1141 = vmatpush1.msra.mxu0 %v977
    %1142 = vmatprep.subr.mxu0 0.0
    %1143 = vmatpush2.msra.mxu0 0.0
    %1144 = vmatprep.subr.mxu0 0.0
    %1145 = vmatpush2.msra.mxu0 0.0
    %1146 = vmatprep.subr.mxu0 0.0
    %1147 = vmatpush2.msra.mxu0 0.0
    %1148 = vmatprep.subr.mxu0 0.0
    %1149 = vmatpush2.msra.mxu0 0.0
    %1150 = vmatprep.subr.mxu0 0.0
    %1151 = vmatpush2.msra.mxu0 0.0
    %1152 = vmatprep.subr.mxu0 0.0
    %1153 = vmatpush2.msra.mxu0 0.0
    %1154 = vmatprep.subr.mxu0 0.0
    %1155 = vmatpush2.msra.mxu0 0.0
    %1156 = vmatprep.subr.mxu0 0.0
    %1157 = vmatpush2.msra.mxu0 0.0
    %1158 = vmatprep.subr.mxu0 0.0
    %1159 = vmatpush2.msra.mxu0 0.0
    %1160 = vmatprep.subr.mxu0 0.0
    %1161 = vmatpush2.msra.mxu0 0.0
    %1162 = vmatprep.subr.mxu0 0.0
    %1163 = vmatpush2.msra.mxu0 0.0
    %1164 = vmatprep.subr.mxu0 0.0
    %1165 = vmatpush2.msra.mxu0 0.0
    %1166 = vmatprep.subr.mxu0 0.0
    %1167 = vmatpush2.msra.mxu0 0.0
    %1168 = vmatprep.subr.mxu0 0.0
    %1169 = vmatpush2.msra.mxu0 0.0
    %1170 = vmatprep.subr.mxu0 0.0
    %1171 = vmatpush2.msra.mxu0 0.0
    %1172 = vmatprep.subr.mxu0 0.0
    %1173 = vmatpush2.msra.mxu0 0.0
    %1174 = vmatprep.mubr.f32.mxu0 0.0
    %1175 = vmatmul.mubr.f32.gmra.mxu0 0.0
    %v1176 = vpop.f32.mrf.mxu0
    %v1177 = vadd.f32 0.0, %v1176
    %v1178 = vpop.f32.mrf.mxu0
    %v1179 = vadd.f32 0.0, %v1178
    %1180 = vdwg.mxu0
    %v1181 = vadd.f32 %v971, %v1106
    %v1182 = vadd.f32 %v972, %v1108
    %v1183 = vadd.f32 %v973, %v1177
    %v1184 = vadd.f32 %v974, %v1179
    %v1185 = vmul.f32 %v1181, 0.5
    %v1186 = vtanh.pop %v1185
    %v1187 = vmul.f32 %v1186, 0.5
    %v1188 = vadd.f32 %v1187, 0.5
    %v1189 = vmul.f32 %v1182, 0.5
    %v1190 = vtanh.pop %v1189
    %v1191 = vmul.f32 %v1190, 0.5
    %v1192 = vadd.f32 %v1191, 0.5
    %v1193 = vtanh.pop %v1183
    %v1194 = vmul.f32 %v1184, 0.5
    %v1195 = vtanh.pop %v1194
    %v1196 = vmul.f32 %v1195, 0.5
    %v1197 = vadd.f32 %v1196, 0.5
    %v1198 = vmul.f32 %v1192, 0.0
    %v1199 = vmul.f32 %v1188, %v1193
    %v1200 = vadd.f32 %v1198, %v1199
    %v1201 = vtanh.pop %v1200
    %v1202 = vmul.f32 %v1197, %v1201
    %v1203 = vld [vmem:[#allocation2 + $0x20] sm:$0xff]
    %v1204 = vld [vmem:[#allocation2 + $0x28] sm:$0xff]
    %v1205 = vld [vmem:[#allocation2 + $0x30] sm:$0xff]
    %v1206 = vld [vmem:[#allocation2 + $0x38] sm:$0xff]
    %1207 = vmatprep.subr.mxu0 %v1036
    %1208 = vmatpush1.msra.mxu0 %v1035
    %1209 = vmatprep.subr.mxu0 %v1032
    %1210 = vmatpush1.msra.mxu0 %v1031
    %1211 = vmatprep.subr.mxu0 %v1028
    %1212 = vmatpush1.msra.mxu0 %v1027
    %1213 = vmatprep.subr.mxu0 %v1024
    %1214 = vmatpush1.msra.mxu0 %v1023
    %1215 = vmatprep.subr.mxu0 %v1020
    %1216 = vmatpush1.msra.mxu0 %v1019
    %1217 = vmatprep.subr.mxu0 %v1016
    %1218 = vmatpush1.msra.mxu0 %v1015
    %1219 = vmatprep.subr.mxu0 %v1012
    %1220 = vmatpush1.msra.mxu0 %v1011
    %1221 = vmatprep.subr.mxu0 %v1008
    %1222 = vmatpush1.msra.mxu0 %v1007
    %1223 = vmatprep.subr.mxu0 %v1004
    %1224 = vmatpush1.msra.mxu0 %v1003
    %1225 = vmatprep.subr.mxu0 %v1000
    %1226 = vmatpush1.msra.mxu0 %v999
    %1227 = vmatprep.subr.mxu0 %v996
    %1228 = vmatpush1.msra.mxu0 %v995
    %1229 = vmatprep.subr.mxu0 %v992
    %1230 = vmatpush1.msra.mxu0 %v991
    %1231 = vmatprep.subr.mxu0 %v988
    %1232 = vmatpush1.msra.mxu0 %v987
    %1233 = vmatprep.subr.mxu0 %v984
    %1234 = vmatpush1.msra.mxu0 %v983
    %1235 = vmatprep.subr.mxu0 %v980
    %1236 = vmatpush1.msra.mxu0 %v979
    %1237 = vmatprep.subr.mxu0 %v976
    %1238 = vmatpush1.msra.mxu0 %v975
    %1239 = vmatprep.subr.mxu0 0.0
    %1240 = vmatpush2.msra.mxu0 0.0
    %1241 = vmatprep.subr.mxu0 0.0
    %1242 = vmatpush2.msra.mxu0 0.0
    %1243 = vmatprep.subr.mxu0 0.0
    %1244 = vmatpush2.msra.mxu0 0.0
    %1245 = vmatprep.subr.mxu0 0.0
    %1246 = vmatpush2.msra.mxu0 0.0
    %1247 = vmatprep.subr.mxu0 0.0
    %1248 = vmatpush2.msra.mxu0 0.0
    %1249 = vmatprep.subr.mxu0 0.0
    %1250 = vmatpush2.msra.mxu0 0.0
    %1251 = vmatprep.subr.mxu0 0.0
    %1252 = vmatpush2.msra.mxu0 0.0
    %1253 = vmatprep.subr.mxu0 0.0
    %1254 = vmatpush2.msra.mxu0 0.0
    %1255 = vmatprep.subr.mxu0 0.0
    %1256 = vmatpush2.msra.mxu0 0.0
    %1257 = vmatprep.subr.mxu0 0.0
    %1258 = vmatpush2.msra.mxu0 0.0
    %1259 = vmatprep.subr.mxu0 0.0
    %1260 = vmatpush2.msra.mxu0 0.0
    %1261 = vmatprep.subr.mxu0 0.0
    %1262 = vmatpush2.msra.mxu0 0.0
    %1263 = vmatprep.subr.mxu0 0.0
    %1264 = vmatpush2.msra.mxu0 0.0
    %1265 = vmatprep.subr.mxu0 0.0
    %1266 = vmatpush2.msra.mxu0 0.0
    %1267 = vmatprep.subr.mxu0 0.0
    %1268 = vmatpush2.msra.mxu0 0.0
    %1269 = vmatprep.subr.mxu0 0.0
    %1270 = vmatpush2.msra.mxu0 0.0
    %1271 = vmatprep.mubr.f32.mxu0 0.0
    %1272 = vmatmul.mubr.f32.gmra.mxu0 %v1202
    %v1273 = vpop.f32.mrf.mxu0
    %v1274 = vadd.f32 0.0, %v1273
    %v1275 = vpop.f32.mrf.mxu0
    %v1276 = vadd.f32 0.0, %v1275
    %1277 = vdwg.mxu0
    %1278 = vmatprep.subr.mxu0 %v1038
    %1279 = vmatpush1.msra.mxu0 %v1037
    %1280 = vmatprep.subr.mxu0 %v1034
    %1281 = vmatpush1.msra.mxu0 %v1033
    %1282 = vmatprep.subr.mxu0 %v1030
    %1283 = vmatpush1.msra.mxu0 %v1029
    %1284 = vmatprep.subr.mxu0 %v1026
    %1285 = vmatpush1.msra.mxu0 %v1025
    %1286 = vmatprep.subr.mxu0 %v1022
    %1287 = vmatpush1.msra.mxu0 %v1021
    %1288 = vmatprep.subr.mxu0 %v1018
    %1289 = vmatpush1.msra.mxu0 %v1017
    %1290 = vmatprep.subr.mxu0 %v1014
    %1291 = vmatpush1.msra.mxu0 %v1013
    %1292 = vmatprep.subr.mxu0 %v1010
    %1293 = vmatpush1.msra.mxu0 %v1009
    %1294 = vmatprep.subr.mxu0 %v1006
    %1295 = vmatpush1.msra.mxu0 %v1005
    %1296 = vmatprep.subr.mxu0 %v1002
    %1297 = vmatpush1.msra.mxu0 %v1001
    %1298 = vmatprep.subr.mxu0 %v998
    %1299 = vmatpush1.msra.mxu0 %v997
    %1300 = vmatprep.subr.mxu0 %v994
    %1301 = vmatpush1.msra.mxu0 %v993
    %1302 = vmatprep.subr.mxu0 %v990
    %1303 = vmatpush1.msra.mxu0 %v989
    %1304 = vmatprep.subr.mxu0 %v986
    %1305 = vmatpush1.msra.mxu0 %v985
    %1306 = vmatprep.subr.mxu0 %v982
    %1307 = vmatpush1.msra.mxu0 %v981
    %1308 = vmatprep.subr.mxu0 %v978
    %1309 = vmatpush1.msra.mxu0 %v977
    %1310 = vmatprep.subr.mxu0 0.0
    %1311 = vmatpush2.msra.mxu0 0.0
    %1312 = vmatprep.subr.mxu0 0.0
    %1313 = vmatpush2.msra.mxu0 0.0
    %1314 = vmatprep.subr.mxu0 0.0
    %1315 = vmatpush2.msra.mxu0 0.0
    %1316 = vmatprep.subr.mxu0 0.0
    %1317 = vmatpush2.msra.mxu0 0.0
    %1318 = vmatprep.subr.mxu0 0.0
    %1319 = vmatpush2.msra.mxu0 0.0
    %1320 = vmatprep.subr.mxu0 0.0
    %1321 = vmatpush2.msra.mxu0 0.0
    %1322 = vmatprep.subr.mxu0 0.0
    %1323 = vmatpush2.msra.mxu0 0.0
    %1324 = vmatprep.subr.mxu0 0.0
    %1325 = vmatpush2.msra.mxu0 0.0
    %1326 = vmatprep.subr.mxu0 0.0
    %1327 = vmatpush2.msra.mxu0 0.0
    %1328 = vmatprep.subr.mxu0 0.0
    %1329 = vmatpush2.msra.mxu0 0.0
    %1330 = vmatprep.subr.mxu0 0.0
    %1331 = vmatpush2.msra.mxu0 0.0
    %1332 = vmatprep.subr.mxu0 0.0
    %1333 = vmatpush2.msra.mxu0 0.0
    %1334 = vmatprep.subr.mxu0 0.0
    %1335 = vmatpush2.msra.mxu0 0.0
    %1336 = vmatprep.subr.mxu0 0.0
    %1337 = vmatpush2.msra.mxu0 0.0
    %1338 = vmatprep.subr.mxu0 0.0
    %1339 = vmatpush2.msra.mxu0 0.0
    %1340 = vmatprep.subr.mxu0 0.0
    %1341 = vmatpush2.msra.mxu0 0.0
    %1342 = vmatprep.mubr.f32.mxu0 0.0
    %1343 = vmatmul.mubr.f32.gmra.mxu0 %v1202
    %v1344 = vpop.f32.mrf.mxu0
    %v1345 = vadd.f32 0.0, %v1344
    %v1346 = vpop.f32.mrf.mxu0
    %v1347 = vadd.f32 0.0, %v1346
    %1348 = vdwg.mxu0
    %v1349 = vadd.f32 %v1203, %v1274
    %v1350 = vadd.f32 %v1204, %v1276
    %v1351 = vadd.f32 %v1205, %v1345
    %v1352 = vadd.f32 %v1206, %v1347
    %v1353 = vmul.f32 %v1349, 0.5
    %v1354 = vtanh.pop %v1353
    %v1355 = vmul.f32 %v1354, 0.5
    %v1356 = vadd.f32 %v1355, 0.5
    %v1357 = vmul.f32 %v1350, 0.5
    %v1358 = vtanh.pop %v1357
    %v1359 = vmul.f32 %v1358, 0.5
    %v1360 = vadd.f32 %v1359, 0.5
    %v1361 = vtanh.pop %v1351
    %v1362 = vmul.f32 %v1352, 0.5
    %v1363 = vtanh.pop %v1362
    %v1364 = vmul.f32 %v1363, 0.5
    %v1365 = vadd.f32 %v1364, 0.5
    %v1366 = vmul.f32 %v1360, %v1200
    %v1367 = vmul.f32 %v1356, %v1361
    %v1368 = vadd.f32 %v1366, %v1367
    %v1369 = vtanh.pop %v1368
    %v1370 = vmul.f32 %v1365, %v1369
    %v1371 = vld [vmem:[#allocation2 + $0x40] sm:$0xff]
    %v1372 = vld [vmem:[#allocation2 + $0x48] sm:$0xff]
    %v1373 = vld [vmem:[#allocation2 + $0x50] sm:$0xff]
    %v1374 = vld [vmem:[#allocation2 + $0x58] sm:$0xff]
    %1375 = vmatprep.subr.mxu0 %v1036
    %1376 = vmatpush1.msra.mxu0 %v1035
    %1377 = vmatprep.subr.mxu0 %v1032
    %1378 = vmatpush1.msra.mxu0 %v1031
    %1379 = vmatprep.subr.mxu0 %v1028
    %1380 = vmatpush1.msra.mxu0 %v1027
    %1381 = vmatprep.subr.mxu0 %v1024
    %1382 = vmatpush1.msra.mxu0 %v1023
    %1383 = vmatprep.subr.mxu0 %v1020
    %1384 = vmatpush1.msra.mxu0 %v1019
    %1385 = vmatprep.subr.mxu0 %v1016
    %1386 = vmatpush1.msra.mxu0 %v1015
    %1387 = vmatprep.subr.mxu0 %v1012
    %1388 = vmatpush1.msra.mxu0 %v1011
    %1389 = vmatprep.subr.mxu0 %v1008
    %1390 = vmatpush1.msra.mxu0 %v1007
    %1391 = vmatprep.subr.mxu0 %v1004
    %1392 = vmatpush1.msra.mxu0 %v1003
    %1393 = vmatprep.subr.mxu0 %v1000
    %1394 = vmatpush1.msra.mxu0 %v999
    %1395 = vmatprep.subr.mxu0 %v996
    %1396 = vmatpush1.msra.mxu0 %v995
    %1397 = vmatprep.subr.mxu0 %v992
    %1398 = vmatpush1.msra.mxu0 %v991
    %1399 = vmatprep.subr.mxu0 %v988
    %1400 = vmatpush1.msra.mxu0 %v987
    %1401 = vmatprep.subr.mxu0 %v984
    %1402 = vmatpush1.msra.mxu0 %v983
    %1403 = vmatprep.subr.mxu0 %v980
    %1404 = vmatpush1.msra.mxu0 %v979
    %1405 = vmatprep.subr.mxu0 %v976
    %1406 = vmatpush1.msra.mxu0 %v975
    %1407 = vmatprep.subr.mxu0 0.0
    %1408 = vmatpush2.msra.mxu0 0.0
    %1409 = vmatprep.subr.mxu0 0.0
    %1410 = vmatpush2.msra.mxu0 0.0
    %1411 = vmatprep.subr.mxu0 0.0
    %1412 = vmatpush2.msra.mxu0 0.0
    %1413 = vmatprep.subr.mxu0 0.0
    %1414 = vmatpush2.msra.mxu0 0.0
    %1415 = vmatprep.subr.mxu0 0.0
    %1416 = vmatpush2.msra.mxu0 0.0
    %1417 = vmatprep.subr.mxu0 0.0
    %1418 = vmatpush2.msra.mxu0 0.0
    %1419 = vmatprep.subr.mxu0 0.0
    %1420 = vmatpush2.msra.mxu0 0.0
    %1421 = vmatprep.subr.mxu0 0.0
    %1422 = vmatpush2.msra.mxu0 0.0
    %1423 = vmatprep.subr.mxu0 0.0
    %1424 = vmatpush2.msra.mxu0 0.0
    %1425 = vmatprep.subr.mxu0 0.0
    %1426 = vmatpush2.msra.mxu0 0.0
    %1427 = vmatprep.subr.mxu0 0.0
    %1428 = vmatpush2.msra.mxu0 0.0
    %1429 = vmatprep.subr.mxu0 0.0
    %1430 = vmatpush2.msra.mxu0 0.0
    %1431 = vmatprep.subr.mxu0 0.0
    %1432 = vmatpush2.msra.mxu0 0.0
    %1433 = vmatprep.subr.mxu0 0.0
    %1434 = vmatpush2.msra.mxu0 0.0
    %1435 = vmatprep.subr.mxu0 0.0
    %1436 = vmatpush2.msra.mxu0 0.0
    %1437 = vmatprep.subr.mxu0 0.0
    %1438 = vmatpush2.msra.mxu0 0.0
    %1439 = vmatprep.mubr.f32.mxu0 0.0
    %1440 = vmatmul.mubr.f32.gmra.mxu0 %v1370
    %v1441 = vpop.f32.mrf.mxu0
    %v1442 = vadd.f32 0.0, %v1441
    %v1443 = vpop.f32.mrf.mxu0
    %v1444 = vadd.f32 0.0, %v1443
    %1445 = vdwg.mxu0
    %1446 = vmatprep.subr.mxu0 %v1038
    %1447 = vmatpush1.msra.mxu0 %v1037
    %1448 = vmatprep.subr.mxu0 %v1034
    %1449 = vmatpush1.msra.mxu0 %v1033
    %1450 = vmatprep.subr.mxu0 %v1030
    %1451 = vmatpush1.msra.mxu0 %v1029
    %1452 = vmatprep.subr.mxu0 %v1026
    %1453 = vmatpush1.msra.mxu0 %v1025
    %1454 = vmatprep.subr.mxu0 %v1022
    %1455 = vmatpush1.msra.mxu0 %v1021
    %1456 = vmatprep.subr.mxu0 %v1018
    %1457 = vmatpush1.msra.mxu0 %v1017
    %1458 = vmatprep.subr.mxu0 %v1014
    %1459 = vmatpush1.msra.mxu0 %v1013
    %1460 = vmatprep.subr.mxu0 %v1010
    %1461 = vmatpush1.msra.mxu0 %v1009
    %1462 = vmatprep.subr.mxu0 %v1006
    %1463 = vmatpush1.msra.mxu0 %v1005
    %1464 = vmatprep.subr.mxu0 %v1002
    %1465 = vmatpush1.msra.mxu0 %v1001
    %1466 = vmatprep.subr.mxu0 %v998
    %1467 = vmatpush1.msra.mxu0 %v997
    %1468 = vmatprep.subr.mxu0 %v994
    %1469 = vmatpush1.msra.mxu0 %v993
    %1470 = vmatprep.subr.mxu0 %v990
    %1471 = vmatpush1.msra.mxu0 %v989
    %1472 = vmatprep.subr.mxu0 %v986
    %1473 = vmatpush1.msra.mxu0 %v985
    %1474 = vmatprep.subr.mxu0 %v982
    %1475 = vmatpush1.msra.mxu0 %v981
    %1476 = vmatprep.subr.mxu0 %v978
    %1477 = vmatpush1.msra.mxu0 %v977
    %1478 = vmatprep.subr.mxu0 0.0
    %1479 = vmatpush2.msra.mxu0 0.0
    %1480 = vmatprep.subr.mxu0 0.0
    %1481 = vmatpush2.msra.mxu0 0.0
    %1482 = vmatprep.subr.mxu0 0.0
    %1483 = vmatpush2.msra.mxu0 0.0
    %1484 = vmatprep.subr.mxu0 0.0
    %1485 = vmatpush2.msra.mxu0 0.0
    %1486 = vmatprep.subr.mxu0 0.0
    %1487 = vmatpush2.msra.mxu0 0.0
    %1488 = vmatprep.subr.mxu0 0.0
    %1489 = vmatpush2.msra.mxu0 0.0
    %1490 = vmatprep.subr.mxu0 0.0
    %1491 = vmatpush2.msra.mxu0 0.0
    %1492 = vmatprep.subr.mxu0 0.0
    %1493 = vmatpush2.msra.mxu0 0.0
    %1494 = vmatprep.subr.mxu0 0.0
    %1495 = vmatpush2.msra.mxu0 0.0
    %1496 = vmatprep.subr.mxu0 0.0
    %1497 = vmatpush2.msra.mxu0 0.0
    %1498 = vmatprep.subr.mxu0 0.0
    %1499 = vmatpush2.msra.mxu0 0.0
    %1500 = vmatprep.subr.mxu0 0.0
    %1501 = vmatpush2.msra.mxu0 0.0
    %1502 = vmatprep.subr.mxu0 0.0
    %1503 = vmatpush2.msra.mxu0 0.0
    %1504 = vmatprep.subr.mxu0 0.0
    %1505 = vmatpush2.msra.mxu0 0.0
    %1506 = vmatprep.subr.mxu0 0.0
    %1507 = vmatpush2.msra.mxu0 0.0
    %1508 = vmatprep.subr.mxu0 0.0
    %1509 = vmatpush2.msra.mxu0 0.0
    %1510 = vmatprep.mubr.f32.mxu0 0.0
    %1511 = vmatmul.mubr.f32.gmra.mxu0 %v1370
    %v1512 = vpop.f32.mrf.mxu0
    %v1513 = vadd.f32 0.0, %v1512
    %v1514 = vpop.f32.mrf.mxu0
    %v1515 = vadd.f32 0.0, %v1514
    %1516 = vdwg.mxu0
    %v1517 = vadd.f32 %v1371, %v1442
    %v1518 = vadd.f32 %v1372, %v1444
    %v1519 = vadd.f32 %v1373, %v1513
    %v1520 = vadd.f32 %v1374, %v1515
    %v1521 = vmul.f32 %v1517, 0.5
    %v1522 = vtanh.pop %v1521
    %v1523 = vmul.f32 %v1522, 0.5
    %v1524 = vadd.f32 %v1523, 0.5
    %v1525 = vmul.f32 %v1518, 0.5
    %v1526 = vtanh.pop %v1525
    %v1527 = vmul.f32 %v1526, 0.5
    %v1528 = vadd.f32 %v1527, 0.5
    %v1529 = vtanh.pop %v1519
    %v1530 = vmul.f32 %v1520, 0.5
    %v1531 = vtanh.pop %v1530
    %v1532 = vmul.f32 %v1531, 0.5
    %v1533 = vadd.f32 %v1532, 0.5
    %v1534 = vmul.f32 %v1528, %v1368
    %v1535 = vmul.f32 %v1524, %v1529
    %v1536 = vadd.f32 %v1534, %v1535
    %v1537 = vtanh.pop %v1536
    %v1538 = vmul.f32 %v1533, %v1537
    %v1539 = vld [vmem:[#allocation2 + $0x60] sm:$0xff]
    %v1540 = vld [vmem:[#allocation2 + $0x68] sm:$0xff]
    %v1541 = vld [vmem:[#allocation2 + $0x70] sm:$0xff]
    %v1542 = vld [vmem:[#allocation2 + $0x78] sm:$0xff]
    %1543 = vmatprep.subr.mxu0 %v1036
    %1544 = vmatpush1.msra.mxu0 %v1035
    %1545 = vmatprep.subr.mxu0 %v1032
    %1546 = vmatpush1.msra.mxu0 %v1031
    %1547 = vmatprep.subr.mxu0 %v1028
    %1548 = vmatpush1.msra.mxu0 %v1027
    %1549 = vmatprep.subr.mxu0 %v1024
    %1550 = vmatpush1.msra.mxu0 %v1023
    %1551 = vmatprep.subr.mxu0 %v1020
    %1552 = vmatpush1.msra.mxu0 %v1019
    %1553 = vmatprep.subr.mxu0 %v1016
    %1554 = vmatpush1.msra.mxu0 %v1015
    %1555 = vmatprep.subr.mxu0 %v1012
    %1556 = vmatpush1.msra.mxu0 %v1011
    %1557 = vmatprep.subr.mxu0 %v1008
    %1558 = vmatpush1.msra.mxu0 %v1007
    %1559 = vmatprep.subr.mxu0 %v1004
    %1560 = vmatpush1.msra.mxu0 %v1003
    %1561 = vmatprep.subr.mxu0 %v1000
    %1562 = vmatpush1.msra.mxu0 %v999
    %1563 = vmatprep.subr.mxu0 %v996
    %1564 = vmatpush1.msra.mxu0 %v995
    %1565 = vmatprep.subr.mxu0 %v992
    %1566 = vmatpush1.msra.mxu0 %v991
    %1567 = vmatprep.subr.mxu0 %v988
    %1568 = vmatpush1.msra.mxu0 %v987
    %1569 = vmatprep.subr.mxu0 %v984
    %1570 = vmatpush1.msra.mxu0 %v983
    %1571 = vmatprep.subr.mxu0 %v980
    %1572 = vmatpush1.msra.mxu0 %v979
    %1573 = vmatprep.subr.mxu0 %v976
    %1574 = vmatpush1.msra.mxu0 %v975
    %1575 = vmatprep.subr.mxu0 0.0
    %1576 = vmatpush2.msra.mxu0 0.0
    %1577 = vmatprep.subr.mxu0 0.0
    %1578 = vmatpush2.msra.mxu0 0.0
    %1579 = vmatprep.subr.mxu0 0.0
    %1580 = vmatpush2.msra.mxu0 0.0
    %1581 = vmatprep.subr.mxu0 0.0
    %1582 = vmatpush2.msra.mxu0 0.0
    %1583 = vmatprep.subr.mxu0 0.0
    %1584 = vmatpush2.msra.mxu0 0.0
    %1585 = vmatprep.subr.mxu0 0.0
    %1586 = vmatpush2.msra.mxu0 0.0
    %1587 = vmatprep.subr.mxu0 0.0
    %1588 = vmatpush2.msra.mxu0 0.0
    %1589 = vmatprep.subr.mxu0 0.0
    %1590 = vmatpush2.msra.mxu0 0.0
    %1591 = vmatprep.subr.mxu0 0.0
    %1592 = vmatpush2.msra.mxu0 0.0
    %1593 = vmatprep.subr.mxu0 0.0
    %1594 = vmatpush2.msra.mxu0 0.0
    %1595 = vmatprep.subr.mxu0 0.0
    %1596 = vmatpush2.msra.mxu0 0.0
    %1597 = vmatprep.subr.mxu0 0.0
    %1598 = vmatpush2.msra.mxu0 0.0
    %1599 = vmatprep.subr.mxu0 0.0
    %1600 = vmatpush2.msra.mxu0 0.0
    %1601 = vmatprep.subr.mxu0 0.0
    %1602 = vmatpush2.msra.mxu0 0.0
    %1603 = vmatprep.subr.mxu0 0.0
    %1604 = vmatpush2.msra.mxu0 0.0
    %1605 = vmatprep.subr.mxu0 0.0
    %1606 = vmatpush2.msra.mxu0 0.0
    %1607 = vmatprep.mubr.f32.mxu0 0.0
    %1608 = vmatmul.mubr.f32.gmra.mxu0 %v1538
    %v1609 = vpop.f32.mrf.mxu0
    %v1610 = vadd.f32 0.0, %v1609
    %v1611 = vpop.f32.mrf.mxu0
    %v1612 = vadd.f32 0.0, %v1611
    %1613 = vdwg.mxu0
    %1614 = vmatprep.subr.mxu0 %v1038
    %1615 = vmatpush1.msra.mxu0 %v1037
    %1616 = vmatprep.subr.mxu0 %v1034
    %1617 = vmatpush1.msra.mxu0 %v1033
    %1618 = vmatprep.subr.mxu0 %v1030
    %1619 = vmatpush1.msra.mxu0 %v1029
    %1620 = vmatprep.subr.mxu0 %v1026
    %1621 = vmatpush1.msra.mxu0 %v1025
    %1622 = vmatprep.subr.mxu0 %v1022
    %1623 = vmatpush1.msra.mxu0 %v1021
    %1624 = vmatprep.subr.mxu0 %v1018
    %1625 = vmatpush1.msra.mxu0 %v1017
    %1626 = vmatprep.subr.mxu0 %v1014
    %1627 = vmatpush1.msra.mxu0 %v1013
    %1628 = vmatprep.subr.mxu0 %v1010
    %1629 = vmatpush1.msra.mxu0 %v1009
    %1630 = vmatprep.subr.mxu0 %v1006
    %1631 = vmatpush1.msra.mxu0 %v1005
    %1632 = vmatprep.subr.mxu0 %v1002
    %1633 = vmatpush1.msra.mxu0 %v1001
    %1634 = vmatprep.subr.mxu0 %v998
    %1635 = vmatpush1.msra.mxu0 %v997
    %1636 = vmatprep.subr.mxu0 %v994
    %1637 = vmatpush1.msra.mxu0 %v993
    %1638 = vmatprep.subr.mxu0 %v990
    %1639 = vmatpush1.msra.mxu0 %v989
    %1640 = vmatprep.subr.mxu0 %v986
    %1641 = vmatpush1.msra.mxu0 %v985
    %1642 = vmatprep.subr.mxu0 %v982
    %1643 = vmatpush1.msra.mxu0 %v981
    %1644 = vmatprep.subr.mxu0 %v978
    %1645 = vmatpush1.msra.mxu0 %v977
    %1646 = vmatprep.subr.mxu0 0.0
    %1647 = vmatpush2.msra.mxu0 0.0
    %1648 = vmatprep.subr.mxu0 0.0
    %1649 = vmatpush2.msra.mxu0 0.0
    %1650 = vmatprep.subr.mxu0 0.0
    %1651 = vmatpush2.msra.mxu0 0.0
    %1652 = vmatprep.subr.mxu0 0.0
    %1653 = vmatpush2.msra.mxu0 0.0
    %1654 = vmatprep.subr.mxu0 0.0
    %1655 = vmatpush2.msra.mxu0 0.0
    %1656 = vmatprep.subr.mxu0 0.0
    %1657 = vmatpush2.msra.mxu0 0.0
    %1658 = vmatprep.subr.mxu0 0.0
    %1659 = vmatpush2.msra.mxu0 0.0
    %1660 = vmatprep.subr.mxu0 0.0
    %1661 = vmatpush2.msra.mxu0 0.0
    %1662 = vmatprep.subr.mxu0 0.0
    %1663 = vmatpush2.msra.mxu0 0.0
    %1664 = vmatprep.subr.mxu0 0.0
    %1665 = vmatpush2.msra.mxu0 0.0
    %1666 = vmatprep.subr.mxu0 0.0
    %1667 = vmatpush2.msra.mxu0 0.0
    %1668 = vmatprep.subr.mxu0 0.0
    %1669 = vmatpush2.msra.mxu0 0.0
    %1670 = vmatprep.subr.mxu0 0.0
    %1671 = vmatpush2.msra.mxu0 0.0
    %1672 = vmatprep.subr.mxu0 0.0
    %1673 = vmatpush2.msra.mxu0 0.0
    %1674 = vmatprep.subr.mxu0 0.0
    %1675 = vmatpush2.msra.mxu0 0.0
    %1676 = vmatprep.subr.mxu0 0.0
    %1677 = vmatpush2.msra.mxu0 0.0
    %1678 = vmatprep.mubr.f32.mxu0 0.0
    %1679 = vmatmul.mubr.f32.gmra.mxu0 %v1538
    %v1680 = vpop.f32.mrf.mxu0
    %v1681 = vadd.f32 0.0, %v1680
    %v1682 = vpop.f32.mrf.mxu0
    %v1683 = vadd.f32 0.0, %v1682
    %1684 = vdwg.mxu0
    %v1685 = vadd.f32 %v1539, %v1610
    %v1686 = vadd.f32 %v1540, %v1612
    %v1687 = vadd.f32 %v1541, %v1681
    %v1688 = vadd.f32 %v1542, %v1683
    %v1689 = vmul.f32 %v1685, 0.5
    %v1690 = vtanh.pop %v1689
    %v1691 = vmul.f32 %v1690, 0.5
    %v1692 = vadd.f32 %v1691, 0.5
    %v1693 = vmul.f32 %v1686, 0.5
    %v1694 = vtanh.pop %v1693
    %v1695 = vmul.f32 %v1694, 0.5
    %v1696 = vadd.f32 %v1695, 0.5
    %v1697 = vtanh.pop %v1687
    %v1698 = vmul.f32 %v1688, 0.5
    %v1699 = vtanh.pop %v1698
    %v1700 = vmul.f32 %v1699, 0.5
    %v1701 = vadd.f32 %v1700, 0.5
    %v1702 = vmul.f32 %v1696, %v1536
    %v1703 = vmul.f32 %v1692, %v1697
    %v1704 = vadd.f32 %v1702, %v1703
    %v1705 = vtanh.pop %v1704
    %v1706 = vmul.f32 %v1701, %v1705
    %v1707 = vld [vmem:[#allocation2 + $0x80] sm:$0xff]
    %v1708 = vld [vmem:[#allocation2 + $0x88] sm:$0xff]
    %v1709 = vld [vmem:[#allocation2 + $0x90] sm:$0xff]
    %v1710 = vld [vmem:[#allocation2 + $0x98] sm:$0xff]
    %1711 = vmatprep.subr.mxu0 %v1036
    %1712 = vmatpush1.msra.mxu0 %v1035
    %1713 = vmatprep.subr.mxu0 %v1032
    %1714 = vmatpush1.msra.mxu0 %v1031
    %1715 = vmatprep.subr.mxu0 %v1028
    %1716 = vmatpush1.msra.mxu0 %v1027
    %1717 = vmatprep.subr.mxu0 %v1024
    %1718 = vmatpush1.msra.mxu0 %v1023
    %1719 = vmatprep.subr.mxu0 %v1020
    %1720 = vmatpush1.msra.mxu0 %v1019
    %1721 = vmatprep.subr.mxu0 %v1016
    %1722 = vmatpush1.msra.mxu0 %v1015
    %1723 = vmatprep.subr.mxu0 %v1012
    %1724 = vmatpush1.msra.mxu0 %v1011
    %1725 = vmatprep.subr.mxu0 %v1008
    %1726 = vmatpush1.msra.mxu0 %v1007
    %1727 = vmatprep.subr.mxu0 %v1004
    %1728 = vmatpush1.msra.mxu0 %v1003
    %1729 = vmatprep.subr.mxu0 %v1000
    %1730 = vmatpush1.msra.mxu0 %v999
    %1731 = vmatprep.subr.mxu0 %v996
    %1732 = vmatpush1.msra.mxu0 %v995
    %1733 = vmatprep.subr.mxu0 %v992
    %1734 = vmatpush1.msra.mxu0 %v991
    %1735 = vmatprep.subr.mxu0 %v988
    %1736 = vmatpush1.msra.mxu0 %v987
    %1737 = vmatprep.subr.mxu0 %v984
    %1738 = vmatpush1.msra.mxu0 %v983
    %1739 = vmatprep.subr.mxu0 %v980
    %1740 = vmatpush1.msra.mxu0 %v979
    %1741 = vmatprep.subr.mxu0 %v976
    %1742 = vmatpush1.msra.mxu0 %v975
    %1743 = vmatprep.subr.mxu0 0.0
    %1744 = vmatpush2.msra.mxu0 0.0
    %1745 = vmatprep.subr.mxu0 0.0
    %1746 = vmatpush2.msra.mxu0 0.0
    %1747 = vmatprep.subr.mxu0 0.0
    %1748 = vmatpush2.msra.mxu0 0.0
    %1749 = vmatprep.subr.mxu0 0.0
    %1750 = vmatpush2.msra.mxu0 0.0
    %1751 = vmatprep.subr.mxu0 0.0
    %1752 = vmatpush2.msra.mxu0 0.0
    %1753 = vmatprep.subr.mxu0 0.0
    %1754 = vmatpush2.msra.mxu0 0.0
    %1755 = vmatprep.subr.mxu0 0.0
    %1756 = vmatpush2.msra.mxu0 0.0
    %1757 = vmatprep.subr.mxu0 0.0
    %1758 = vmatpush2.msra.mxu0 0.0
    %1759 = vmatprep.subr.mxu0 0.0
    %1760 = vmatpush2.msra.mxu0 0.0
    %1761 = vmatprep.subr.mxu0 0.0
    %1762 = vmatpush2.msra.mxu0 0.0
    %1763 = vmatprep.subr.mxu0 0.0
    %1764 = vmatpush2.msra.mxu0 0.0
    %1765 = vmatprep.subr.mxu0 0.0
    %1766 = vmatpush2.msra.mxu0 0.0
    %1767 = vmatprep.subr.mxu0 0.0
    %1768 = vmatpush2.msra.mxu0 0.0
    %1769 = vmatprep.subr.mxu0 0.0
    %1770 = vmatpush2.msra.mxu0 0.0
    %1771 = vmatprep.subr.mxu0 0.0
    %1772 = vmatpush2.msra.mxu0 0.0
    %1773 = vmatprep.subr.mxu0 0.0
    %1774 = vmatpush2.msra.mxu0 0.0
    %1775 = vmatprep.mubr.f32.mxu0 0.0
    %1776 = vmatmul.mubr.f32.gmra.mxu0 %v1706
    %v1777 = vpop.f32.mrf.mxu0
    %v1778 = vadd.f32 0.0, %v1777
    %v1779 = vpop.f32.mrf.mxu0
    %v1780 = vadd.f32 0.0, %v1779
    %1781 = vdwg.mxu0
    %1782 = vmatprep.subr.mxu0 %v1038
    %1783 = vmatpush1.msra.mxu0 %v1037
    %1784 = vmatprep.subr.mxu0 %v1034
    %1785 = vmatpush1.msra.mxu0 %v1033
    %1786 = vmatprep.subr.mxu0 %v1030
    %1787 = vmatpush1.msra.mxu0 %v1029
    %1788 = vmatprep.subr.mxu0 %v1026
    %1789 = vmatpush1.msra.mxu0 %v1025
    %1790 = vmatprep.subr.mxu0 %v1022
    %1791 = vmatpush1.msra.mxu0 %v1021
    %1792 = vmatprep.subr.mxu0 %v1018
    %1793 = vmatpush1.msra.mxu0 %v1017
    %1794 = vmatprep.subr.mxu0 %v1014
    %1795 = vmatpush1.msra.mxu0 %v1013
    %1796 = vmatprep.subr.mxu0 %v1010
    %1797 = vmatpush1.msra.mxu0 %v1009
    %1798 = vmatprep.subr.mxu0 %v1006
    %1799 = vmatpush1.msra.mxu0 %v1005
    %1800 = vmatprep.subr.mxu0 %v1002
    %1801 = vmatpush1.msra.mxu0 %v1001
    %1802 = vmatprep.subr.mxu0 %v998
    %1803 = vmatpush1.msra.mxu0 %v997
    %1804 = vmatprep.subr.mxu0 %v994
    %1805 = vmatpush1.msra.mxu0 %v993
    %1806 = vmatprep.subr.mxu0 %v990
    %1807 = vmatpush1.msra.mxu0 %v989
    %1808 = vmatprep.subr.mxu0 %v986
    %1809 = vmatpush1.msra.mxu0 %v985
    %1810 = vmatprep.subr.mxu0 %v982
    %1811 = vmatpush1.msra.mxu0 %v981
    %1812 = vmatprep.subr.mxu0 %v978
    %1813 = vmatpush1.msra.mxu0 %v977
    %1814 = vmatprep.subr.mxu0 0.0
    %1815 = vmatpush2.msra.mxu0 0.0
    %1816 = vmatprep.subr.mxu0 0.0
    %1817 = vmatpush2.msra.mxu0 0.0
    %1818 = vmatprep.subr.mxu0 0.0
    %1819 = vmatpush2.msra.mxu0 0.0
    %1820 = vmatprep.subr.mxu0 0.0
    %1821 = vmatpush2.msra.mxu0 0.0
    %1822 = vmatprep.subr.mxu0 0.0
    %1823 = vmatpush2.msra.mxu0 0.0
    %1824 = vmatprep.subr.mxu0 0.0
    %1825 = vmatpush2.msra.mxu0 0.0
    %1826 = vmatprep.subr.mxu0 0.0
    %1827 = vmatpush2.msra.mxu0 0.0
    %1828 = vmatprep.subr.mxu0 0.0
    %1829 = vmatpush2.msra.mxu0 0.0
    %1830 = vmatprep.subr.mxu0 0.0
    %1831 = vmatpush2.msra.mxu0 0.0
    %1832 = vmatprep.subr.mxu0 0.0
    %1833 = vmatpush2.msra.mxu0 0.0
    %1834 = vmatprep.subr.mxu0 0.0
    %1835 = vmatpush2.msra.mxu0 0.0
    %1836 = vmatprep.subr.mxu0 0.0
    %1837 = vmatpush2.msra.mxu0 0.0
    %1838 = vmatprep.subr.mxu0 0.0
    %1839 = vmatpush2.msra.mxu0 0.0
    %1840 = vmatprep.subr.mxu0 0.0
    %1841 = vmatpush2.msra.mxu0 0.0
    %1842 = vmatprep.subr.mxu0 0.0
    %1843 = vmatpush2.msra.mxu0 0.0
    %1844 = vmatprep.subr.mxu0 0.0
    %1845 = vmatpush2.msra.mxu0 0.0
    %1846 = vmatprep.mubr.f32.mxu0 0.0
    %1847 = vmatmul.mubr.f32.gmra.mxu0 %v1706
    %v1848 = vpop.f32.mrf.mxu0
    %v1849 = vadd.f32 0.0, %v1848
    %v1850 = vpop.f32.mrf.mxu0
    %v1851 = vadd.f32 0.0, %v1850
    %1852 = vdwg.mxu0
    %v1853 = vadd.f32 %v1707, %v1778
    %v1854 = vadd.f32 %v1708, %v1780
    %v1855 = vadd.f32 %v1709, %v1849
    %v1856 = vadd.f32 %v1710, %v1851
    %v1857 = vmul.f32 %v1853, 0.5
    %v1858 = vtanh.pop %v1857
    %v1859 = vmul.f32 %v1858, 0.5
    %v1860 = vadd.f32 %v1859, 0.5
    %v1861 = vmul.f32 %v1854, 0.5
    %v1862 = vtanh.pop %v1861
    %v1863 = vmul.f32 %v1862, 0.5
    %v1864 = vadd.f32 %v1863, 0.5
    %v1865 = vtanh.pop %v1855
    %v1866 = vmul.f32 %v1856, 0.5
    %v1867 = vtanh.pop %v1866
    %v1868 = vmul.f32 %v1867, 0.5
    %v1869 = vadd.f32 %v1868, 0.5
    %v1870 = vmul.f32 %v1864, %v1704
    %v1871 = vmul.f32 %v1860, %v1865
    %v1872 = vadd.f32 %v1870, %v1871
    %v1873 = vtanh.pop %v1872
    %v1874 = vmul.f32 %v1869, %v1873
    %v1875 = vld [vmem:[#allocation2 + $0xa0] sm:$0xff]
    %v1876 = vld [vmem:[#allocation2 + $0xa8] sm:$0xff]
    %v1877 = vld [vmem:[#allocation2 + $0xb0] sm:$0xff]
    %v1878 = vld [vmem:[#allocation2 + $0xb8] sm:$0xff]
    %1879 = vmatprep.subr.mxu0 %v1036
    %1880 = vmatpush1.msra.mxu0 %v1035
    %1881 = vmatprep.subr.mxu0 %v1032
    %1882 = vmatpush1.msra.mxu0 %v1031
    %1883 = vmatprep.subr.mxu0 %v1028
    %1884 = vmatpush1.msra.mxu0 %v1027
    %1885 = vmatprep.subr.mxu0 %v1024
    %1886 = vmatpush1.msra.mxu0 %v1023
    %1887 = vmatprep.subr.mxu0 %v1020
    %1888 = vmatpush1.msra.mxu0 %v1019
    %1889 = vmatprep.subr.mxu0 %v1016
    %1890 = vmatpush1.msra.mxu0 %v1015
    %1891 = vmatprep.subr.mxu0 %v1012
    %1892 = vmatpush1.msra.mxu0 %v1011
    %1893 = vmatprep.subr.mxu0 %v1008
    %1894 = vmatpush1.msra.mxu0 %v1007
    %1895 = vmatprep.subr.mxu0 %v1004
    %1896 = vmatpush1.msra.mxu0 %v1003
    %1897 = vmatprep.subr.mxu0 %v1000
    %1898 = vmatpush1.msra.mxu0 %v999
    %1899 = vmatprep.subr.mxu0 %v996
    %1900 = vmatpush1.msra.mxu0 %v995
    %1901 = vmatprep.subr.mxu0 %v992
    %1902 = vmatpush1.msra.mxu0 %v991
    %1903 = vmatprep.subr.mxu0 %v988
    %1904 = vmatpush1.msra.mxu0 %v987
    %1905 = vmatprep.subr.mxu0 %v984
    %1906 = vmatpush1.msra.mxu0 %v983
    %1907 = vmatprep.subr.mxu0 %v980
    %1908 = vmatpush1.msra.mxu0 %v979
    %1909 = vmatprep.subr.mxu0 %v976
    %1910 = vmatpush1.msra.mxu0 %v975
    %1911 = vmatprep.subr.mxu0 0.0
    %1912 = vmatpush2.msra.mxu0 0.0
    %1913 = vmatprep.subr.mxu0 0.0
    %1914 = vmatpush2.msra.mxu0 0.0
    %1915 = vmatprep.subr.mxu0 0.0
    %1916 = vmatpush2.msra.mxu0 0.0
    %1917 = vmatprep.subr.mxu0 0.0
    %1918 = vmatpush2.msra.mxu0 0.0
    %1919 = vmatprep.subr.mxu0 0.0
    %1920 = vmatpush2.msra.mxu0 0.0
    %1921 = vmatprep.subr.mxu0 0.0
    %1922 = vmatpush2.msra.mxu0 0.0
    %1923 = vmatprep.subr.mxu0 0.0
    %1924 = vmatpush2.msra.mxu0 0.0
    %1925 = vmatprep.subr.mxu0 0.0
    %1926 = vmatpush2.msra.mxu0 0.0
    %1927 = vmatprep.subr.mxu0 0.0
    %1928 = vmatpush2.msra.mxu0 0.0
    %1929 = vmatprep.subr.mxu0 0.0
    %1930 = vmatpush2.msra.mxu0 0.0
    %1931 = vmatprep.subr.mxu0 0.0
    %1932 = vmatpush2.msra.mxu0 0.0
    %1933 = vmatprep.subr.mxu0 0.0
    %1934 = vmatpush2.msra.mxu0 0.0
    %1935 = vmatprep.subr.mxu0 0.0
    %1936 = vmatpush2.msra.mxu0 0.0
    %1937 = vmatprep.subr.mxu0 0.0
    %1938 = vmatpush2.msra.mxu0 0.0
    %1939 = vmatprep.subr.mxu0 0.0
    %1940 = vmatpush2.msra.mxu0 0.0
    %1941 = vmatprep.subr.mxu0 0.0
    %1942 = vmatpush2.msra.mxu0 0.0
    %1943 = vmatprep.mubr.f32.mxu0 0.0
    %1944 = vmatmul.mubr.f32.gmra.mxu0 %v1874
    %v1945 = vpop.f32.mrf.mxu0
    %v1946 = vadd.f32 0.0, %v1945
    %v1947 = vpop.f32.mrf.mxu0
    %v1948 = vadd.f32 0.0, %v1947
    %1949 = vdwg.mxu0
    %1950 = vmatprep.subr.mxu0 %v1038
    %1951 = vmatpush1.msra.mxu0 %v1037
    %1952 = vmatprep.subr.mxu0 %v1034
    %1953 = vmatpush1.msra.mxu0 %v1033
    %1954 = vmatprep.subr.mxu0 %v1030
    %1955 = vmatpush1.msra.mxu0 %v1029
    %1956 = vmatprep.subr.mxu0 %v1026
    %1957 = vmatpush1.msra.mxu0 %v1025
    %1958 = vmatprep.subr.mxu0 %v1022
    %1959 = vmatpush1.msra.mxu0 %v1021
    %1960 = vmatprep.subr.mxu0 %v1018
    %1961 = vmatpush1.msra.mxu0 %v1017
    %1962 = vmatprep.subr.mxu0 %v1014
    %1963 = vmatpush1.msra.mxu0 %v1013
    %1964 = vmatprep.subr.mxu0 %v1010
    %1965 = vmatpush1.msra.mxu0 %v1009
    %1966 = vmatprep.subr.mxu0 %v1006
    %1967 = vmatpush1.msra.mxu0 %v1005
    %1968 = vmatprep.subr.mxu0 %v1002
    %1969 = vmatpush1.msra.mxu0 %v1001
    %1970 = vmatprep.subr.mxu0 %v998
    %1971 = vmatpush1.msra.mxu0 %v997
    %1972 = vmatprep.subr.mxu0 %v994
    %1973 = vmatpush1.msra.mxu0 %v993
    %1974 = vmatprep.subr.mxu0 %v990
    %1975 = vmatpush1.msra.mxu0 %v989
    %1976 = vmatprep.subr.mxu0 %v986
    %1977 = vmatpush1.msra.mxu0 %v985
    %1978 = vmatprep.subr.mxu0 %v982
    %1979 = vmatpush1.msra.mxu0 %v981
    %1980 = vmatprep.subr.mxu0 %v978
    %1981 = vmatpush1.msra.mxu0 %v977
    %1982 = vmatprep.subr.mxu0 0.0
    %1983 = vmatpush2.msra.mxu0 0.0
    %1984 = vmatprep.subr.mxu0 0.0
    %1985 = vmatpush2.msra.mxu0 0.0
    %1986 = vmatprep.subr.mxu0 0.0
    %1987 = vmatpush2.msra.mxu0 0.0
    %1988 = vmatprep.subr.mxu0 0.0
    %1989 = vmatpush2.msra.mxu0 0.0
    %1990 = vmatprep.subr.mxu0 0.0
    %1991 = vmatpush2.msra.mxu0 0.0
    %1992 = vmatprep.subr.mxu0 0.0
    %1993 = vmatpush2.msra.mxu0 0.0
    %1994 = vmatprep.subr.mxu0 0.0
    %1995 = vmatpush2.msra.mxu0 0.0
    %1996 = vmatprep.subr.mxu0 0.0
    %1997 = vmatpush2.msra.mxu0 0.0
    %1998 = vmatprep.subr.mxu0 0.0
    %1999 = vmatpush2.msra.mxu0 0.0
    %2000 = vmatprep.subr.mxu0 0.0
    %2001 = vmatpush2.msra.mxu0 0.0
    %2002 = vmatprep.subr.mxu0 0.0
    %2003 = vmatpush2.msra.mxu0 0.0
    %2004 = vmatprep.subr.mxu0 0.0
    %2005 = vmatpush2.msra.mxu0 0.0
    %2006 = vmatprep.subr.mxu0 0.0
    %2007 = vmatpush2.msra.mxu0 0.0
    %2008 = vmatprep.subr.mxu0 0.0
    %2009 = vmatpush2.msra.mxu0 0.0
    %2010 = vmatprep.subr.mxu0 0.0
    %2011 = vmatpush2.msra.mxu0 0.0
    %2012 = vmatprep.subr.mxu0 0.0
    %2013 = vmatpush2.msra.mxu0 0.0
    %2014 = vmatprep.mubr.f32.mxu0 0.0
    %2015 = vmatmul.mubr.f32.gmra.mxu0 %v1874
    %v2016 = vpop.f32.mrf.mxu0
    %v2017 = vadd.f32 0.0, %v2016
    %v2018 = vpop.f32.mrf.mxu0
    %v2019 = vadd.f32 0.0, %v2018
    %2020 = vdwg.mxu0
    %v2021 = vadd.f32 %v1875, %v1946
    %v2022 = vadd.f32 %v1876, %v1948
    %v2023 = vadd.f32 %v1877, %v2017
    %v2024 = vadd.f32 %v1878, %v2019
    %v2025 = vmul.f32 %v2021, 0.5
    %v2026 = vtanh.pop %v2025
    %v2027 = vmul.f32 %v2026, 0.5
    %v2028 = vadd.f32 %v2027, 0.5
    %v2029 = vmul.f32 %v2022, 0.5
    %v2030 = vtanh.pop %v2029
    %v2031 = vmul.f32 %v2030, 0.5
    %v2032 = vadd.f32 %v2031, 0.5
    %v2033 = vtanh.pop %v2023
    %v2034 = vmul.f32 %v2024, 0.5
    %v2035 = vtanh.pop %v2034
    %v2036 = vmul.f32 %v2035, 0.5
    %v2037 = vadd.f32 %v2036, 0.5
    %v2038 = vmul.f32 %v2032, %v1872
    %v2039 = vmul.f32 %v2028, %v2033
    %v2040 = vadd.f32 %v2038, %v2039
    %v2041 = vtanh.pop %v2040
    %v2042 = vmul.f32 %v2037, %v2041
    %v2043 = vld [vmem:[#allocation2 + $0xc0] sm:$0xff]
    %v2044 = vld [vmem:[#allocation2 + $0xc8] sm:$0xff]
    %v2045 = vld [vmem:[#allocation2 + $0xd0] sm:$0xff]
    %v2046 = vld [vmem:[#allocation2 + $0xd8] sm:$0xff]
    %2047 = vmatprep.subr.mxu0 %v1036
    %2048 = vmatpush1.msra.mxu0 %v1035
    %2049 = vmatprep.subr.mxu0 %v1032
    %2050 = vmatpush1.msra.mxu0 %v1031
    %2051 = vmatprep.subr.mxu0 %v1028
    %2052 = vmatpush1.msra.mxu0 %v1027
    %2053 = vmatprep.subr.mxu0 %v1024
    %2054 = vmatpush1.msra.mxu0 %v1023
    %2055 = vmatprep.subr.mxu0 %v1020
    %2056 = vmatpush1.msra.mxu0 %v1019
    %2057 = vmatprep.subr.mxu0 %v1016
    %2058 = vmatpush1.msra.mxu0 %v1015
    %2059 = vmatprep.subr.mxu0 %v1012
    %2060 = vmatpush1.msra.mxu0 %v1011
    %2061 = vmatprep.subr.mxu0 %v1008
    %2062 = vmatpush1.msra.mxu0 %v1007
    %2063 = vmatprep.subr.mxu0 %v1004
    %2064 = vmatpush1.msra.mxu0 %v1003
    %2065 = vmatprep.subr.mxu0 %v1000
    %2066 = vmatpush1.msra.mxu0 %v999
    %2067 = vmatprep.subr.mxu0 %v996
    %2068 = vmatpush1.msra.mxu0 %v995
    %2069 = vmatprep.subr.mxu0 %v992
    %2070 = vmatpush1.msra.mxu0 %v991
    %2071 = vmatprep.subr.mxu0 %v988
    %2072 = vmatpush1.msra.mxu0 %v987
    %2073 = vmatprep.subr.mxu0 %v984
    %2074 = vmatpush1.msra.mxu0 %v983
    %2075 = vmatprep.subr.mxu0 %v980
    %2076 = vmatpush1.msra.mxu0 %v979
    %2077 = vmatprep.subr.mxu0 %v976
    %2078 = vmatpush1.msra.mxu0 %v975
    %2079 = vmatprep.subr.mxu0 0.0
    %2080 = vmatpush2.msra.mxu0 0.0
    %2081 = vmatprep.subr.mxu0 0.0
    %2082 = vmatpush2.msra.mxu0 0.0
    %2083 = vmatprep.subr.mxu0 0.0
    %2084 = vmatpush2.msra.mxu0 0.0
    %2085 = vmatprep.subr.mxu0 0.0
    %2086 = vmatpush2.msra.mxu0 0.0
    %2087 = vmatprep.subr.mxu0 0.0
    %2088 = vmatpush2.msra.mxu0 0.0
    %2089 = vmatprep.subr.mxu0 0.0
    %2090 = vmatpush2.msra.mxu0 0.0
    %2091 = vmatprep.subr.mxu0 0.0
    %2092 = vmatpush2.msra.mxu0 0.0
    %2093 = vmatprep.subr.mxu0 0.0
    %2094 = vmatpush2.msra.mxu0 0.0
    %2095 = vmatprep.subr.mxu0 0.0
    %2096 = vmatpush2.msra.mxu0 0.0
    %2097 = vmatprep.subr.mxu0 0.0
    %2098 = vmatpush2.msra.mxu0 0.0
    %2099 = vmatprep.subr.mxu0 0.0
    %2100 = vmatpush2.msra.mxu0 0.0
    %2101 = vmatprep.subr.mxu0 0.0
    %2102 = vmatpush2.msra.mxu0 0.0
    %2103 = vmatprep.subr.mxu0 0.0
    %2104 = vmatpush2.msra.mxu0 0.0
    %2105 = vmatprep.subr.mxu0 0.0
    %2106 = vmatpush2.msra.mxu0 0.0
    %2107 = vmatprep.subr.mxu0 0.0
    %2108 = vmatpush2.msra.mxu0 0.0
    %2109 = vmatprep.subr.mxu0 0.0
    %2110 = vmatpush2.msra.mxu0 0.0
    %2111 = vmatprep.mubr.f32.mxu0 0.0
    %2112 = vmatmul.mubr.f32.gmra.mxu0 %v2042
    %v2113 = vpop.f32.mrf.mxu0
    %v2114 = vadd.f32 0.0, %v2113
    %v2115 = vpop.f32.mrf.mxu0
    %v2116 = vadd.f32 0.0, %v2115
    %2117 = vdwg.mxu0
    %2118 = vmatprep.subr.mxu0 %v1038
    %2119 = vmatpush1.msra.mxu0 %v1037
    %2120 = vmatprep.subr.mxu0 %v1034
    %2121 = vmatpush1.msra.mxu0 %v1033
    %2122 = vmatprep.subr.mxu0 %v1030
    %2123 = vmatpush1.msra.mxu0 %v1029
    %2124 = vmatprep.subr.mxu0 %v1026
    %2125 = vmatpush1.msra.mxu0 %v1025
    %2126 = vmatprep.subr.mxu0 %v1022
    %2127 = vmatpush1.msra.mxu0 %v1021
    %2128 = vmatprep.subr.mxu0 %v1018
    %2129 = vmatpush1.msra.mxu0 %v1017
    %2130 = vmatprep.subr.mxu0 %v1014
    %2131 = vmatpush1.msra.mxu0 %v1013
    %2132 = vmatprep.subr.mxu0 %v1010
    %2133 = vmatpush1.msra.mxu0 %v1009
    %2134 = vmatprep.subr.mxu0 %v1006
    %2135 = vmatpush1.msra.mxu0 %v1005
    %2136 = vmatprep.subr.mxu0 %v1002
    %2137 = vmatpush1.msra.mxu0 %v1001
    %2138 = vmatprep.subr.mxu0 %v998
    %2139 = vmatpush1.msra.mxu0 %v997
    %2140 = vmatprep.subr.mxu0 %v994
    %2141 = vmatpush1.msra.mxu0 %v993
    %2142 = vmatprep.subr.mxu0 %v990
    %2143 = vmatpush1.msra.mxu0 %v989
    %2144 = vmatprep.subr.mxu0 %v986
    %2145 = vmatpush1.msra.mxu0 %v985
    %2146 = vmatprep.subr.mxu0 %v982
    %2147 = vmatpush1.msra.mxu0 %v981
    %2148 = vmatprep.subr.mxu0 %v978
    %2149 = vmatpush1.msra.mxu0 %v977
    %2150 = vmatprep.subr.mxu0 0.0
    %2151 = vmatpush2.msra.mxu0 0.0
    %2152 = vmatprep.subr.mxu0 0.0
    %2153 = vmatpush2.msra.mxu0 0.0
    %2154 = vmatprep.subr.mxu0 0.0
    %2155 = vmatpush2.msra.mxu0 0.0
    %2156 = vmatprep.subr.mxu0 0.0
    %2157 = vmatpush2.msra.mxu0 0.0
    %2158 = vmatprep.subr.mxu0 0.0
    %2159 = vmatpush2.msra.mxu0 0.0
    %2160 = vmatprep.subr.mxu0 0.0
    %2161 = vmatpush2.msra.mxu0 0.0
    %2162 = vmatprep.subr.mxu0 0.0
    %2163 = vmatpush2.msra.mxu0 0.0
    %2164 = vmatprep.subr.mxu0 0.0
    %2165 = vmatpush2.msra.mxu0 0.0
    %2166 = vmatprep.subr.mxu0 0.0
    %2167 = vmatpush2.msra.mxu0 0.0
    %2168 = vmatprep.subr.mxu0 0.0
    %2169 = vmatpush2.msra.mxu0 0.0
    %2170 = vmatprep.subr.mxu0 0.0
    %2171 = vmatpush2.msra.mxu0 0.0
    %2172 = vmatprep.subr.mxu0 0.0
    %2173 = vmatpush2.msra.mxu0 0.0
    %2174 = vmatprep.subr.mxu0 0.0
    %2175 = vmatpush2.msra.mxu0 0.0
    %2176 = vmatprep.subr.mxu0 0.0
    %2177 = vmatpush2.msra.mxu0 0.0
    %2178 = vmatprep.subr.mxu0 0.0
    %2179 = vmatpush2.msra.mxu0 0.0
    %2180 = vmatprep.subr.mxu0 0.0
    %2181 = vmatpush2.msra.mxu0 0.0
    %2182 = vmatprep.mubr.f32.mxu0 0.0
    %2183 = vmatmul.mubr.f32.gmra.mxu0 %v2042
    %v2184 = vpop.f32.mrf.mxu0
    %v2185 = vadd.f32 0.0, %v2184
    %v2186 = vpop.f32.mrf.mxu0
    %v2187 = vadd.f32 0.0, %v2186
    %2188 = vdwg.mxu0
    %v2189 = vadd.f32 %v2043, %v2114
    %v2190 = vadd.f32 %v2044, %v2116
    %v2191 = vadd.f32 %v2045, %v2185
    %v2192 = vadd.f32 %v2046, %v2187
    %v2193 = vmul.f32 %v2189, 0.5
    %v2194 = vtanh.pop %v2193
    %v2195 = vmul.f32 %v2194, 0.5
    %v2196 = vadd.f32 %v2195, 0.5
    %v2197 = vmul.f32 %v2190, 0.5
    %v2198 = vtanh.pop %v2197
    %v2199 = vmul.f32 %v2198, 0.5
    %v2200 = vadd.f32 %v2199, 0.5
    %v2201 = vtanh.pop %v2191
    %v2202 = vmul.f32 %v2192, 0.5
    %v2203 = vtanh.pop %v2202
    %v2204 = vmul.f32 %v2203, 0.5
    %v2205 = vadd.f32 %v2204, 0.5
    %v2206 = vmul.f32 %v2200, %v2040
    %v2207 = vmul.f32 %v2196, %v2201
    %v2208 = vadd.f32 %v2206, %v2207
    %v2209 = vtanh.pop %v2208
    %v2210 = vmul.f32 %v2205, %v2209
    %v2211 = vld [vmem:[#allocation2 + $0xe0] sm:$0xff]
    %v2212 = vld [vmem:[#allocation2 + $0xe8] sm:$0xff]
    %v2213 = vld [vmem:[#allocation2 + $0xf0] sm:$0xff]
    %v2214 = vld [vmem:[#allocation2 + $0xf8] sm:$0xff]
    %2215 = vmatprep.subr.mxu0 %v1036
    %2216 = vmatpush1.msra.mxu0 %v1035
    %2217 = vmatprep.subr.mxu0 %v1032
    %2218 = vmatpush1.msra.mxu0 %v1031
    %2219 = vmatprep.subr.mxu0 %v1028
    %2220 = vmatpush1.msra.mxu0 %v1027
    %2221 = vmatprep.subr.mxu0 %v1024
    %2222 = vmatpush1.msra.mxu0 %v1023
    %2223 = vmatprep.subr.mxu0 %v1020
    %2224 = vmatpush1.msra.mxu0 %v1019
    %2225 = vmatprep.subr.mxu0 %v1016
    %2226 = vmatpush1.msra.mxu0 %v1015
    %2227 = vmatprep.subr.mxu0 %v1012
    %2228 = vmatpush1.msra.mxu0 %v1011
    %2229 = vmatprep.subr.mxu0 %v1008
    %2230 = vmatpush1.msra.mxu0 %v1007
    %2231 = vmatprep.subr.mxu0 %v1004
    %2232 = vmatpush1.msra.mxu0 %v1003
    %2233 = vmatprep.subr.mxu0 %v1000
    %2234 = vmatpush1.msra.mxu0 %v999
    %2235 = vmatprep.subr.mxu0 %v996
    %2236 = vmatpush1.msra.mxu0 %v995
    %2237 = vmatprep.subr.mxu0 %v992
    %2238 = vmatpush1.msra.mxu0 %v991
    %2239 = vmatprep.subr.mxu0 %v988
    %2240 = vmatpush1.msra.mxu0 %v987
    %2241 = vmatprep.subr.mxu0 %v984
    %2242 = vmatpush1.msra.mxu0 %v983
    %2243 = vmatprep.subr.mxu0 %v980
    %2244 = vmatpush1.msra.mxu0 %v979
    %2245 = vmatprep.subr.mxu0 %v976
    %2246 = vmatpush1.msra.mxu0 %v975
    %2247 = vmatprep.subr.mxu0 0.0
    %2248 = vmatpush2.msra.mxu0 0.0
    %2249 = vmatprep.subr.mxu0 0.0
    %2250 = vmatpush2.msra.mxu0 0.0
    %2251 = vmatprep.subr.mxu0 0.0
    %2252 = vmatpush2.msra.mxu0 0.0
    %2253 = vmatprep.subr.mxu0 0.0
    %2254 = vmatpush2.msra.mxu0 0.0
    %2255 = vmatprep.subr.mxu0 0.0
    %2256 = vmatpush2.msra.mxu0 0.0
    %2257 = vmatprep.subr.mxu0 0.0
    %2258 = vmatpush2.msra.mxu0 0.0
    %2259 = vmatprep.subr.mxu0 0.0
    %2260 = vmatpush2.msra.mxu0 0.0
    %2261 = vmatprep.subr.mxu0 0.0
    %2262 = vmatpush2.msra.mxu0 0.0
    %2263 = vmatprep.subr.mxu0 0.0
    %2264 = vmatpush2.msra.mxu0 0.0
    %2265 = vmatprep.subr.mxu0 0.0
    %2266 = vmatpush2.msra.mxu0 0.0
    %2267 = vmatprep.subr.mxu0 0.0
    %2268 = vmatpush2.msra.mxu0 0.0
    %2269 = vmatprep.subr.mxu0 0.0
    %2270 = vmatpush2.msra.mxu0 0.0
    %2271 = vmatprep.subr.mxu0 0.0
    %2272 = vmatpush2.msra.mxu0 0.0
    %2273 = vmatprep.subr.mxu0 0.0
    %2274 = vmatpush2.msra.mxu0 0.0
    %2275 = vmatprep.subr.mxu0 0.0
    %2276 = vmatpush2.msra.mxu0 0.0
    %2277 = vmatprep.subr.mxu0 0.0
    %2278 = vmatpush2.msra.mxu0 0.0
    %2279 = vmatprep.mubr.f32.mxu0 0.0
    %2280 = vmatmul.mubr.f32.gmra.mxu0 %v2210
    %v2281 = vpop.f32.mrf.mxu0
    %v2282 = vadd.f32 0.0, %v2281
    %v2283 = vpop.f32.mrf.mxu0
    %v2284 = vadd.f32 0.0, %v2283
    %2285 = vdwg.mxu0
    %2286 = vmatprep.subr.mxu0 %v1038
    %2287 = vmatpush1.msra.mxu0 %v1037
    %2288 = vmatprep.subr.mxu0 %v1034
    %2289 = vmatpush1.msra.mxu0 %v1033
    %2290 = vmatprep.subr.mxu0 %v1030
    %2291 = vmatpush1.msra.mxu0 %v1029
    %2292 = vmatprep.subr.mxu0 %v1026
    %2293 = vmatpush1.msra.mxu0 %v1025
    %2294 = vmatprep.subr.mxu0 %v1022
    %2295 = vmatpush1.msra.mxu0 %v1021
    %2296 = vmatprep.subr.mxu0 %v1018
    %2297 = vmatpush1.msra.mxu0 %v1017
    %2298 = vmatprep.subr.mxu0 %v1014
    %2299 = vmatpush1.msra.mxu0 %v1013
    %2300 = vmatprep.subr.mxu0 %v1010
    %2301 = vmatpush1.msra.mxu0 %v1009
    %2302 = vmatprep.subr.mxu0 %v1006
    %2303 = vmatpush1.msra.mxu0 %v1005
    %2304 = vmatprep.subr.mxu0 %v1002
    %2305 = vmatpush1.msra.mxu0 %v1001
    %2306 = vmatprep.subr.mxu0 %v998
    %2307 = vmatpush1.msra.mxu0 %v997
    %2308 = vmatprep.subr.mxu0 %v994
    %2309 = vmatpush1.msra.mxu0 %v993
    %2310 = vmatprep.subr.mxu0 %v990
    %2311 = vmatpush1.msra.mxu0 %v989
    %2312 = vmatprep.subr.mxu0 %v986
    %2313 = vmatpush1.msra.mxu0 %v985
    %2314 = vmatprep.subr.mxu0 %v982
    %2315 = vmatpush1.msra.mxu0 %v981
    %2316 = vmatprep.subr.mxu0 %v978
    %2317 = vmatpush1.msra.mxu0 %v977
    %2318 = vmatprep.subr.mxu0 0.0
    %2319 = vmatpush2.msra.mxu0 0.0
    %2320 = vmatprep.subr.mxu0 0.0
    %2321 = vmatpush2.msra.mxu0 0.0
    %2322 = vmatprep.subr.mxu0 0.0
    %2323 = vmatpush2.msra.mxu0 0.0
    %2324 = vmatprep.subr.mxu0 0.0
    %2325 = vmatpush2.msra.mxu0 0.0
    %2326 = vmatprep.subr.mxu0 0.0
    %2327 = vmatpush2.msra.mxu0 0.0
    %2328 = vmatprep.subr.mxu0 0.0
    %2329 = vmatpush2.msra.mxu0 0.0
    %2330 = vmatprep.subr.mxu0 0.0
    %2331 = vmatpush2.msra.mxu0 0.0
    %2332 = vmatprep.subr.mxu0 0.0
    %2333 = vmatpush2.msra.mxu0 0.0
    %2334 = vmatprep.subr.mxu0 0.0
    %2335 = vmatpush2.msra.mxu0 0.0
    %2336 = vmatprep.subr.mxu0 0.0
    %2337 = vmatpush2.msra.mxu0 0.0
    %2338 = vmatprep.subr.mxu0 0.0
    %2339 = vmatpush2.msra.mxu0 0.0
    %2340 = vmatprep.subr.mxu0 0.0
    %2341 = vmatpush2.msra.mxu0 0.0
    %2342 = vmatprep.subr.mxu0 0.0
    %2343 = vmatpush2.msra.mxu0 0.0
    %2344 = vmatprep.subr.mxu0 0.0
    %2345 = vmatpush2.msra.mxu0 0.0
    %2346 = vmatprep.subr.mxu0 0.0
    %2347 = vmatpush2.msra.mxu0 0.0
    %2348 = vmatprep.subr.mxu0 0.0
    %2349 = vmatpush2.msra.mxu0 0.0
    %2350 = vmatprep.mubr.f32.mxu0 0.0
    %2351 = vmatmul.mubr.f32.gmra.mxu0 %v2210
    %v2352 = vpop.f32.mrf.mxu0
    %v2353 = vadd.f32 0.0, %v2352
    %v2354 = vpop.f32.mrf.mxu0
    %v2355 = vadd.f32 0.0, %v2354
    %2356 = vdwg.mxu0
    %v2357 = vadd.f32 %v2211, %v2282
    %v2358 = vadd.f32 %v2212, %v2284
    %v2359 = vadd.f32 %v2213, %v2353
    %v2360 = vadd.f32 %v2214, %v2355
    %v2361 = vmul.f32 %v2357, 0.5
    %v2362 = vtanh.pop %v2361
    %v2363 = vmul.f32 %v2362, 0.5
    %v2364 = vadd.f32 %v2363, 0.5
    %v2365 = vmul.f32 %v2358, 0.5
    %v2366 = vtanh.pop %v2365
    %v2367 = vmul.f32 %v2366, 0.5
    %v2368 = vadd.f32 %v2367, 0.5
    %v2369 = vtanh.pop %v2359
    %v2370 = vmul.f32 %v2360, 0.5
    %v2371 = vtanh.pop %v2370
    %v2372 = vmul.f32 %v2371, 0.5
    %v2373 = vadd.f32 %v2372, 0.5
    %v2374 = vmul.f32 %v2368, %v2208
    %v2375 = vmul.f32 %v2364, %v2369
    %v2376 = vadd.f32 %v2374, %v2375
    %v2377 = vtanh.pop %v2376
    %v2378 = vmul.f32 %v2373, %v2377
    %v2379 = vld [vmem:[#allocation10] sm:$0xff]
    %v2380 = vld [vmem:[#allocation10 + $0x8] sm:$0xff]
    %v2381 = vld [vmem:[#allocation10 + $0x10] sm:$0xff]
    %v2382 = vld [vmem:[#allocation10 + $0x18] sm:$0xff]
    %v2383 = vld [vmem:[#allocation10 + $0x20] sm:$0xff]
    %v2384 = vld [vmem:[#allocation10 + $0x28] sm:$0xff]
    %v2385 = vld [vmem:[#allocation10 + $0x30] sm:$0xff]
    %v2386 = vld [vmem:[#allocation10 + $0x38] sm:$0xff]
    %v2387 = vld [vmem:[#allocation10 + $0x40] sm:$0xff]
    %v2388 = vld [vmem:[#allocation10 + $0x48] sm:$0xff]
    %v2389 = vld [vmem:[#allocation10 + $0x50] sm:$0xff]
    %v2390 = vld [vmem:[#allocation10 + $0x58] sm:$0xff]
    %v2391 = vld [vmem:[#allocation10 + $0x60] sm:$0xff]
    %v2392 = vld [vmem:[#allocation10 + $0x68] sm:$0xff]
    %v2393 = vld [vmem:[#allocation10 + $0x70] sm:$0xff]
    %v2394 = vld [vmem:[#allocation10 + $0x78] sm:$0xff]
    %v2395 = vld [vmem:[%s4] sm:$0x1]
    %v2397 = vlaneseq
    %v2398 = vshrl.u32 %v2397, 7
    %v2399 = vsub.s32 0, %v2398
    %v2400 = vrot.slane %v2395, %v2399
    %2402 = vmatprep.subr.mxu0 0.0
    %2403 = vmatpush1.msra.mxu0 %v2394
    %2404 = vmatprep.subr.mxu0 0.0
    %2405 = vmatpush1.msra.mxu0 %v2393
    %2406 = vmatprep.subr.mxu0 0.0
    %2407 = vmatpush1.msra.mxu0 %v2392
    %2408 = vmatprep.subr.mxu0 0.0
    %2409 = vmatpush1.msra.mxu0 %v2391
    %2410 = vmatprep.subr.mxu0 0.0
    %2411 = vmatpush1.msra.mxu0 %v2390
    %2412 = vmatprep.subr.mxu0 0.0
    %2413 = vmatpush1.msra.mxu0 %v2389
    %2414 = vmatprep.subr.mxu0 0.0
    %2415 = vmatpush1.msra.mxu0 %v2388
    %2416 = vmatprep.subr.mxu0 0.0
    %2417 = vmatpush1.msra.mxu0 %v2387
    %2418 = vmatprep.subr.mxu0 0.0
    %2419 = vmatpush1.msra.mxu0 %v2386
    %2420 = vmatprep.subr.mxu0 0.0
    %2421 = vmatpush1.msra.mxu0 %v2385
    %2422 = vmatprep.subr.mxu0 0.0
    %2423 = vmatpush1.msra.mxu0 %v2384
    %2424 = vmatprep.subr.mxu0 0.0
    %2425 = vmatpush1.msra.mxu0 %v2383
    %2426 = vmatprep.subr.mxu0 0.0
    %2427 = vmatpush1.msra.mxu0 %v2382
    %2428 = vmatprep.subr.mxu0 0.0
    %2429 = vmatpush1.msra.mxu0 %v2381
    %2430 = vmatprep.subr.mxu0 0.0
    %2431 = vmatpush1.msra.mxu0 %v2380
    %2432 = vmatprep.subr.mxu0 0.0
    %2433 = vmatpush1.msra.mxu0 %v2379
    %2434 = vmatprep.subr.mxu0 0.0
    %2435 = vmatpush2.msra.mxu0 0.0
    %2436 = vmatprep.subr.mxu0 0.0
    %2437 = vmatpush2.msra.mxu0 0.0
    %2438 = vmatprep.subr.mxu0 0.0
    %2439 = vmatpush2.msra.mxu0 0.0
    %2440 = vmatprep.subr.mxu0 0.0
    %2441 = vmatpush2.msra.mxu0 0.0
    %2442 = vmatprep.subr.mxu0 0.0
    %2443 = vmatpush2.msra.mxu0 0.0
    %2444 = vmatprep.subr.mxu0 0.0
    %2445 = vmatpush2.msra.mxu0 0.0
    %2446 = vmatprep.subr.mxu0 0.0
    %2447 = vmatpush2.msra.mxu0 0.0
    %2448 = vmatprep.subr.mxu0 0.0
    %2449 = vmatpush2.msra.mxu0 0.0
    %2450 = vmatprep.subr.mxu0 0.0
    %2451 = vmatpush2.msra.mxu0 0.0
    %2452 = vmatprep.subr.mxu0 0.0
    %2453 = vmatpush2.msra.mxu0 0.0
    %2454 = vmatprep.subr.mxu0 0.0
    %2455 = vmatpush2.msra.mxu0 0.0
    %2456 = vmatprep.subr.mxu0 0.0
    %2457 = vmatpush2.msra.mxu0 0.0
    %2458 = vmatprep.subr.mxu0 0.0
    %2459 = vmatpush2.msra.mxu0 0.0
    %2460 = vmatprep.subr.mxu0 0.0
    %2461 = vmatpush2.msra.mxu0 0.0
    %2462 = vmatprep.subr.mxu0 0.0
    %2463 = vmatpush2.msra.mxu0 0.0
    %2464 = vmatprep.subr.mxu0 0.0
    %2465 = vmatpush2.msra.mxu0 0.0
    %2466 = vmatprep.mubr.f32.mxu0 0.0
    %2467 = vmatmul.mubr.f32.gmra.mxu0 %v2378
    %v2468 = vpop.f32.mrf.mxu0
    %v2469 = vadd.f32 %v2400, %v2468
    %v2470 = vpop.f32.mrf.mxu0
    %2471 = vdwg.mxu0
    %2472 = vst [vmem:[#allocation11] sm:$0xff] %v2469
    // Predicated region
    $region30: #{tpu_custom_call.1} parent=1 // pred_check
      _
    $region31: #{tpu_custom_call.1} parent=1 // pred_check_branch
      %2474 = sbr.rel (0) target = $region33
    $region32: #{tpu_custom_call.1} parent=1 // pred_region
      %s2476 = ssub.s32 128, 128
      %2477 = vsyncadd [#allocation7], %s2476
      %s2479 = sshll.u32 [#allocation11], 4
      %s2480 = int_to_ptr.vmem [resolvable:$true] %s2479
      %2482 = dma.vmem_to_hbm [thread:$0]  %s2480, 128, %s5, [#allocation7]
    $region33: #{tpu_custom_call.1} parent=1 // pred_fallthru
      _
    // Predicated region
    $region34: #{tpu_custom_call.1} parent=1 // pred_check
      _
    $region35: #{tpu_custom_call.1} parent=1 // pred_check_branch
      %2484 = sbr.rel (0) target = $region37
    $region36: #{tpu_custom_call.1} parent=1 // pred_region
      %2485 = dma.done [#allocation7], 128
    $region37: #{tpu_custom_call.1} parent=1 // pred_fallthru
      _
    %2486 = vsyncpa [#allocation6], 1
    %2487 = vsyncpa [#allocation9], 1
    %2488 = vsyncpa [#allocation7], 1

</llo_original>
